<compile_context>
chip_gen: v6e
topology: v6e:2x2x1
jax: 0.10.0
libtpu: 0.0.40
codegen_flags: <defaults>
</compile_context>

<pallas_src>
import functools

import jax
import jax.numpy as jnp
from jax import lax
from jax.experimental import pallas as pl
from jax.experimental.pallas import tpu as pltpu

_EPS = 1e-5    # nn.BatchNorm2d default eps


def _bn_relu(h, gamma, beta, inv_count):
    """Training-mode BatchNorm2d (batch statistics, biased variance) + ReLU.

    h: (channels, P) with P = N*H*W on lanes; gamma/beta: (channels, 1).
    """
    mean = jnp.sum(h, axis=1, keepdims=True) * inv_count
    d = h - mean
    var = jnp.sum(d * d, axis=1, keepdims=True) * inv_count
    return jnp.maximum(d * lax.rsqrt(var + _EPS) * gamma + beta, 0.0)


def _coupling_kernel(reverse, H, W,
                     xc_ref, xid_ref, ldj_ref, mask_ref,
                     g1_ref, b1_ref, w1_ref,
                     g2_ref, b2_ref, w2_ref,
                     g3_ref, b3_ref,
                     w3_ref, b3b_ref, scale_ref,
                     xc_out_ref, ldj_out_ref):
    C, P = xid_ref.shape
    N = ldj_ref.shape[1]
    HW = H * W
    inv_p = 1.0 / float(P)

    mk = mask_ref[...]            # (4, P): [h>=1, h<H-1, w>=1, w<W-1] as 0/1 f32

    def tap_mask(ky, kx):
        f = None
        if ky == 0:
            f = mk[0:1, :]
        elif ky == 2:
            f = mk[1:2, :]
        if kx == 0:
            f = mk[2:3, :] if f is None else f * mk[2:3, :]
        elif kx == 2:
            f = mk[3:4, :] if f is None else f * mk[3:4, :]
        return f

    def shifted(x, ky, kx):
        """x[:, p + (ky-1)*W + (kx-1)], zeroed where the tap leaves the image."""
        d = (ky - 1) * W + (kx - 1)
        r = x if d == 0 else pltpu.roll(x, shift=(-d) % P, axis=1)
        f = tap_mask(ky, kx)
        return r if f is None else r * f

    # ---- in_norm (BatchNorm2d, batch stats) + ReLU -------------------------
    h = _bn_relu(xid_ref[...], g1_ref[...], b1_ref[...], inv_p)          # (C, P)

    # ---- in_conv: 3x3 SAME, shift-the-output (9 small matmuls) -------------
    acc = None
    for ky in range(3):
        for kx in range(3):
            tap = ky * 3 + kx
            y = jnp.dot(w1_ref[tap], h, preferred_element_type=jnp.float32)
            y = shifted(y, ky, kx)                                       # (M, P)
            acc = y if acc is None else acc + y
    h = acc                                                              # (M, P)

    # ---- mid_norm + ReLU + mid_conv (1x1, no bias) -------------------------
    h = _bn_relu(h, g2_ref[...], b2_ref[...], inv_p)
    h = jnp.dot(w2_ref[...], h, preferred_element_type=jnp.float32)      # (M, P)

    # ---- out_norm + ReLU + out_conv (3x3 SAME + bias, shift-the-output) ----
    h = _bn_relu(h, g3_ref[...], b3_ref[...], inv_p)
    acc = None
    for ky in range(3):
        for kx in range(3):
            tap = ky * 3 + kx
            y = jnp.dot(w3_ref[tap], h, preferred_element_type=jnp.float32)
            y = shifted(y, ky, kx)                                       # (2C, P)
            acc = y if acc is None else acc + y
    st = acc + b3b_ref[...]                                              # (2C, P)

    # ---- affine coupling (s channels stacked first, then t) ----------------
    s = scale_ref[...] * jnp.tanh(st[:C, :])
    t = st[C:, :]
    xc = xc_ref[...]
    if reverse:
        xc_out_ref[...] = xc * jnp.exp(-s) - t
    else:
        xc_out_ref[...] = (xc + t) * jnp.exp(s)

    # log-det-jacobian: per-sample sum of s over (C, H, W).  Sample n owns the
    # lane segment [n*HW, (n+1)*HW).
    per_n = [jnp.sum(s[:, n * HW:(n + 1) * HW], axis=1, keepdims=True)
             for n in range(N)]
    r = jnp.sum(jnp.concatenate(per_n, axis=1), axis=0, keepdims=True)   # (1, N)
    if reverse:
        ldj_out_ref[...] = ldj_ref[...] - r
    else:
        ldj_out_ref[...] = ldj_ref[...] + r


def _full_spec(shape):
    nd = len(shape)
    return pl.BlockSpec(shape, lambda i, _nd=nd: (0,) * _nd)


@functools.partial(jax.jit, static_argnames=("reverse",))
def coupling_forward(x, ldj, params, reverse=False):
    """Glow affine coupling.  x: (N, 2*C, H, W) NCHW like PyTorch; ldj: (N,)."""
    N, C2, H, W = x.shape
    C = C2 // 2
    M = params["w2"].shape[0]
    P = N * H * W
    x = x.astype(jnp.float32)

    # Lane-dense kernel layout: channels -> sublanes, pixels (N*H*W) -> lanes.
    xc = jnp.transpose(x[:, :C], (1, 0, 2, 3)).reshape(C, P)
    xi = jnp.transpose(x[:, C:], (1, 0, 2, 3)).reshape(C, P)
    ldj2 = ldj.astype(jnp.float32).reshape(1, N)

    # Per-pixel validity masks for the 3x3 taps (shared by both 3x3 convs).
    pidx = jnp.arange(P, dtype=jnp.int32)
    w_i = pidx % W
    h_i = (pidx // W) % H
    masks = jnp.stack([h_i >= 1, h_i < H - 1, w_i >= 1, w_i < W - 1],
                      axis=0).astype(jnp.float32)                        # (4, P)

    # Weights in per-tap "out = W @ act" orientation.
    w1_taps = jnp.transpose(params["w1"], (0, 1, 3, 2)).reshape(9, M, C)
    w2_t = params["w2"].T                                                # (M, M)
    # out_conv: reorder output channels so s (even) comes first, then t (odd).
    w3p = jnp.concatenate([params["w3_full"][..., 0::2],
                           params["w3_full"][..., 1::2]], axis=-1)       # (3,3,M,2C)
    w3_taps = jnp.transpose(w3p, (0, 1, 3, 2)).reshape(9, 2 * C, M)
    b3p = jnp.concatenate([params["b3_full"][0::2],
                           params["b3_full"][1::2]]).reshape(2 * C, 1)

    g1 = params["g1"].reshape(C, 1); b1 = params["b1"].reshape(C, 1)
    g2 = params["g2"].reshape(M, 1); b2 = params["b2"].reshape(M, 1)
    g3 = params["g3"].reshape(M, 1); b3 = params["b3"].reshape(M, 1)
    scale = params["scale"].reshape(C, 1)

    in_arrays = (xc, xi, ldj2, masks, g1, b1, w1_taps, g2, b2, w2_t,
                 g3, b3, w3_taps, b3p, scale)
    kernel = functools.partial(_coupling_kernel, reverse, H, W)
    xc_new, ldj_new = pl.pallas_call(
        kernel,
        grid=(1,),
        in_specs=[_full_spec(a.shape) for a in in_arrays],
        out_specs=(_full_spec((C, P)), _full_spec((1, N))),
        out_shape=(
            jax.ShapeDtypeStruct((C, P), jnp.float32),
            jax.ShapeDtypeStruct((1, N), jnp.float32),
        ),
        compiler_params=pltpu.CompilerParams(
            dimension_semantics=("arbitrary",)),
    )(*in_arrays)

    xc_nchw = jnp.transpose(xc_new.reshape(C, N, H, W), (1, 0, 2, 3))
    x_out = jnp.concatenate([xc_nchw, x[:, C:]], axis=1)
    return x_out, ldj_new.reshape(N)


def init_params(key, in_channels, mid_channels):
    C, M = in_channels, mid_channels
    k1, k2, k3, k4 = jax.random.split(key, 4)
    # Conv weights in HWIO layout.  in_conv / mid_conv follow the PyTorch init
    # (normal(0, 0.05), no bias).
    w1 = 0.05 * jax.random.normal(k1, (3, 3, C, M), jnp.float32)
    w2 = 0.05 * jax.random.normal(k2, (M, M), jnp.float32)              # (I, O)
    # NOTE: the reference zero-initializes out_conv (weight and bias), which
    # would make s == t == 0.  Use a small deterministic normal instead so the
    # kernel's compute path is numerically non-trivial.
    w3 = 0.05 * jax.random.normal(k3, (3, 3, M, 2 * C), jnp.float32)
    b3 = 0.05 * jax.random.normal(k4, (2 * C,), jnp.float32)
    # TODO(synk): BatchNorm2d eval-mode (running stats) is not modeled; the
    # kernel always uses training-mode batch statistics like the reference.
    return dict(
        g1=jnp.ones((C,), jnp.float32), b1=jnp.zeros((C,), jnp.float32),
        g2=jnp.ones((M,), jnp.float32), b2=jnp.zeros((M,), jnp.float32),
        g3=jnp.ones((M,), jnp.float32), b3=jnp.zeros((M,), jnp.float32),
        w1=w1, w2=w2, w3_full=w3, b3_full=b3,
        scale=jnp.ones((C,), jnp.float32),   # nn.Parameter(torch.ones(C,1,1))
    )


# ---------------- pure-JAX reference (for verification only) ----------------
def _bn_ref(h, gamma, beta):
    mean = jnp.mean(h, axis=(0, 1, 2), keepdims=True)
    var = jnp.mean(jnp.square(h - mean), axis=(0, 1, 2), keepdims=True)
    return ((h - mean) * lax.rsqrt(var + _EPS) * gamma.reshape(1, 1, 1, -1)
            + beta.reshape(1, 1, 1, -1))


def reference_forward(x, ldj, params, reverse=False):
    N, C2, H, W = x.shape
    C = C2 // 2
    M = params["w2"].shape[0]
    dn = ("NHWC", "HWIO", "NHWC")
    hi = lax.Precision.HIGHEST
    xc = jnp.transpose(x[:, :C], (0, 2, 3, 1))
    xi = jnp.transpose(x[:, C:], (0, 2, 3, 1))
    h = jax.nn.relu(_bn_ref(xi, params["g1"], params["b1"]))
    h = lax.conv_general_dilated(h, params["w1"], (1, 1), "SAME",
                                 dimension_numbers=dn, precision=hi)
    h = jax.nn.relu(_bn_ref(h, params["g2"], params["b2"]))
    h = lax.conv_general_dilated(h, params["w2"].reshape(1, 1, M, M), (1, 1),
                                 "SAME", dimension_numbers=dn, precision=hi)
    h = jax.nn.relu(_bn_ref(h, params["g3"], params["b3"]))
    st = lax.conv_general_dilated(h, params["w3_full"], (1, 1), "SAME",
                                  dimension_numbers=dn, precision=hi)
    st = st + params["b3_full"].reshape(1, 1, 1, -1)
    s, t = st[..., 0::2], st[..., 1::2]
    s = params["scale"].reshape(1, 1, 1, C) * jnp.tanh(s)
    if reverse:
        xc_new = xc * jnp.exp(-s) - t
        ldj_new = ldj - jnp.sum(s.reshape(N, -1), axis=-1)
    else:
        xc_new = (xc + t) * jnp.exp(s)
        ldj_new = ldj + jnp.sum(s.reshape(N, -1), axis=-1)
    x_out = jnp.concatenate(
        [jnp.transpose(xc_new, (0, 3, 1, 2)), x[:, C:]], axis=1)
    return x_out, ldj_new


if __name__ == "__main__":
    key = jax.random.PRNGKey(0)
    k_x, k_p = jax.random.split(key)
    # Coupling(in_channels=2, mid_channels=32): input x has 2*in_channels = 4 channels.
    N, C, M, H, W = 2, 2, 32, 16, 16
    x = jax.random.normal(k_x, (N, 2 * C, H, W), jnp.float32)   # NCHW, like PyTorch
    ldj = jnp.zeros((N,), jnp.float32)
    params = init_params(k_p, C, M)

    for rev in (False, True):
        x_out, ldj_out = coupling_forward(x, ldj, params, reverse=rev)
        jax.block_until_ready((x_out, ldj_out))
        x_ref, ldj_ref = reference_forward(x, ldj, params, reverse=rev)
        assert x_out.shape == x.shape and ldj_out.shape == ldj.shape
        err_x = float(jnp.max(jnp.abs(x_out - x_ref)))
        err_l = float(jnp.max(jnp.abs(ldj_out - ldj_ref)))
        assert err_x < 5e-2, err_x
        assert err_l < 5e-2, err_l
    print("KERNEL_OK")
</pallas_src>

<mosaic_0001>
module attributes {stable_mosaic.version = 11 : i64} {
  func.func @_coupling_kernel(%arg0: i32, %arg1: memref<2x512xf32, #tpu.memory_space<vmem>>, %arg2: memref<2x512xf32, #tpu.memory_space<vmem>>, %arg3: memref<1x2xf32, #tpu.memory_space<vmem>>, %arg4: memref<4x512xf32, #tpu.memory_space<vmem>>, %arg5: memref<2x1xf32, #tpu.memory_space<vmem>>, %arg6: memref<2x1xf32, #tpu.memory_space<vmem>>, %arg7: memref<9x32x2xf32, #tpu.memory_space<vmem>>, %arg8: memref<32x1xf32, #tpu.memory_space<vmem>>, %arg9: memref<32x1xf32, #tpu.memory_space<vmem>>, %arg10: memref<32x32xf32, #tpu.memory_space<vmem>>, %arg11: memref<32x1xf32, #tpu.memory_space<vmem>>, %arg12: memref<32x1xf32, #tpu.memory_space<vmem>>, %arg13: memref<9x4x32xf32, #tpu.memory_space<vmem>>, %arg14: memref<4x1xf32, #tpu.memory_space<vmem>>, %arg15: memref<2x1xf32, #tpu.memory_space<vmem>>, %arg16: memref<2x512xf32, #tpu.memory_space<vmem>>, %arg17: memref<1x2xf32, #tpu.memory_space<vmem>>) attributes {dimension_semantics = [#tpu.dimension_semantics<arbitrary>], iteration_bounds = array<i64: 1>, scalar_prefetch = 0 : i64, scratch_operands = 0 : i64, tpu.core_type = #tpu.core_type<tc>, window_params = [{pipeline_mode = #tpu.pipeline_mode<synchronous>, transform_indices = @transform_0, window_bounds = array<i64: 2, 512>}, {pipeline_mode = #tpu.pipeline_mode<synchronous>, transform_indices = @transform_1, window_bounds = array<i64: 2, 512>}, {pipeline_mode = #tpu.pipeline_mode<synchronous>, transform_indices = @transform_2, window_bounds = array<i64: 1, 2>}, {pipeline_mode = #tpu.pipeline_mode<synchronous>, transform_indices = @transform_3, window_bounds = array<i64: 4, 512>}, {pipeline_mode = #tpu.pipeline_mode<synchronous>, transform_indices = @transform_4, window_bounds = array<i64: 2, 1>}, {pipeline_mode = #tpu.pipeline_mode<synchronous>, transform_indices = @transform_5, window_bounds = array<i64: 2, 1>}, {pipeline_mode = #tpu.pipeline_mode<synchronous>, transform_indices = @transform_6, window_bounds = array<i64: 9, 32, 2>}, {pipeline_mode = #tpu.pipeline_mode<synchronous>, transform_indices = @transform_7, window_bounds = array<i64: 32, 1>}, {pipeline_mode = #tpu.pipeline_mode<synchronous>, transform_indices = @transform_8, window_bounds = array<i64: 32, 1>}, {pipeline_mode = #tpu.pipeline_mode<synchronous>, transform_indices = @transform_9, window_bounds = array<i64: 32, 32>}, {pipeline_mode = #tpu.pipeline_mode<synchronous>, transform_indices = @transform_10, window_bounds = array<i64: 32, 1>}, {pipeline_mode = #tpu.pipeline_mode<synchronous>, transform_indices = @transform_11, window_bounds = array<i64: 32, 1>}, {pipeline_mode = #tpu.pipeline_mode<synchronous>, transform_indices = @transform_12, window_bounds = array<i64: 9, 4, 32>}, {pipeline_mode = #tpu.pipeline_mode<synchronous>, transform_indices = @transform_13, window_bounds = array<i64: 4, 1>}, {pipeline_mode = #tpu.pipeline_mode<synchronous>, transform_indices = @transform_14, window_bounds = array<i64: 2, 1>}, {pipeline_mode = #tpu.pipeline_mode<synchronous>, transform_indices = @transform_15, window_bounds = array<i64: 2, 512>}, {pipeline_mode = #tpu.pipeline_mode<synchronous>, transform_indices = @transform_16, window_bounds = array<i64: 1, 2>}]} {
    %c0 = arith.constant 0 : index
    %c0_0 = arith.constant 0 : index
    %0 = vector.load %arg4[%c0, %c0_0] : memref<4x512xf32, #tpu.memory_space<vmem>>, vector<4x512xf32>
    %c0_1 = arith.constant 0 : index
    %c0_2 = arith.constant 0 : index
    %1 = vector.load %arg2[%c0_1, %c0_2] : memref<2x512xf32, #tpu.memory_space<vmem>>, vector<2x512xf32>
    %c0_3 = arith.constant 0 : index
    %c0_4 = arith.constant 0 : index
    %2 = vector.load %arg5[%c0_3, %c0_4] : memref<2x1xf32, #tpu.memory_space<vmem>>, vector<2x1xf32>
    %c0_5 = arith.constant 0 : index
    %c0_6 = arith.constant 0 : index
    %3 = vector.load %arg6[%c0_5, %c0_6] : memref<2x1xf32, #tpu.memory_space<vmem>>, vector<2x1xf32>
    %cst = arith.constant dense<0.000000e+00> : vector<2xf32>
    %4 = vector.multi_reduction <add>, %1, %cst [1] : vector<2x512xf32> to vector<2xf32>
    %5 = vector.shape_cast %4 : vector<2xf32> to vector<2x1xf32>
    %cst_7 = arith.constant 0.001953125 : f32
    %6 = vector.broadcast %cst_7 : f32 to vector<2x1xf32>
    %7 = arith.mulf %5, %6 : vector<2x1xf32>
    %8 = vector.broadcast %7 : vector<2x1xf32> to vector<2x512xf32>
    %9 = arith.subf %1, %8 : vector<2x512xf32>
    %10 = arith.mulf %9, %9 : vector<2x512xf32>
    %cst_8 = arith.constant dense<0.000000e+00> : vector<2xf32>
    %11 = vector.multi_reduction <add>, %10, %cst_8 [1] : vector<2x512xf32> to vector<2xf32>
    %12 = vector.shape_cast %11 : vector<2xf32> to vector<2x1xf32>
    %cst_9 = arith.constant 0.001953125 : f32
    %13 = vector.broadcast %cst_9 : f32 to vector<2x1xf32>
    %14 = arith.mulf %12, %13 : vector<2x1xf32>
    %cst_10 = arith.constant 9.99999974E-6 : f32
    %15 = vector.broadcast %cst_10 : f32 to vector<2x1xf32>
    %16 = arith.addf %14, %15 : vector<2x1xf32>
    %17 = math.rsqrt %16 : vector<2x1xf32>
    %18 = vector.broadcast %17 : vector<2x1xf32> to vector<2x512xf32>
    %19 = arith.mulf %9, %18 : vector<2x512xf32>
    %20 = vector.broadcast %2 : vector<2x1xf32> to vector<2x512xf32>
    %21 = arith.mulf %19, %20 : vector<2x512xf32>
    %22 = vector.broadcast %3 : vector<2x1xf32> to vector<2x512xf32>
    %23 = arith.addf %21, %22 : vector<2x512xf32>
    %cst_11 = arith.constant 0.000000e+00 : f32
    %24 = vector.broadcast %cst_11 : f32 to vector<2x512xf32>
    %25 = arith.maximumf %23, %24 : vector<2x512xf32>
    %c0_12 = arith.constant 0 : index
    %c0_13 = arith.constant 0 : index
    %c0_14 = arith.constant 0 : index
    %26 = vector.load %arg7[%c0_12, %c0_13, %c0_14] : memref<9x32x2xf32, #tpu.memory_space<vmem>>, vector<1x32x2xf32>
    %27 = vector.shape_cast %26 : vector<1x32x2xf32> to vector<32x2xf32>
    %cst_15 = arith.constant dense<0.000000e+00> : vector<32x512xf32>
    %28 = tpu.matmul %27, %25, %cst_15 {dimension_numbers = #tpu.dot_dimension_numbers<[1], [0], [0], [1], [0, 0, 1, 1], [], []>} : vector<32x2xf32>, vector<2x512xf32>, vector<32x512xf32> -> vector<32x512xf32>
    %c17_i32 = arith.constant 17 : i32
    %29 = tpu.dynamic_rotate %28 by %c17_i32 dim 1 : vector<32x512xf32>, i32 -> vector<32x512xf32>
    %30 = vector.extract_strided_slice %0 {offsets = [0, 0], sizes = [1, 512], strides = [1, 1]} : vector<4x512xf32> to vector<1x512xf32>
    %31 = vector.extract_strided_slice %0 {offsets = [2, 0], sizes = [1, 512], strides = [1, 1]} : vector<4x512xf32> to vector<1x512xf32>
    %32 = arith.mulf %30, %31 : vector<1x512xf32>
    %33 = vector.broadcast %32 : vector<1x512xf32> to vector<32x512xf32>
    %34 = arith.mulf %29, %33 : vector<32x512xf32>
    %c1 = arith.constant 1 : index
    %c0_16 = arith.constant 0 : index
    %c0_17 = arith.constant 0 : index
    %35 = vector.load %arg7[%c1, %c0_16, %c0_17] : memref<9x32x2xf32, #tpu.memory_space<vmem>>, vector<1x32x2xf32>
    %36 = vector.shape_cast %35 : vector<1x32x2xf32> to vector<32x2xf32>
    %cst_18 = arith.constant dense<0.000000e+00> : vector<32x512xf32>
    %37 = tpu.matmul %36, %25, %cst_18 {dimension_numbers = #tpu.dot_dimension_numbers<[1], [0], [0], [1], [0, 0, 1, 1], [], []>} : vector<32x2xf32>, vector<2x512xf32>, vector<32x512xf32> -> vector<32x512xf32>
    %c16_i32 = arith.constant 16 : i32
    %38 = tpu.dynamic_rotate %37 by %c16_i32 dim 1 : vector<32x512xf32>, i32 -> vector<32x512xf32>
    %39 = vector.extract_strided_slice %0 {offsets = [0, 0], sizes = [1, 512], strides = [1, 1]} : vector<4x512xf32> to vector<1x512xf32>
    %40 = vector.broadcast %39 : vector<1x512xf32> to vector<32x512xf32>
    %41 = arith.mulf %38, %40 : vector<32x512xf32>
    %42 = arith.addf %34, %41 : vector<32x512xf32>
    %c2 = arith.constant 2 : index
    %c0_19 = arith.constant 0 : index
    %c0_20 = arith.constant 0 : index
    %43 = vector.load %arg7[%c2, %c0_19, %c0_20] : memref<9x32x2xf32, #tpu.memory_space<vmem>>, vector<1x32x2xf32>
    %44 = vector.shape_cast %43 : vector<1x32x2xf32> to vector<32x2xf32>
    %cst_21 = arith.constant dense<0.000000e+00> : vector<32x512xf32>
    %45 = tpu.matmul %44, %25, %cst_21 {dimension_numbers = #tpu.dot_dimension_numbers<[1], [0], [0], [1], [0, 0, 1, 1], [], []>} : vector<32x2xf32>, vector<2x512xf32>, vector<32x512xf32> -> vector<32x512xf32>
    %c15_i32 = arith.constant 15 : i32
    %46 = tpu.dynamic_rotate %45 by %c15_i32 dim 1 : vector<32x512xf32>, i32 -> vector<32x512xf32>
    %47 = vector.extract_strided_slice %0 {offsets = [0, 0], sizes = [1, 512], strides = [1, 1]} : vector<4x512xf32> to vector<1x512xf32>
    %48 = vector.extract_strided_slice %0 {offsets = [3, 0], sizes = [1, 512], strides = [1, 1]} : vector<4x512xf32> to vector<1x512xf32>
    %49 = arith.mulf %47, %48 : vector<1x512xf32>
    %50 = vector.broadcast %49 : vector<1x512xf32> to vector<32x512xf32>
    %51 = arith.mulf %46, %50 : vector<32x512xf32>
    %52 = arith.addf %42, %51 : vector<32x512xf32>
    %c3 = arith.constant 3 : index
    %c0_22 = arith.constant 0 : index
    %c0_23 = arith.constant 0 : index
    %53 = vector.load %arg7[%c3, %c0_22, %c0_23] : memref<9x32x2xf32, #tpu.memory_space<vmem>>, vector<1x32x2xf32>
    %54 = vector.shape_cast %53 : vector<1x32x2xf32> to vector<32x2xf32>
    %cst_24 = arith.constant dense<0.000000e+00> : vector<32x512xf32>
    %55 = tpu.matmul %54, %25, %cst_24 {dimension_numbers = #tpu.dot_dimension_numbers<[1], [0], [0], [1], [0, 0, 1, 1], [], []>} : vector<32x2xf32>, vector<2x512xf32>, vector<32x512xf32> -> vector<32x512xf32>
    %c1_i32 = arith.constant 1 : i32
    %56 = tpu.dynamic_rotate %55 by %c1_i32 dim 1 : vector<32x512xf32>, i32 -> vector<32x512xf32>
    %57 = vector.extract_strided_slice %0 {offsets = [2, 0], sizes = [1, 512], strides = [1, 1]} : vector<4x512xf32> to vector<1x512xf32>
    %58 = vector.broadcast %57 : vector<1x512xf32> to vector<32x512xf32>
    %59 = arith.mulf %56, %58 : vector<32x512xf32>
    %60 = arith.addf %52, %59 : vector<32x512xf32>
    %c4 = arith.constant 4 : index
    %c0_25 = arith.constant 0 : index
    %c0_26 = arith.constant 0 : index
    %61 = vector.load %arg7[%c4, %c0_25, %c0_26] : memref<9x32x2xf32, #tpu.memory_space<vmem>>, vector<1x32x2xf32>
    %62 = vector.shape_cast %61 : vector<1x32x2xf32> to vector<32x2xf32>
    %cst_27 = arith.constant dense<0.000000e+00> : vector<32x512xf32>
    %63 = tpu.matmul %62, %25, %cst_27 {dimension_numbers = #tpu.dot_dimension_numbers<[1], [0], [0], [1], [0, 0, 1, 1], [], []>} : vector<32x2xf32>, vector<2x512xf32>, vector<32x512xf32> -> vector<32x512xf32>
    %64 = arith.addf %60, %63 : vector<32x512xf32>
    %c5 = arith.constant 5 : index
    %c0_28 = arith.constant 0 : index
    %c0_29 = arith.constant 0 : index
    %65 = vector.load %arg7[%c5, %c0_28, %c0_29] : memref<9x32x2xf32, #tpu.memory_space<vmem>>, vector<1x32x2xf32>
    %66 = vector.shape_cast %65 : vector<1x32x2xf32> to vector<32x2xf32>
    %cst_30 = arith.constant dense<0.000000e+00> : vector<32x512xf32>
    %67 = tpu.matmul %66, %25, %cst_30 {dimension_numbers = #tpu.dot_dimension_numbers<[1], [0], [0], [1], [0, 0, 1, 1], [], []>} : vector<32x2xf32>, vector<2x512xf32>, vector<32x512xf32> -> vector<32x512xf32>
    %c511_i32 = arith.constant 511 : i32
    %68 = tpu.dynamic_rotate %67 by %c511_i32 dim 1 : vector<32x512xf32>, i32 -> vector<32x512xf32>
    %69 = vector.extract_strided_slice %0 {offsets = [3, 0], sizes = [1, 512], strides = [1, 1]} : vector<4x512xf32> to vector<1x512xf32>
    %70 = vector.broadcast %69 : vector<1x512xf32> to vector<32x512xf32>
    %71 = arith.mulf %68, %70 : vector<32x512xf32>
    %72 = arith.addf %64, %71 : vector<32x512xf32>
    %c6 = arith.constant 6 : index
    %c0_31 = arith.constant 0 : index
    %c0_32 = arith.constant 0 : index
    %73 = vector.load %arg7[%c6, %c0_31, %c0_32] : memref<9x32x2xf32, #tpu.memory_space<vmem>>, vector<1x32x2xf32>
    %74 = vector.shape_cast %73 : vector<1x32x2xf32> to vector<32x2xf32>
    %cst_33 = arith.constant dense<0.000000e+00> : vector<32x512xf32>
    %75 = tpu.matmul %74, %25, %cst_33 {dimension_numbers = #tpu.dot_dimension_numbers<[1], [0], [0], [1], [0, 0, 1, 1], [], []>} : vector<32x2xf32>, vector<2x512xf32>, vector<32x512xf32> -> vector<32x512xf32>
    %c497_i32 = arith.constant 497 : i32
    %76 = tpu.dynamic_rotate %75 by %c497_i32 dim 1 : vector<32x512xf32>, i32 -> vector<32x512xf32>
    %77 = vector.extract_strided_slice %0 {offsets = [1, 0], sizes = [1, 512], strides = [1, 1]} : vector<4x512xf32> to vector<1x512xf32>
    %78 = vector.extract_strided_slice %0 {offsets = [2, 0], sizes = [1, 512], strides = [1, 1]} : vector<4x512xf32> to vector<1x512xf32>
    %79 = arith.mulf %77, %78 : vector<1x512xf32>
    %80 = vector.broadcast %79 : vector<1x512xf32> to vector<32x512xf32>
    %81 = arith.mulf %76, %80 : vector<32x512xf32>
    %82 = arith.addf %72, %81 : vector<32x512xf32>
    %c7 = arith.constant 7 : index
    %c0_34 = arith.constant 0 : index
    %c0_35 = arith.constant 0 : index
    %83 = vector.load %arg7[%c7, %c0_34, %c0_35] : memref<9x32x2xf32, #tpu.memory_space<vmem>>, vector<1x32x2xf32>
    %84 = vector.shape_cast %83 : vector<1x32x2xf32> to vector<32x2xf32>
    %cst_36 = arith.constant dense<0.000000e+00> : vector<32x512xf32>
    %85 = tpu.matmul %84, %25, %cst_36 {dimension_numbers = #tpu.dot_dimension_numbers<[1], [0], [0], [1], [0, 0, 1, 1], [], []>} : vector<32x2xf32>, vector<2x512xf32>, vector<32x512xf32> -> vector<32x512xf32>
    %c496_i32 = arith.constant 496 : i32
    %86 = tpu.dynamic_rotate %85 by %c496_i32 dim 1 : vector<32x512xf32>, i32 -> vector<32x512xf32>
    %87 = vector.extract_strided_slice %0 {offsets = [1, 0], sizes = [1, 512], strides = [1, 1]} : vector<4x512xf32> to vector<1x512xf32>
    %88 = vector.broadcast %87 : vector<1x512xf32> to vector<32x512xf32>
    %89 = arith.mulf %86, %88 : vector<32x512xf32>
    %90 = arith.addf %82, %89 : vector<32x512xf32>
    %c8 = arith.constant 8 : index
    %c0_37 = arith.constant 0 : index
    %c0_38 = arith.constant 0 : index
    %91 = vector.load %arg7[%c8, %c0_37, %c0_38] : memref<9x32x2xf32, #tpu.memory_space<vmem>>, vector<1x32x2xf32>
    %92 = vector.shape_cast %91 : vector<1x32x2xf32> to vector<32x2xf32>
    %cst_39 = arith.constant dense<0.000000e+00> : vector<32x512xf32>
    %93 = tpu.matmul %92, %25, %cst_39 {dimension_numbers = #tpu.dot_dimension_numbers<[1], [0], [0], [1], [0, 0, 1, 1], [], []>} : vector<32x2xf32>, vector<2x512xf32>, vector<32x512xf32> -> vector<32x512xf32>
    %c495_i32 = arith.constant 495 : i32
    %94 = tpu.dynamic_rotate %93 by %c495_i32 dim 1 : vector<32x512xf32>, i32 -> vector<32x512xf32>
    %95 = vector.extract_strided_slice %0 {offsets = [1, 0], sizes = [1, 512], strides = [1, 1]} : vector<4x512xf32> to vector<1x512xf32>
    %96 = vector.extract_strided_slice %0 {offsets = [3, 0], sizes = [1, 512], strides = [1, 1]} : vector<4x512xf32> to vector<1x512xf32>
    %97 = arith.mulf %95, %96 : vector<1x512xf32>
    %98 = vector.broadcast %97 : vector<1x512xf32> to vector<32x512xf32>
    %99 = arith.mulf %94, %98 : vector<32x512xf32>
    %100 = arith.addf %90, %99 : vector<32x512xf32>
    %c0_40 = arith.constant 0 : index
    %c0_41 = arith.constant 0 : index
    %101 = vector.load %arg8[%c0_40, %c0_41] : memref<32x1xf32, #tpu.memory_space<vmem>>, vector<32x1xf32>
    %c0_42 = arith.constant 0 : index
    %c0_43 = arith.constant 0 : index
    %102 = vector.load %arg9[%c0_42, %c0_43] : memref<32x1xf32, #tpu.memory_space<vmem>>, vector<32x1xf32>
    %cst_44 = arith.constant dense<0.000000e+00> : vector<32xf32>
    %103 = vector.multi_reduction <add>, %100, %cst_44 [1] : vector<32x512xf32> to vector<32xf32>
    %104 = vector.shape_cast %103 : vector<32xf32> to vector<32x1xf32>
    %cst_45 = arith.constant 0.001953125 : f32
    %105 = vector.broadcast %cst_45 : f32 to vector<32x1xf32>
    %106 = arith.mulf %104, %105 : vector<32x1xf32>
    %107 = vector.broadcast %106 : vector<32x1xf32> to vector<32x512xf32>
    %108 = arith.subf %100, %107 : vector<32x512xf32>
    %109 = arith.mulf %108, %108 : vector<32x512xf32>
    %cst_46 = arith.constant dense<0.000000e+00> : vector<32xf32>
    %110 = vector.multi_reduction <add>, %109, %cst_46 [1] : vector<32x512xf32> to vector<32xf32>
    %111 = vector.shape_cast %110 : vector<32xf32> to vector<32x1xf32>
    %cst_47 = arith.constant 0.001953125 : f32
    %112 = vector.broadcast %cst_47 : f32 to vector<32x1xf32>
    %113 = arith.mulf %111, %112 : vector<32x1xf32>
    %cst_48 = arith.constant 9.99999974E-6 : f32
    %114 = vector.broadcast %cst_48 : f32 to vector<32x1xf32>
    %115 = arith.addf %113, %114 : vector<32x1xf32>
    %116 = math.rsqrt %115 : vector<32x1xf32>
    %117 = vector.broadcast %116 : vector<32x1xf32> to vector<32x512xf32>
    %118 = arith.mulf %108, %117 : vector<32x512xf32>
    %119 = vector.broadcast %101 : vector<32x1xf32> to vector<32x512xf32>
    %120 = arith.mulf %118, %119 : vector<32x512xf32>
    %121 = vector.broadcast %102 : vector<32x1xf32> to vector<32x512xf32>
    %122 = arith.addf %120, %121 : vector<32x512xf32>
    %cst_49 = arith.constant 0.000000e+00 : f32
    %123 = vector.broadcast %cst_49 : f32 to vector<32x512xf32>
    %124 = arith.maximumf %122, %123 : vector<32x512xf32>
    %c0_50 = arith.constant 0 : index
    %c0_51 = arith.constant 0 : index
    %125 = vector.load %arg10[%c0_50, %c0_51] : memref<32x32xf32, #tpu.memory_space<vmem>>, vector<32x32xf32>
    %cst_52 = arith.constant dense<0.000000e+00> : vector<32x512xf32>
    %126 = tpu.matmul %125, %124, %cst_52 {dimension_numbers = #tpu.dot_dimension_numbers<[1], [0], [0], [1], [0, 0, 1, 1], [], []>} : vector<32x32xf32>, vector<32x512xf32>, vector<32x512xf32> -> vector<32x512xf32>
    %c0_53 = arith.constant 0 : index
    %c0_54 = arith.constant 0 : index
    %127 = vector.load %arg11[%c0_53, %c0_54] : memref<32x1xf32, #tpu.memory_space<vmem>>, vector<32x1xf32>
    %c0_55 = arith.constant 0 : index
    %c0_56 = arith.constant 0 : index
    %128 = vector.load %arg12[%c0_55, %c0_56] : memref<32x1xf32, #tpu.memory_space<vmem>>, vector<32x1xf32>
    %cst_57 = arith.constant dense<0.000000e+00> : vector<32xf32>
    %129 = vector.multi_reduction <add>, %126, %cst_57 [1] : vector<32x512xf32> to vector<32xf32>
    %130 = vector.shape_cast %129 : vector<32xf32> to vector<32x1xf32>
    %cst_58 = arith.constant 0.001953125 : f32
    %131 = vector.broadcast %cst_58 : f32 to vector<32x1xf32>
    %132 = arith.mulf %130, %131 : vector<32x1xf32>
    %133 = vector.broadcast %132 : vector<32x1xf32> to vector<32x512xf32>
    %134 = arith.subf %126, %133 : vector<32x512xf32>
    %135 = arith.mulf %134, %134 : vector<32x512xf32>
    %cst_59 = arith.constant dense<0.000000e+00> : vector<32xf32>
    %136 = vector.multi_reduction <add>, %135, %cst_59 [1] : vector<32x512xf32> to vector<32xf32>
    %137 = vector.shape_cast %136 : vector<32xf32> to vector<32x1xf32>
    %cst_60 = arith.constant 0.001953125 : f32
    %138 = vector.broadcast %cst_60 : f32 to vector<32x1xf32>
    %139 = arith.mulf %137, %138 : vector<32x1xf32>
    %cst_61 = arith.constant 9.99999974E-6 : f32
    %140 = vector.broadcast %cst_61 : f32 to vector<32x1xf32>
    %141 = arith.addf %139, %140 : vector<32x1xf32>
    %142 = math.rsqrt %141 : vector<32x1xf32>
    %143 = vector.broadcast %142 : vector<32x1xf32> to vector<32x512xf32>
    %144 = arith.mulf %134, %143 : vector<32x512xf32>
    %145 = vector.broadcast %127 : vector<32x1xf32> to vector<32x512xf32>
    %146 = arith.mulf %144, %145 : vector<32x512xf32>
    %147 = vector.broadcast %128 : vector<32x1xf32> to vector<32x512xf32>
    %148 = arith.addf %146, %147 : vector<32x512xf32>
    %cst_62 = arith.constant 0.000000e+00 : f32
    %149 = vector.broadcast %cst_62 : f32 to vector<32x512xf32>
    %150 = arith.maximumf %148, %149 : vector<32x512xf32>
    %c0_63 = arith.constant 0 : index
    %c0_64 = arith.constant 0 : index
    %c0_65 = arith.constant 0 : index
    %151 = vector.load %arg13[%c0_63, %c0_64, %c0_65] : memref<9x4x32xf32, #tpu.memory_space<vmem>>, vector<1x4x32xf32>
    %152 = vector.shape_cast %151 : vector<1x4x32xf32> to vector<4x32xf32>
    %cst_66 = arith.constant dense<0.000000e+00> : vector<4x512xf32>
    %153 = tpu.matmul %152, %150, %cst_66 {dimension_numbers = #tpu.dot_dimension_numbers<[1], [0], [0], [1], [0, 0, 1, 1], [], []>} : vector<4x32xf32>, vector<32x512xf32>, vector<4x512xf32> -> vector<4x512xf32>
    %c17_i32_67 = arith.constant 17 : i32
    %154 = tpu.dynamic_rotate %153 by %c17_i32_67 dim 1 : vector<4x512xf32>, i32 -> vector<4x512xf32>
    %155 = vector.extract_strided_slice %0 {offsets = [0, 0], sizes = [1, 512], strides = [1, 1]} : vector<4x512xf32> to vector<1x512xf32>
    %156 = vector.extract_strided_slice %0 {offsets = [2, 0], sizes = [1, 512], strides = [1, 1]} : vector<4x512xf32> to vector<1x512xf32>
    %157 = arith.mulf %155, %156 : vector<1x512xf32>
    %158 = vector.broadcast %157 : vector<1x512xf32> to vector<4x512xf32>
    %159 = arith.mulf %154, %158 : vector<4x512xf32>
    %c1_68 = arith.constant 1 : index
    %c0_69 = arith.constant 0 : index
    %c0_70 = arith.constant 0 : index
    %160 = vector.load %arg13[%c1_68, %c0_69, %c0_70] : memref<9x4x32xf32, #tpu.memory_space<vmem>>, vector<1x4x32xf32>
    %161 = vector.shape_cast %160 : vector<1x4x32xf32> to vector<4x32xf32>
    %cst_71 = arith.constant dense<0.000000e+00> : vector<4x512xf32>
    %162 = tpu.matmul %161, %150, %cst_71 {dimension_numbers = #tpu.dot_dimension_numbers<[1], [0], [0], [1], [0, 0, 1, 1], [], []>} : vector<4x32xf32>, vector<32x512xf32>, vector<4x512xf32> -> vector<4x512xf32>
    %c16_i32_72 = arith.constant 16 : i32
    %163 = tpu.dynamic_rotate %162 by %c16_i32_72 dim 1 : vector<4x512xf32>, i32 -> vector<4x512xf32>
    %164 = vector.extract_strided_slice %0 {offsets = [0, 0], sizes = [1, 512], strides = [1, 1]} : vector<4x512xf32> to vector<1x512xf32>
    %165 = vector.broadcast %164 : vector<1x512xf32> to vector<4x512xf32>
    %166 = arith.mulf %163, %165 : vector<4x512xf32>
    %167 = arith.addf %159, %166 : vector<4x512xf32>
    %c2_73 = arith.constant 2 : index
    %c0_74 = arith.constant 0 : index
    %c0_75 = arith.constant 0 : index
    %168 = vector.load %arg13[%c2_73, %c0_74, %c0_75] : memref<9x4x32xf32, #tpu.memory_space<vmem>>, vector<1x4x32xf32>
    %169 = vector.shape_cast %168 : vector<1x4x32xf32> to vector<4x32xf32>
    %cst_76 = arith.constant dense<0.000000e+00> : vector<4x512xf32>
    %170 = tpu.matmul %169, %150, %cst_76 {dimension_numbers = #tpu.dot_dimension_numbers<[1], [0], [0], [1], [0, 0, 1, 1], [], []>} : vector<4x32xf32>, vector<32x512xf32>, vector<4x512xf32> -> vector<4x512xf32>
    %c15_i32_77 = arith.constant 15 : i32
    %171 = tpu.dynamic_rotate %170 by %c15_i32_77 dim 1 : vector<4x512xf32>, i32 -> vector<4x512xf32>
    %172 = vector.extract_strided_slice %0 {offsets = [0, 0], sizes = [1, 512], strides = [1, 1]} : vector<4x512xf32> to vector<1x512xf32>
    %173 = vector.extract_strided_slice %0 {offsets = [3, 0], sizes = [1, 512], strides = [1, 1]} : vector<4x512xf32> to vector<1x512xf32>
    %174 = arith.mulf %172, %173 : vector<1x512xf32>
    %175 = vector.broadcast %174 : vector<1x512xf32> to vector<4x512xf32>
    %176 = arith.mulf %171, %175 : vector<4x512xf32>
    %177 = arith.addf %167, %176 : vector<4x512xf32>
    %c3_78 = arith.constant 3 : index
    %c0_79 = arith.constant 0 : index
    %c0_80 = arith.constant 0 : index
    %178 = vector.load %arg13[%c3_78, %c0_79, %c0_80] : memref<9x4x32xf32, #tpu.memory_space<vmem>>, vector<1x4x32xf32>
    %179 = vector.shape_cast %178 : vector<1x4x32xf32> to vector<4x32xf32>
    %cst_81 = arith.constant dense<0.000000e+00> : vector<4x512xf32>
    %180 = tpu.matmul %179, %150, %cst_81 {dimension_numbers = #tpu.dot_dimension_numbers<[1], [0], [0], [1], [0, 0, 1, 1], [], []>} : vector<4x32xf32>, vector<32x512xf32>, vector<4x512xf32> -> vector<4x512xf32>
    %c1_i32_82 = arith.constant 1 : i32
    %181 = tpu.dynamic_rotate %180 by %c1_i32_82 dim 1 : vector<4x512xf32>, i32 -> vector<4x512xf32>
    %182 = vector.extract_strided_slice %0 {offsets = [2, 0], sizes = [1, 512], strides = [1, 1]} : vector<4x512xf32> to vector<1x512xf32>
    %183 = vector.broadcast %182 : vector<1x512xf32> to vector<4x512xf32>
    %184 = arith.mulf %181, %183 : vector<4x512xf32>
    %185 = arith.addf %177, %184 : vector<4x512xf32>
    %c4_83 = arith.constant 4 : index
    %c0_84 = arith.constant 0 : index
    %c0_85 = arith.constant 0 : index
    %186 = vector.load %arg13[%c4_83, %c0_84, %c0_85] : memref<9x4x32xf32, #tpu.memory_space<vmem>>, vector<1x4x32xf32>
    %187 = vector.shape_cast %186 : vector<1x4x32xf32> to vector<4x32xf32>
    %cst_86 = arith.constant dense<0.000000e+00> : vector<4x512xf32>
    %188 = tpu.matmul %187, %150, %cst_86 {dimension_numbers = #tpu.dot_dimension_numbers<[1], [0], [0], [1], [0, 0, 1, 1], [], []>} : vector<4x32xf32>, vector<32x512xf32>, vector<4x512xf32> -> vector<4x512xf32>
    %189 = arith.addf %185, %188 : vector<4x512xf32>
    %c5_87 = arith.constant 5 : index
    %c0_88 = arith.constant 0 : index
    %c0_89 = arith.constant 0 : index
    %190 = vector.load %arg13[%c5_87, %c0_88, %c0_89] : memref<9x4x32xf32, #tpu.memory_space<vmem>>, vector<1x4x32xf32>
    %191 = vector.shape_cast %190 : vector<1x4x32xf32> to vector<4x32xf32>
    %cst_90 = arith.constant dense<0.000000e+00> : vector<4x512xf32>
    %192 = tpu.matmul %191, %150, %cst_90 {dimension_numbers = #tpu.dot_dimension_numbers<[1], [0], [0], [1], [0, 0, 1, 1], [], []>} : vector<4x32xf32>, vector<32x512xf32>, vector<4x512xf32> -> vector<4x512xf32>
    %c511_i32_91 = arith.constant 511 : i32
    %193 = tpu.dynamic_rotate %192 by %c511_i32_91 dim 1 : vector<4x512xf32>, i32 -> vector<4x512xf32>
    %194 = vector.extract_strided_slice %0 {offsets = [3, 0], sizes = [1, 512], strides = [1, 1]} : vector<4x512xf32> to vector<1x512xf32>
    %195 = vector.broadcast %194 : vector<1x512xf32> to vector<4x512xf32>
    %196 = arith.mulf %193, %195 : vector<4x512xf32>
    %197 = arith.addf %189, %196 : vector<4x512xf32>
    %c6_92 = arith.constant 6 : index
    %c0_93 = arith.constant 0 : index
    %c0_94 = arith.constant 0 : index
    %198 = vector.load %arg13[%c6_92, %c0_93, %c0_94] : memref<9x4x32xf32, #tpu.memory_space<vmem>>, vector<1x4x32xf32>
    %199 = vector.shape_cast %198 : vector<1x4x32xf32> to vector<4x32xf32>
    %cst_95 = arith.constant dense<0.000000e+00> : vector<4x512xf32>
    %200 = tpu.matmul %199, %150, %cst_95 {dimension_numbers = #tpu.dot_dimension_numbers<[1], [0], [0], [1], [0, 0, 1, 1], [], []>} : vector<4x32xf32>, vector<32x512xf32>, vector<4x512xf32> -> vector<4x512xf32>
    %c497_i32_96 = arith.constant 497 : i32
    %201 = tpu.dynamic_rotate %200 by %c497_i32_96 dim 1 : vector<4x512xf32>, i32 -> vector<4x512xf32>
    %202 = vector.extract_strided_slice %0 {offsets = [1, 0], sizes = [1, 512], strides = [1, 1]} : vector<4x512xf32> to vector<1x512xf32>
    %203 = vector.extract_strided_slice %0 {offsets = [2, 0], sizes = [1, 512], strides = [1, 1]} : vector<4x512xf32> to vector<1x512xf32>
    %204 = arith.mulf %202, %203 : vector<1x512xf32>
    %205 = vector.broadcast %204 : vector<1x512xf32> to vector<4x512xf32>
    %206 = arith.mulf %201, %205 : vector<4x512xf32>
    %207 = arith.addf %197, %206 : vector<4x512xf32>
    %c7_97 = arith.constant 7 : index
    %c0_98 = arith.constant 0 : index
    %c0_99 = arith.constant 0 : index
    %208 = vector.load %arg13[%c7_97, %c0_98, %c0_99] : memref<9x4x32xf32, #tpu.memory_space<vmem>>, vector<1x4x32xf32>
    %209 = vector.shape_cast %208 : vector<1x4x32xf32> to vector<4x32xf32>
    %cst_100 = arith.constant dense<0.000000e+00> : vector<4x512xf32>
    %210 = tpu.matmul %209, %150, %cst_100 {dimension_numbers = #tpu.dot_dimension_numbers<[1], [0], [0], [1], [0, 0, 1, 1], [], []>} : vector<4x32xf32>, vector<32x512xf32>, vector<4x512xf32> -> vector<4x512xf32>
    %c496_i32_101 = arith.constant 496 : i32
    %211 = tpu.dynamic_rotate %210 by %c496_i32_101 dim 1 : vector<4x512xf32>, i32 -> vector<4x512xf32>
    %212 = vector.extract_strided_slice %0 {offsets = [1, 0], sizes = [1, 512], strides = [1, 1]} : vector<4x512xf32> to vector<1x512xf32>
    %213 = vector.broadcast %212 : vector<1x512xf32> to vector<4x512xf32>
    %214 = arith.mulf %211, %213 : vector<4x512xf32>
    %215 = arith.addf %207, %214 : vector<4x512xf32>
    %c8_102 = arith.constant 8 : index
    %c0_103 = arith.constant 0 : index
    %c0_104 = arith.constant 0 : index
    %216 = vector.load %arg13[%c8_102, %c0_103, %c0_104] : memref<9x4x32xf32, #tpu.memory_space<vmem>>, vector<1x4x32xf32>
    %217 = vector.shape_cast %216 : vector<1x4x32xf32> to vector<4x32xf32>
    %cst_105 = arith.constant dense<0.000000e+00> : vector<4x512xf32>
    %218 = tpu.matmul %217, %150, %cst_105 {dimension_numbers = #tpu.dot_dimension_numbers<[1], [0], [0], [1], [0, 0, 1, 1], [], []>} : vector<4x32xf32>, vector<32x512xf32>, vector<4x512xf32> -> vector<4x512xf32>
    %c495_i32_106 = arith.constant 495 : i32
    %219 = tpu.dynamic_rotate %218 by %c495_i32_106 dim 1 : vector<4x512xf32>, i32 -> vector<4x512xf32>
    %220 = vector.extract_strided_slice %0 {offsets = [1, 0], sizes = [1, 512], strides = [1, 1]} : vector<4x512xf32> to vector<1x512xf32>
    %221 = vector.extract_strided_slice %0 {offsets = [3, 0], sizes = [1, 512], strides = [1, 1]} : vector<4x512xf32> to vector<1x512xf32>
    %222 = arith.mulf %220, %221 : vector<1x512xf32>
    %223 = vector.broadcast %222 : vector<1x512xf32> to vector<4x512xf32>
    %224 = arith.mulf %219, %223 : vector<4x512xf32>
    %225 = arith.addf %215, %224 : vector<4x512xf32>
    %c0_107 = arith.constant 0 : index
    %c0_108 = arith.constant 0 : index
    %226 = vector.load %arg14[%c0_107, %c0_108] : memref<4x1xf32, #tpu.memory_space<vmem>>, vector<4x1xf32>
    %227 = vector.broadcast %226 : vector<4x1xf32> to vector<4x512xf32>
    %228 = arith.addf %225, %227 : vector<4x512xf32>
    %c0_109 = arith.constant 0 : index
    %c0_110 = arith.constant 0 : index
    %229 = vector.load %arg15[%c0_109, %c0_110] : memref<2x1xf32, #tpu.memory_space<vmem>>, vector<2x1xf32>
    %230 = vector.extract_strided_slice %228 {offsets = [0, 0], sizes = [2, 512], strides = [1, 1]} : vector<4x512xf32> to vector<2x512xf32>
    %231 = math.tanh %230 : vector<2x512xf32>
    %232 = vector.broadcast %229 : vector<2x1xf32> to vector<2x512xf32>
    %233 = arith.mulf %232, %231 : vector<2x512xf32>
    %234 = vector.extract_strided_slice %228 {offsets = [2, 0], sizes = [2, 512], strides = [1, 1]} : vector<4x512xf32> to vector<2x512xf32>
    %c0_111 = arith.constant 0 : index
    %c0_112 = arith.constant 0 : index
    %235 = vector.load %arg1[%c0_111, %c0_112] : memref<2x512xf32, #tpu.memory_space<vmem>>, vector<2x512xf32>
    %236 = arith.addf %235, %234 : vector<2x512xf32>
    %237 = math.exp %233 : vector<2x512xf32>
    %238 = arith.mulf %236, %237 : vector<2x512xf32>
    %c0_113 = arith.constant 0 : index
    %c0_114 = arith.constant 0 : index
    %239 = vector.load %arg16[%c0_113, %c0_114] : memref<2x512xf32, #tpu.memory_space<vmem>>, vector<2x512xf32>
    tpu.vector_store %arg16[%c0_113, %c0_114], %238 {strides = array<i32>} : memref<2x512xf32, #tpu.memory_space<vmem>>, vector<2x512xf32>,
    %240 = vector.extract_strided_slice %233 {offsets = [0, 0], sizes = [2, 256], strides = [1, 1]} : vector<2x512xf32> to vector<2x256xf32>
    %cst_115 = arith.constant dense<0.000000e+00> : vector<2xf32>
    %241 = vector.multi_reduction <add>, %240, %cst_115 [1] : vector<2x256xf32> to vector<2xf32>
    %242 = vector.shape_cast %241 : vector<2xf32> to vector<2x1xf32>
    %243 = vector.extract_strided_slice %233 {offsets = [0, 256], sizes = [2, 256], strides = [1, 1]} : vector<2x512xf32> to vector<2x256xf32>
    %cst_116 = arith.constant dense<0.000000e+00> : vector<2xf32>
    %244 = vector.multi_reduction <add>, %243, %cst_116 [1] : vector<2x256xf32> to vector<2xf32>
    %245 = vector.shape_cast %244 : vector<2xf32> to vector<2x1xf32>
    %246 = tpu.concatenate %242, %245 in 1 : vector<2x1xf32>, vector<2x1xf32> -> vector<2x2xf32>
    %cst_117 = arith.constant dense<0.000000e+00> : vector<2xf32>
    %247 = vector.multi_reduction <add>, %246, %cst_117 [0] : vector<2x2xf32> to vector<2xf32>
    %248 = vector.shape_cast %247 : vector<2xf32> to vector<1x2xf32>
    %c0_118 = arith.constant 0 : index
    %c0_119 = arith.constant 0 : index
    %249 = vector.load %arg3[%c0_118, %c0_119] : memref<1x2xf32, #tpu.memory_space<vmem>>, vector<1x2xf32>
    %250 = arith.addf %249, %248 : vector<1x2xf32>
    %c0_120 = arith.constant 0 : index
    %c0_121 = arith.constant 0 : index
    %251 = vector.load %arg17[%c0_120, %c0_121] : memref<1x2xf32, #tpu.memory_space<vmem>>, vector<1x2xf32>
    tpu.vector_store %arg17[%c0_120, %c0_121], %250 {strides = array<i32>} : memref<1x2xf32, #tpu.memory_space<vmem>>, vector<1x2xf32>,
    return
  }
  func.func @transform_0(%arg0: i32) -> (i32, i32) {
    %c0_i32 = arith.constant 0 : i32
    %c0_i32_0 = arith.constant 0 : i32
    %c0_i32_1 = arith.constant 0 : i32
    return %c0_i32, %c0_i32_0 : i32, i32
  }
  func.func @transform_1(%arg0: i32) -> (i32, i32) {
    %c0_i32 = arith.constant 0 : i32
    %c0_i32_0 = arith.constant 0 : i32
    %c0_i32_1 = arith.constant 0 : i32
    return %c0_i32, %c0_i32_0 : i32, i32
  }
  func.func @transform_2(%arg0: i32) -> (i32, i32) {
    %c0_i32 = arith.constant 0 : i32
    %c0_i32_0 = arith.constant 0 : i32
    %c0_i32_1 = arith.constant 0 : i32
    return %c0_i32, %c0_i32_0 : i32, i32
  }
  func.func @transform_3(%arg0: i32) -> (i32, i32) {
    %c0_i32 = arith.constant 0 : i32
    %c0_i32_0 = arith.constant 0 : i32
    %c0_i32_1 = arith.constant 0 : i32
    return %c0_i32, %c0_i32_0 : i32, i32
  }
  func.func @transform_4(%arg0: i32) -> (i32, i32) {
    %c0_i32 = arith.constant 0 : i32
    %c0_i32_0 = arith.constant 0 : i32
    %c0_i32_1 = arith.constant 0 : i32
    return %c0_i32, %c0_i32_0 : i32, i32
  }
  func.func @transform_5(%arg0: i32) -> (i32, i32) {
    %c0_i32 = arith.constant 0 : i32
    %c0_i32_0 = arith.constant 0 : i32
    %c0_i32_1 = arith.constant 0 : i32
    return %c0_i32, %c0_i32_0 : i32, i32
  }
  func.func @transform_6(%arg0: i32) -> (i32, i32, i32) {
    %c0_i32 = arith.constant 0 : i32
    %c0_i32_0 = arith.constant 0 : i32
    %c0_i32_1 = arith.constant 0 : i32
    %c0_i32_2 = arith.constant 0 : i32
    return %c0_i32, %c0_i32_0, %c0_i32_1 : i32, i32, i32
  }
  func.func @transform_7(%arg0: i32) -> (i32, i32) {
    %c0_i32 = arith.constant 0 : i32
    %c0_i32_0 = arith.constant 0 : i32
    %c0_i32_1 = arith.constant 0 : i32
    return %c0_i32, %c0_i32_0 : i32, i32
  }
  func.func @transform_8(%arg0: i32) -> (i32, i32) {
    %c0_i32 = arith.constant 0 : i32
    %c0_i32_0 = arith.constant 0 : i32
    %c0_i32_1 = arith.constant 0 : i32
    return %c0_i32, %c0_i32_0 : i32, i32
  }
  func.func @transform_9(%arg0: i32) -> (i32, i32) {
    %c0_i32 = arith.constant 0 : i32
    %c0_i32_0 = arith.constant 0 : i32
    %c0_i32_1 = arith.constant 0 : i32
    return %c0_i32, %c0_i32_0 : i32, i32
  }
  func.func @transform_10(%arg0: i32) -> (i32, i32) {
    %c0_i32 = arith.constant 0 : i32
    %c0_i32_0 = arith.constant 0 : i32
    %c0_i32_1 = arith.constant 0 : i32
    return %c0_i32, %c0_i32_0 : i32, i32
  }
  func.func @transform_11(%arg0: i32) -> (i32, i32) {
    %c0_i32 = arith.constant 0 : i32
    %c0_i32_0 = arith.constant 0 : i32
    %c0_i32_1 = arith.constant 0 : i32
    return %c0_i32, %c0_i32_0 : i32, i32
  }
  func.func @transform_12(%arg0: i32) -> (i32, i32, i32) {
    %c0_i32 = arith.constant 0 : i32
    %c0_i32_0 = arith.constant 0 : i32
    %c0_i32_1 = arith.constant 0 : i32
    %c0_i32_2 = arith.constant 0 : i32
    return %c0_i32, %c0_i32_0, %c0_i32_1 : i32, i32, i32
  }
  func.func @transform_13(%arg0: i32) -> (i32, i32) {
    %c0_i32 = arith.constant 0 : i32
    %c0_i32_0 = arith.constant 0 : i32
    %c0_i32_1 = arith.constant 0 : i32
    return %c0_i32, %c0_i32_0 : i32, i32
  }
  func.func @transform_14(%arg0: i32) -> (i32, i32) {
    %c0_i32 = arith.constant 0 : i32
    %c0_i32_0 = arith.constant 0 : i32
    %c0_i32_1 = arith.constant 0 : i32
    return %c0_i32, %c0_i32_0 : i32, i32
  }
  func.func @transform_15(%arg0: i32) -> (i32, i32) {
    %c0_i32 = arith.constant 0 : i32
    %c0_i32_0 = arith.constant 0 : i32
    %c0_i32_1 = arith.constant 0 : i32
    return %c0_i32, %c0_i32_0 : i32, i32
  }
  func.func @transform_16(%arg0: i32) -> (i32, i32) {
    %c0_i32 = arith.constant 0 : i32
    %c0_i32_0 = arith.constant 0 : i32
    %c0_i32_1 = arith.constant 0 : i32
    return %c0_i32, %c0_i32_0 : i32, i32
  }
}

</mosaic_0001>

<llo_original>
// kernel: coupling_forward.1
$region0: #{coupling_forward.1}
  #allocation0 [shape = 'u32[]', space=smem, size = 0x4, offset = 0x4, fixed_abs, tag = 'smem constant byte address 0x4 - core index']
  #allocation1 [shape = 'u32[144,128]{1,0:T(1,128)}', space=vmem, size = 0x12000, scoped, tag = 'internal scratch']
  %s0 = inlined_call_operand.vmem [shape: f32[2,512], index: 0, kind: input, shape index: {}]
  %s1 = inlined_call_operand.vmem [shape: f32[2,512], index: 1, kind: input, shape index: {}]
  %s2 = inlined_call_operand.vmem [shape: f32[1,2], index: 2, kind: input, shape index: {}]
  %s3 = inlined_call_operand.vmem [shape: f32[4,512], index: 3, kind: input, shape index: {}]
  %s4 = inlined_call_operand.vmem [shape: f32[2,1], index: 4, kind: input, shape index: {}]
  %s5 = inlined_call_operand.vmem [shape: f32[2,1], index: 5, kind: input, shape index: {}]
  %s6 = inlined_call_operand.vmem [shape: f32[9,32,2], index: 6, kind: input, shape index: {}]
  %s7 = inlined_call_operand.vmem [shape: f32[32,1], index: 7, kind: input, shape index: {}]
  %s8 = inlined_call_operand.vmem [shape: f32[32,1], index: 8, kind: input, shape index: {}]
  %s9 = inlined_call_operand.vmem [shape: f32[32,32], index: 9, kind: input, shape index: {}]
  %s10 = inlined_call_operand.vmem [shape: f32[32,1], index: 10, kind: input, shape index: {}]
  %s11 = inlined_call_operand.vmem [shape: f32[32,1], index: 11, kind: input, shape index: {}]
  %s12 = inlined_call_operand.vmem [shape: f32[9,4,32], index: 12, kind: input, shape index: {}]
  %s13 = inlined_call_operand.vmem [shape: f32[4,1], index: 13, kind: input, shape index: {}]
  %s14 = inlined_call_operand.vmem [shape: f32[2,1], index: 14, kind: input, shape index: {}]
  %s15 = inlined_call_operand.vmem [shape: f32[2,512], index: 15, kind: output, shape index: {0}]
  %s16 = inlined_call_operand.hbm [shape: f32[1,2], index: 16, kind: output, shape index: {1}]
  %17 = xla_tuple %s15, %s16
  %s18 = sld [smem:[#allocation0]]
  $region78: #{coupling_forward.1} parent=0
    _
  %s20 = ssub.s32 1, %s18
  %s21 = scalar_select 0, %s20, %s18
  $region1: #{coupling_forward.1} parent=0
    #allocation2 [shape = 'u8[512]{0}', space=vmem, size = 0x400, scoped, tag = 'output window, operand 1, single buffered']
    #allocation3 [shape = 's32[1]{0}', space=sflag, size = 0x4, scoped, tag = 'scoped memory for coupling_forward.1']
    %22 = vsyncpa [#allocation3], 0
    // Predicated region
    $region2: #{coupling_forward.1} parent=1 // pred_check
      _
    $region3: #{coupling_forward.1} parent=1 // pred_check_branch
      %24 = sbr.rel (0) target = $region5
    $region4: #{coupling_forward.1} parent=1 // pred_region
      _
    $region5: #{coupling_forward.1} parent=1 // pred_fallthru
      _
    // Predicated region
    $region6: #{coupling_forward.1} parent=1 // pred_check
      _
    $region7: #{coupling_forward.1} parent=1 // pred_check_branch
      %26 = sbr.rel (0) target = $region9
    $region8: #{coupling_forward.1} parent=1 // pred_region
      _
    $region9: #{coupling_forward.1} parent=1 // pred_fallthru
      _
    // Predicated region
    $region10: #{coupling_forward.1} parent=1 // pred_check
      _
    $region11: #{coupling_forward.1} parent=1 // pred_check_branch
      %28 = sbr.rel (0) target = $region13
    $region12: #{coupling_forward.1} parent=1 // pred_region
      _
    $region13: #{coupling_forward.1} parent=1 // pred_fallthru
      _
    // Predicated region
    $region14: #{coupling_forward.1} parent=1 // pred_check
      _
    $region15: #{coupling_forward.1} parent=1 // pred_check_branch
      %30 = sbr.rel (0) target = $region17
    $region16: #{coupling_forward.1} parent=1 // pred_region
      _
    $region17: #{coupling_forward.1} parent=1 // pred_fallthru
      _
    // Predicated region
    $region18: #{coupling_forward.1} parent=1 // pred_check
      _
    $region19: #{coupling_forward.1} parent=1 // pred_check_branch
      %32 = sbr.rel (0) target = $region21
    $region20: #{coupling_forward.1} parent=1 // pred_region
      _
    $region21: #{coupling_forward.1} parent=1 // pred_fallthru
      _
    // Predicated region
    $region22: #{coupling_forward.1} parent=1 // pred_check
      _
    $region23: #{coupling_forward.1} parent=1 // pred_check_branch
      %34 = sbr.rel (0) target = $region25
    $region24: #{coupling_forward.1} parent=1 // pred_region
      _
    $region25: #{coupling_forward.1} parent=1 // pred_fallthru
      _
    // Predicated region
    $region26: #{coupling_forward.1} parent=1 // pred_check
      _
    $region27: #{coupling_forward.1} parent=1 // pred_check_branch
      %36 = sbr.rel (0) target = $region29
    $region28: #{coupling_forward.1} parent=1 // pred_region
      _
    $region29: #{coupling_forward.1} parent=1 // pred_fallthru
      _
    // Predicated region
    $region30: #{coupling_forward.1} parent=1 // pred_check
      _
    $region31: #{coupling_forward.1} parent=1 // pred_check_branch
      %38 = sbr.rel (0) target = $region33
    $region32: #{coupling_forward.1} parent=1 // pred_region
      _
    $region33: #{coupling_forward.1} parent=1 // pred_fallthru
      _
    // Predicated region
    $region34: #{coupling_forward.1} parent=1 // pred_check
      _
    $region35: #{coupling_forward.1} parent=1 // pred_check_branch
      %40 = sbr.rel (0) target = $region37
    $region36: #{coupling_forward.1} parent=1 // pred_region
      _
    $region37: #{coupling_forward.1} parent=1 // pred_fallthru
      _
    // Predicated region
    $region38: #{coupling_forward.1} parent=1 // pred_check
      _
    $region39: #{coupling_forward.1} parent=1 // pred_check_branch
      %42 = sbr.rel (0) target = $region41
    $region40: #{coupling_forward.1} parent=1 // pred_region
      _
    $region41: #{coupling_forward.1} parent=1 // pred_fallthru
      _
    // Predicated region
    $region42: #{coupling_forward.1} parent=1 // pred_check
      _
    $region43: #{coupling_forward.1} parent=1 // pred_check_branch
      %44 = sbr.rel (0) target = $region45
    $region44: #{coupling_forward.1} parent=1 // pred_region
      _
    $region45: #{coupling_forward.1} parent=1 // pred_fallthru
      _
    // Predicated region
    $region46: #{coupling_forward.1} parent=1 // pred_check
      _
    $region47: #{coupling_forward.1} parent=1 // pred_check_branch
      %46 = sbr.rel (0) target = $region49
    $region48: #{coupling_forward.1} parent=1 // pred_region
      _
    $region49: #{coupling_forward.1} parent=1 // pred_fallthru
      _
    // Predicated region
    $region50: #{coupling_forward.1} parent=1 // pred_check
      _
    $region51: #{coupling_forward.1} parent=1 // pred_check_branch
      %48 = sbr.rel (0) target = $region53
    $region52: #{coupling_forward.1} parent=1 // pred_region
      _
    $region53: #{coupling_forward.1} parent=1 // pred_fallthru
      _
    // Predicated region
    $region54: #{coupling_forward.1} parent=1 // pred_check
      _
    $region55: #{coupling_forward.1} parent=1 // pred_check_branch
      %50 = sbr.rel (0) target = $region57
    $region56: #{coupling_forward.1} parent=1 // pred_region
      _
    $region57: #{coupling_forward.1} parent=1 // pred_fallthru
      _
    // Predicated region
    $region58: #{coupling_forward.1} parent=1 // pred_check
      _
    $region59: #{coupling_forward.1} parent=1 // pred_check_branch
      %52 = sbr.rel (0) target = $region61
    $region60: #{coupling_forward.1} parent=1 // pred_region
      _
    $region61: #{coupling_forward.1} parent=1 // pred_fallthru
      _
    %v53 = vld [vmem:[%s3] sm:$0xff]
    %v54 = vld [vmem:[%s3 + $0x8] sm:$0xff]
    %v55 = vld [vmem:[%s1] sm:$0xff]
    %v56 = vld [vmem:[%s4] sm:$0x3]
    %v57 = vld [vmem:[%s5] sm:$0x3]
    %v59 = vcombine.high %v55, %v55
    %v61 = vunpack.c.l.s4 1983009808
    %v62 = vunpack.c.0.s8 %v61
    %v63 = vlaneseq
    %v64 = vshrl.u32 %v63, 7
    %v65 = vsub.s32 %v62, %v64
    %v66 = vrot.slane %v55, %v65
    %v68 = vunpack.c.l.s4 1983009808
    %v69 = vunpack.c.0.s8 %v68
    %v70 = vlaneseq
    %v71 = vshrl.u32 %v70, 7
    %v72 = vsub.s32 %v69, %v71
    %v73 = vrot.slane %v59, %v72
    %v74 = vcombine.high %v66, %v66
    %v75 = vcombine.high %v73, %v73
    %vm80 = vcmask 1041408
    %v81 = vsel %vm80, %v66, 0.0
    %v82 = vsel %vm80, %v74, 0.0
    %v83 = vadd.f32 %v81, %v82
    %v84 = vsel %vm80, %v73, 0.0
    %v85 = vadd.f32 %v83, %v84
    %v86 = vsel %vm80, %v75, 0.0
    %v87 = vadd.f32 %v85, %v86
    %88 = vadd.xlane.f32.xlu0 %v87
    %v89 = vpop.xlane.xlu0 %88
    %v90 = vmul.f32 %v89, 0.001953125
    %v93 = vunpack.c.l.s4 269488144
    %v94 = vunpack.c.0.s8 %v93
    %v95 = vlaneseq
    %v96 = vshrl.u32 %v95, 7
    %v97 = vsub.s32 %v94, %v96
    %v98 = vrot.slane %v90, %v97
    %v100 = vsub.f32 %v55, %v98
    %v101 = vmul.f32 %v100, %v100
    %v103 = vcombine.high %v101, %v101
    %v105 = vunpack.c.l.s4 1983009808
    %v106 = vunpack.c.0.s8 %v105
    %v107 = vlaneseq
    %v108 = vshrl.u32 %v107, 7
    %v109 = vsub.s32 %v106, %v108
    %v110 = vrot.slane %v101, %v109
    %v112 = vunpack.c.l.s4 1983009808
    %v113 = vunpack.c.0.s8 %v112
    %v114 = vlaneseq
    %v115 = vshrl.u32 %v114, 7
    %v116 = vsub.s32 %v113, %v115
    %v117 = vrot.slane %v103, %v116
    %v118 = vcombine.high %v110, %v110
    %v119 = vcombine.high %v117, %v117
    %v124 = vsel %vm80, %v110, 0.0
    %v125 = vsel %vm80, %v118, 0.0
    %v126 = vadd.f32 %v124, %v125
    %v127 = vsel %vm80, %v117, 0.0
    %v128 = vadd.f32 %v126, %v127
    %v129 = vsel %vm80, %v119, 0.0
    %v130 = vadd.f32 %v128, %v129
    %131 = vadd.xlane.f32.xlu0 %v130
    %v132 = vpop.xlane.xlu0 %131
    %v133 = vmul.f32 %v132, 0.001953125
    %v134 = vadd.f32 %v133, 1e-05
    %v135 = vrsqrt.pop %v134
    %v138 = vunpack.c.l.s4 269488144
    %v139 = vunpack.c.0.s8 %v138
    %v140 = vlaneseq
    %v141 = vshrl.u32 %v140, 7
    %v142 = vsub.s32 %v139, %v141
    %v143 = vrot.slane %v135, %v142
    %v145 = vmul.f32 %v100, %v143
    %147 = vset.pattern.permute.xlu0 0
    %148 = vperm.xlu0 %147, %v56
    %v149 = vpop.permute.xlu0 %148
    %v151 = vunpack.c.l.s4 269488144
    %v152 = vunpack.c.0.s8 %v151
    %v153 = vlaneseq
    %v154 = vshrl.u32 %v153, 7
    %v155 = vsub.s32 %v152, %v154
    %v156 = vrot.slane %v149, %v155
    %v158 = vmul.f32 %v145, %v156
    %160 = vset.pattern.permute.xlu0 0
    %161 = vperm.xlu0 %160, %v57
    %v162 = vpop.permute.xlu0 %161
    %v164 = vunpack.c.l.s4 269488144
    %v165 = vunpack.c.0.s8 %v164
    %v166 = vlaneseq
    %v167 = vshrl.u32 %v166, 7
    %v168 = vsub.s32 %v165, %v167
    %v169 = vrot.slane %v162, %v168
    %v171 = vadd.f32 %v158, %v169
    %v172 = vmax.f32 %v171, 0.0
    %v173 = vld [vmem:[%s6] sm:$0xff]
    %v174 = vld [vmem:[%s6 + $0x8] sm:$0xff]
    %v175 = vld [vmem:[%s6 + $0x10] sm:$0xff]
    %v176 = vld [vmem:[%s6 + $0x18] sm:$0xff]
    %v178 = vcombine.high %v172, %v172
    %v180 = vunpack.c.l.s4 1983009808
    %v181 = vunpack.c.0.s8 %v180
    %v182 = vlaneseq
    %v183 = vshrl.u32 %v182, 7
    %v184 = vsub.s32 %v181, %v183
    %v185 = vrot.slane %v172, %v184
    %v187 = vunpack.c.l.s4 1983009808
    %v188 = vunpack.c.0.s8 %v187
    %v189 = vlaneseq
    %v190 = vshrl.u32 %v189, 7
    %v191 = vsub.s32 %v188, %v190
    %v192 = vrot.slane %v178, %v191
    %v193 = vcombine.high %v185, %v185
    %v194 = vcombine.high %v192, %v192
    %vm195 = vcmask 15360
    %v197 = vsel %vm195, %v173, 0
    %v200 = vsel %vm195, %v174, 0
    %v203 = vsel %vm195, %v175, 0
    %v206 = vsel %vm195, %v176, 0
    %v208 = vsel %vm80, %v185, 0
    %v210 = vsel %vm80, %v193, 0
    %v212 = vsel %vm80, %v192, 0
    %v214 = vsel %vm80, %v194, 0
    %216 = vmatprep.subr.mxu0 0.0
    %217 = vmatpush1.msra.mxu0 0.0
    %218 = vmatprep.subr.mxu0 0.0
    %219 = vmatpush1.msra.mxu0 0.0
    %220 = vmatprep.subr.mxu0 0.0
    %221 = vmatpush1.msra.mxu0 0.0
    %222 = vmatprep.subr.mxu0 0.0
    %223 = vmatpush1.msra.mxu0 0.0
    %224 = vmatprep.subr.mxu0 0.0
    %225 = vmatpush1.msra.mxu0 0.0
    %226 = vmatprep.subr.mxu0 0.0
    %227 = vmatpush1.msra.mxu0 0.0
    %228 = vmatprep.subr.mxu0 0.0
    %229 = vmatpush1.msra.mxu0 0.0
    %230 = vmatprep.subr.mxu0 0.0
    %231 = vmatpush1.msra.mxu0 0.0
    %232 = vmatprep.subr.mxu0 0.0
    %233 = vmatpush1.msra.mxu0 0.0
    %234 = vmatprep.subr.mxu0 0.0
    %235 = vmatpush1.msra.mxu0 0.0
    %236 = vmatprep.subr.mxu0 0.0
    %237 = vmatpush1.msra.mxu0 0.0
    %238 = vmatprep.subr.mxu0 0.0
    %239 = vmatpush1.msra.mxu0 0.0
    %240 = vmatprep.subr.mxu0 0.0
    %241 = vmatpush1.msra.mxu0 0.0
    %242 = vmatprep.subr.mxu0 0.0
    %243 = vmatpush1.msra.mxu0 0.0
    %244 = vmatprep.subr.mxu0 0.0
    %245 = vmatpush1.msra.mxu0 0.0
    %246 = vmatprep.subr.mxu0 %v210
    %247 = vmatpush1.msra.mxu0 %v208
    %248 = vmatprep.subr.mxu0 0.0
    %249 = vmatpush2.msra.mxu0 0.0
    %250 = vmatprep.subr.mxu0 0.0
    %251 = vmatpush2.msra.mxu0 0.0
    %252 = vmatprep.subr.mxu0 0.0
    %253 = vmatpush2.msra.mxu0 0.0
    %254 = vmatprep.subr.mxu0 0.0
    %255 = vmatpush2.msra.mxu0 0.0
    %256 = vmatprep.subr.mxu0 0.0
    %257 = vmatpush2.msra.mxu0 0.0
    %258 = vmatprep.subr.mxu0 0.0
    %259 = vmatpush2.msra.mxu0 0.0
    %260 = vmatprep.subr.mxu0 0.0
    %261 = vmatpush2.msra.mxu0 0.0
    %262 = vmatprep.subr.mxu0 0.0
    %263 = vmatpush2.msra.mxu0 0.0
    %264 = vmatprep.subr.mxu0 0.0
    %265 = vmatpush2.msra.mxu0 0.0
    %266 = vmatprep.subr.mxu0 0.0
    %267 = vmatpush2.msra.mxu0 0.0
    %268 = vmatprep.subr.mxu0 0.0
    %269 = vmatpush2.msra.mxu0 0.0
    %270 = vmatprep.subr.mxu0 0.0
    %271 = vmatpush2.msra.mxu0 0.0
    %272 = vmatprep.subr.mxu0 0.0
    %273 = vmatpush2.msra.mxu0 0.0
    %274 = vmatprep.subr.mxu0 0.0
    %275 = vmatpush2.msra.mxu0 0.0
    %276 = vmatprep.subr.mxu0 0.0
    %277 = vmatpush2.msra.mxu0 0.0
    %278 = vmatprep.subr.mxu0 0.0
    %279 = vmatpush2.msra.mxu0 0.0
    %280 = vmatprep.mubr.f32.mxu0 0.0
    %281 = vmatmul.mubr.f32.gmra.mxu0 %v197
    %v282 = vpop.f32.mrf.mxu0
    %v283 = vadd.f32 0.0, %v282
    %v284 = vpop.f32.mrf.mxu0
    %v285 = vadd.f32 0.0, %v284
    %286 = vmatprep.mubr.f32.mxu0 0.0
    %287 = vmatmul.mubr.f32.gmra.mxu0 %v200
    %v288 = vpop.f32.mrf.mxu0
    %v289 = vadd.f32 0.0, %v288
    %v290 = vpop.f32.mrf.mxu0
    %v291 = vadd.f32 0.0, %v290
    %292 = vmatprep.mubr.f32.mxu0 0.0
    %293 = vmatmul.mubr.f32.gmra.mxu0 %v203
    %v294 = vpop.f32.mrf.mxu0
    %v295 = vadd.f32 0.0, %v294
    %v296 = vpop.f32.mrf.mxu0
    %v297 = vadd.f32 0.0, %v296
    %298 = vmatprep.mubr.f32.mxu0 0.0
    %299 = vmatmul.mubr.f32.gmra.mxu0 %v206
    %v300 = vpop.f32.mrf.mxu0
    %v301 = vadd.f32 0.0, %v300
    %v302 = vpop.f32.mrf.mxu0
    %v303 = vadd.f32 0.0, %v302
    %304 = vdwg.mxu0
    %305 = vmatprep.subr.mxu0 0.0
    %306 = vmatpush1.msra.mxu0 0.0
    %307 = vmatprep.subr.mxu0 0.0
    %308 = vmatpush1.msra.mxu0 0.0
    %309 = vmatprep.subr.mxu0 0.0
    %310 = vmatpush1.msra.mxu0 0.0
    %311 = vmatprep.subr.mxu0 0.0
    %312 = vmatpush1.msra.mxu0 0.0
    %313 = vmatprep.subr.mxu0 0.0
    %314 = vmatpush1.msra.mxu0 0.0
    %315 = vmatprep.subr.mxu0 0.0
    %316 = vmatpush1.msra.mxu0 0.0
    %317 = vmatprep.subr.mxu0 0.0
    %318 = vmatpush1.msra.mxu0 0.0
    %319 = vmatprep.subr.mxu0 0.0
    %320 = vmatpush1.msra.mxu0 0.0
    %321 = vmatprep.subr.mxu0 0.0
    %322 = vmatpush1.msra.mxu0 0.0
    %323 = vmatprep.subr.mxu0 0.0
    %324 = vmatpush1.msra.mxu0 0.0
    %325 = vmatprep.subr.mxu0 0.0
    %326 = vmatpush1.msra.mxu0 0.0
    %327 = vmatprep.subr.mxu0 0.0
    %328 = vmatpush1.msra.mxu0 0.0
    %329 = vmatprep.subr.mxu0 0.0
    %330 = vmatpush1.msra.mxu0 0.0
    %331 = vmatprep.subr.mxu0 0.0
    %332 = vmatpush1.msra.mxu0 0.0
    %333 = vmatprep.subr.mxu0 0.0
    %334 = vmatpush1.msra.mxu0 0.0
    %335 = vmatprep.subr.mxu0 %v214
    %336 = vmatpush1.msra.mxu0 %v212
    %337 = vmatprep.subr.mxu0 0.0
    %338 = vmatpush2.msra.mxu0 0.0
    %339 = vmatprep.subr.mxu0 0.0
    %340 = vmatpush2.msra.mxu0 0.0
    %341 = vmatprep.subr.mxu0 0.0
    %342 = vmatpush2.msra.mxu0 0.0
    %343 = vmatprep.subr.mxu0 0.0
    %344 = vmatpush2.msra.mxu0 0.0
    %345 = vmatprep.subr.mxu0 0.0
    %346 = vmatpush2.msra.mxu0 0.0
    %347 = vmatprep.subr.mxu0 0.0
    %348 = vmatpush2.msra.mxu0 0.0
    %349 = vmatprep.subr.mxu0 0.0
    %350 = vmatpush2.msra.mxu0 0.0
    %351 = vmatprep.subr.mxu0 0.0
    %352 = vmatpush2.msra.mxu0 0.0
    %353 = vmatprep.subr.mxu0 0.0
    %354 = vmatpush2.msra.mxu0 0.0
    %355 = vmatprep.subr.mxu0 0.0
    %356 = vmatpush2.msra.mxu0 0.0
    %357 = vmatprep.subr.mxu0 0.0
    %358 = vmatpush2.msra.mxu0 0.0
    %359 = vmatprep.subr.mxu0 0.0
    %360 = vmatpush2.msra.mxu0 0.0
    %361 = vmatprep.subr.mxu0 0.0
    %362 = vmatpush2.msra.mxu0 0.0
    %363 = vmatprep.subr.mxu0 0.0
    %364 = vmatpush2.msra.mxu0 0.0
    %365 = vmatprep.subr.mxu0 0.0
    %366 = vmatpush2.msra.mxu0 0.0
    %367 = vmatprep.subr.mxu0 0.0
    %368 = vmatpush2.msra.mxu0 0.0
    %369 = vmatprep.mubr.f32.mxu0 0.0
    %370 = vmatmul.mubr.f32.gmra.mxu0 %v197
    %v371 = vpop.f32.mrf.mxu0
    %v372 = vadd.f32 0.0, %v371
    %v373 = vpop.f32.mrf.mxu0
    %v374 = vadd.f32 0.0, %v373
    %375 = vmatprep.mubr.f32.mxu0 0.0
    %376 = vmatmul.mubr.f32.gmra.mxu0 %v200
    %v377 = vpop.f32.mrf.mxu0
    %v378 = vadd.f32 0.0, %v377
    %v379 = vpop.f32.mrf.mxu0
    %v380 = vadd.f32 0.0, %v379
    %381 = vmatprep.mubr.f32.mxu0 0.0
    %382 = vmatmul.mubr.f32.gmra.mxu0 %v203
    %v383 = vpop.f32.mrf.mxu0
    %v384 = vadd.f32 0.0, %v383
    %v385 = vpop.f32.mrf.mxu0
    %v386 = vadd.f32 0.0, %v385
    %387 = vmatprep.mubr.f32.mxu0 0.0
    %388 = vmatmul.mubr.f32.gmra.mxu0 %v206
    %v389 = vpop.f32.mrf.mxu0
    %v390 = vadd.f32 0.0, %v389
    %v391 = vpop.f32.mrf.mxu0
    %v392 = vadd.f32 0.0, %v391
    %393 = vdwg.mxu0
    %394 = vrot.lane.b32.xlu0 %v283, 17
    %v395 = vpop.permute.xlu0 %394
    %396 = vrot.lane.b32.xlu0 %v289, 17
    %v397 = vpop.permute.xlu0 %396
    %398 = vrot.lane.b32.xlu0 %v295, 17
    %v399 = vpop.permute.xlu0 %398
    %400 = vrot.lane.b32.xlu0 %v301, 17
    %v401 = vpop.permute.xlu0 %400
    %402 = vrot.lane.b32.xlu0 %v285, 17
    %v403 = vpop.permute.xlu0 %402
    %404 = vrot.lane.b32.xlu0 %v291, 17
    %v405 = vpop.permute.xlu0 %404
    %406 = vrot.lane.b32.xlu0 %v297, 17
    %v407 = vpop.permute.xlu0 %406
    %408 = vrot.lane.b32.xlu0 %v303, 17
    %v409 = vpop.permute.xlu0 %408
    %410 = vrot.lane.b32.xlu0 %v372, 17
    %v411 = vpop.permute.xlu0 %410
    %412 = vrot.lane.b32.xlu0 %v378, 17
    %v413 = vpop.permute.xlu0 %412
    %414 = vrot.lane.b32.xlu0 %v384, 17
    %v415 = vpop.permute.xlu0 %414
    %416 = vrot.lane.b32.xlu0 %v390, 17
    %v417 = vpop.permute.xlu0 %416
    %418 = vrot.lane.b32.xlu0 %v374, 17
    %v419 = vpop.permute.xlu0 %418
    %420 = vrot.lane.b32.xlu0 %v380, 17
    %v421 = vpop.permute.xlu0 %420
    %422 = vrot.lane.b32.xlu0 %v386, 17
    %v423 = vpop.permute.xlu0 %422
    %424 = vrot.lane.b32.xlu0 %v392, 17
    %v425 = vpop.permute.xlu0 %424
    %v426 = vlaneseq
    %v427 = vand.u32 %v426, 127
    %vm428 = vcmp.lt.s32.totalorder %v427, 17
    %v429 = vsel %vm428, %v411, %v419
    %v430 = vsel %vm428, %v413, %v421
    %v431 = vsel %vm428, %v415, %v423
    %v432 = vsel %vm428, %v417, %v425
    %v433 = vsel %vm428, %v403, %v411
    %v434 = vsel %vm428, %v405, %v413
    %v435 = vsel %vm428, %v407, %v415
    %v436 = vsel %vm428, %v409, %v417
    %v437 = vsel %vm428, %v395, %v403
    %v438 = vsel %vm428, %v397, %v405
    %v439 = vsel %vm428, %v399, %v407
    %v440 = vsel %vm428, %v401, %v409
    %v441 = vsel %vm428, %v419, %v395
    %v442 = vsel %vm428, %v421, %v397
    %v443 = vsel %vm428, %v423, %v399
    %v444 = vsel %vm428, %v425, %v401
    %v447 = vrot.slane %v53, 6
    %v448 = vrot.slane %v447, 4
    %v449 = vrot.slane %v54, 6
    %v450 = vrot.slane %v449, 4
    %v453 = vmul.f32 %v53, %v448
    %v454 = vmul.f32 %v54, %v450
    %v457 = vlaneseq
    %v458 = vshrl.u32 %v457, 7
    %v459 = vsub.s32 0, %v458
    %v460 = vrot.slane %v453, %v459
    %v461 = vlaneseq
    %v462 = vshrl.u32 %v461, 7
    %v463 = vsub.s32 4, %v462
    %v464 = vrot.slane %v453, %v463
    %v465 = vlaneseq
    %v466 = vshrl.u32 %v465, 7
    %v467 = vsub.s32 0, %v466
    %v468 = vrot.slane %v454, %v467
    %v469 = vlaneseq
    %v470 = vshrl.u32 %v469, 7
    %v471 = vsub.s32 4, %v470
    %v472 = vrot.slane %v454, %v471
    %v477 = vlaneseq
    %v478 = vshrl.u32 %v477, 7
    %v479 = vsub.s32 0, %v478
    %v480 = vrot.slane %v460, %v479
    %v481 = vlaneseq
    %v482 = vshrl.u32 %v481, 7
    %v483 = vsub.s32 0, %v482
    %v484 = vrot.slane %v464, %v483
    %v485 = vlaneseq
    %v486 = vshrl.u32 %v485, 7
    %v487 = vsub.s32 0, %v486
    %v488 = vrot.slane %v468, %v487
    %v489 = vlaneseq
    %v490 = vshrl.u32 %v489, 7
    %v491 = vsub.s32 0, %v490
    %v492 = vrot.slane %v472, %v491
    %v493 = vmul.f32 %v441, %v480
    %v494 = vmul.f32 %v437, %v484
    %v495 = vmul.f32 %v433, %v488
    %v496 = vmul.f32 %v429, %v492
    %v497 = vmul.f32 %v442, %v480
    %v498 = vmul.f32 %v438, %v484
    %v499 = vmul.f32 %v434, %v488
    %v500 = vmul.f32 %v430, %v492
    %v501 = vmul.f32 %v443, %v480
    %v502 = vmul.f32 %v439, %v484
    %v503 = vmul.f32 %v435, %v488
    %v504 = vmul.f32 %v431, %v492
    %v505 = vmul.f32 %v444, %v480
    %v506 = vmul.f32 %v440, %v484
    %v507 = vmul.f32 %v436, %v488
    %v508 = vmul.f32 %v432, %v492
    %s509 = scalar_lea.vmem %s6, 32
    %v510 = vld [vmem:[%s509] sm:$0xff]
    %v511 = vld [vmem:[%s509 + $0x8] sm:$0xff]
    %v512 = vld [vmem:[%s509 + $0x10] sm:$0xff]
    %v513 = vld [vmem:[%s509 + $0x18] sm:$0xff]
    %v515 = vsel %vm195, %v510, 0
    %v518 = vsel %vm195, %v511, 0
    %v521 = vsel %vm195, %v512, 0
    %v524 = vsel %vm195, %v513, 0
    %526 = vmatprep.subr.mxu0 0.0
    %527 = vmatpush1.msra.mxu0 0.0
    %528 = vmatprep.subr.mxu0 0.0
    %529 = vmatpush1.msra.mxu0 0.0
    %530 = vmatprep.subr.mxu0 0.0
    %531 = vmatpush1.msra.mxu0 0.0
    %532 = vmatprep.subr.mxu0 0.0
    %533 = vmatpush1.msra.mxu0 0.0
    %534 = vmatprep.subr.mxu0 0.0
    %535 = vmatpush1.msra.mxu0 0.0
    %536 = vmatprep.subr.mxu0 0.0
    %537 = vmatpush1.msra.mxu0 0.0
    %538 = vmatprep.subr.mxu0 0.0
    %539 = vmatpush1.msra.mxu0 0.0
    %540 = vmatprep.subr.mxu0 0.0
    %541 = vmatpush1.msra.mxu0 0.0
    %542 = vmatprep.subr.mxu0 0.0
    %543 = vmatpush1.msra.mxu0 0.0
    %544 = vmatprep.subr.mxu0 0.0
    %545 = vmatpush1.msra.mxu0 0.0
    %546 = vmatprep.subr.mxu0 0.0
    %547 = vmatpush1.msra.mxu0 0.0
    %548 = vmatprep.subr.mxu0 0.0
    %549 = vmatpush1.msra.mxu0 0.0
    %550 = vmatprep.subr.mxu0 0.0
    %551 = vmatpush1.msra.mxu0 0.0
    %552 = vmatprep.subr.mxu0 0.0
    %553 = vmatpush1.msra.mxu0 0.0
    %554 = vmatprep.subr.mxu0 0.0
    %555 = vmatpush1.msra.mxu0 0.0
    %556 = vmatprep.subr.mxu0 %v210
    %557 = vmatpush1.msra.mxu0 %v208
    %558 = vmatprep.subr.mxu0 0.0
    %559 = vmatpush2.msra.mxu0 0.0
    %560 = vmatprep.subr.mxu0 0.0
    %561 = vmatpush2.msra.mxu0 0.0
    %562 = vmatprep.subr.mxu0 0.0
    %563 = vmatpush2.msra.mxu0 0.0
    %564 = vmatprep.subr.mxu0 0.0
    %565 = vmatpush2.msra.mxu0 0.0
    %566 = vmatprep.subr.mxu0 0.0
    %567 = vmatpush2.msra.mxu0 0.0
    %568 = vmatprep.subr.mxu0 0.0
    %569 = vmatpush2.msra.mxu0 0.0
    %570 = vmatprep.subr.mxu0 0.0
    %571 = vmatpush2.msra.mxu0 0.0
    %572 = vmatprep.subr.mxu0 0.0
    %573 = vmatpush2.msra.mxu0 0.0
    %574 = vmatprep.subr.mxu0 0.0
    %575 = vmatpush2.msra.mxu0 0.0
    %576 = vmatprep.subr.mxu0 0.0
    %577 = vmatpush2.msra.mxu0 0.0
    %578 = vmatprep.subr.mxu0 0.0
    %579 = vmatpush2.msra.mxu0 0.0
    %580 = vmatprep.subr.mxu0 0.0
    %581 = vmatpush2.msra.mxu0 0.0
    %582 = vmatprep.subr.mxu0 0.0
    %583 = vmatpush2.msra.mxu0 0.0
    %584 = vmatprep.subr.mxu0 0.0
    %585 = vmatpush2.msra.mxu0 0.0
    %586 = vmatprep.subr.mxu0 0.0
    %587 = vmatpush2.msra.mxu0 0.0
    %588 = vmatprep.subr.mxu0 0.0
    %589 = vmatpush2.msra.mxu0 0.0
    %590 = vmatprep.mubr.f32.mxu0 0.0
    %591 = vmatmul.mubr.f32.gmra.mxu0 %v515
    %v592 = vpop.f32.mrf.mxu0
    %v593 = vadd.f32 0.0, %v592
    %v594 = vpop.f32.mrf.mxu0
    %v595 = vadd.f32 0.0, %v594
    %596 = vmatprep.mubr.f32.mxu0 0.0
    %597 = vmatmul.mubr.f32.gmra.mxu0 %v518
    %v598 = vpop.f32.mrf.mxu0
    %v599 = vadd.f32 0.0, %v598
    %v600 = vpop.f32.mrf.mxu0
    %v601 = vadd.f32 0.0, %v600
    %602 = vmatprep.mubr.f32.mxu0 0.0
    %603 = vmatmul.mubr.f32.gmra.mxu0 %v521
    %v604 = vpop.f32.mrf.mxu0
    %v605 = vadd.f32 0.0, %v604
    %v606 = vpop.f32.mrf.mxu0
    %v607 = vadd.f32 0.0, %v606
    %608 = vmatprep.mubr.f32.mxu0 0.0
    %609 = vmatmul.mubr.f32.gmra.mxu0 %v524
    %v610 = vpop.f32.mrf.mxu0
    %v611 = vadd.f32 0.0, %v610
    %v612 = vpop.f32.mrf.mxu0
    %v613 = vadd.f32 0.0, %v612
    %614 = vdwg.mxu0
    %615 = vmatprep.subr.mxu0 0.0
    %616 = vmatpush1.msra.mxu0 0.0
    %617 = vmatprep.subr.mxu0 0.0
    %618 = vmatpush1.msra.mxu0 0.0
    %619 = vmatprep.subr.mxu0 0.0
    %620 = vmatpush1.msra.mxu0 0.0
    %621 = vmatprep.subr.mxu0 0.0
    %622 = vmatpush1.msra.mxu0 0.0
    %623 = vmatprep.subr.mxu0 0.0
    %624 = vmatpush1.msra.mxu0 0.0
    %625 = vmatprep.subr.mxu0 0.0
    %626 = vmatpush1.msra.mxu0 0.0
    %627 = vmatprep.subr.mxu0 0.0
    %628 = vmatpush1.msra.mxu0 0.0
    %629 = vmatprep.subr.mxu0 0.0
    %630 = vmatpush1.msra.mxu0 0.0
    %631 = vmatprep.subr.mxu0 0.0
    %632 = vmatpush1.msra.mxu0 0.0
    %633 = vmatprep.subr.mxu0 0.0
    %634 = vmatpush1.msra.mxu0 0.0
    %635 = vmatprep.subr.mxu0 0.0
    %636 = vmatpush1.msra.mxu0 0.0
    %637 = vmatprep.subr.mxu0 0.0
    %638 = vmatpush1.msra.mxu0 0.0
    %639 = vmatprep.subr.mxu0 0.0
    %640 = vmatpush1.msra.mxu0 0.0
    %641 = vmatprep.subr.mxu0 0.0
    %642 = vmatpush1.msra.mxu0 0.0
    %643 = vmatprep.subr.mxu0 0.0
    %644 = vmatpush1.msra.mxu0 0.0
    %645 = vmatprep.subr.mxu0 %v214
    %646 = vmatpush1.msra.mxu0 %v212
    %647 = vmatprep.subr.mxu0 0.0
    %648 = vmatpush2.msra.mxu0 0.0
    %649 = vmatprep.subr.mxu0 0.0
    %650 = vmatpush2.msra.mxu0 0.0
    %651 = vmatprep.subr.mxu0 0.0
    %652 = vmatpush2.msra.mxu0 0.0
    %653 = vmatprep.subr.mxu0 0.0
    %654 = vmatpush2.msra.mxu0 0.0
    %655 = vmatprep.subr.mxu0 0.0
    %656 = vmatpush2.msra.mxu0 0.0
    %657 = vmatprep.subr.mxu0 0.0
    %658 = vmatpush2.msra.mxu0 0.0
    %659 = vmatprep.subr.mxu0 0.0
    %660 = vmatpush2.msra.mxu0 0.0
    %661 = vmatprep.subr.mxu0 0.0
    %662 = vmatpush2.msra.mxu0 0.0
    %663 = vmatprep.subr.mxu0 0.0
    %664 = vmatpush2.msra.mxu0 0.0
    %665 = vmatprep.subr.mxu0 0.0
    %666 = vmatpush2.msra.mxu0 0.0
    %667 = vmatprep.subr.mxu0 0.0
    %668 = vmatpush2.msra.mxu0 0.0
    %669 = vmatprep.subr.mxu0 0.0
    %670 = vmatpush2.msra.mxu0 0.0
    %671 = vmatprep.subr.mxu0 0.0
    %672 = vmatpush2.msra.mxu0 0.0
    %673 = vmatprep.subr.mxu0 0.0
    %674 = vmatpush2.msra.mxu0 0.0
    %675 = vmatprep.subr.mxu0 0.0
    %676 = vmatpush2.msra.mxu0 0.0
    %677 = vmatprep.subr.mxu0 0.0
    %678 = vmatpush2.msra.mxu0 0.0
    %679 = vmatprep.mubr.f32.mxu0 0.0
    %680 = vmatmul.mubr.f32.gmra.mxu0 %v515
    %v681 = vpop.f32.mrf.mxu0
    %v682 = vadd.f32 0.0, %v681
    %v683 = vpop.f32.mrf.mxu0
    %v684 = vadd.f32 0.0, %v683
    %685 = vmatprep.mubr.f32.mxu0 0.0
    %686 = vmatmul.mubr.f32.gmra.mxu0 %v518
    %v687 = vpop.f32.mrf.mxu0
    %v688 = vadd.f32 0.0, %v687
    %v689 = vpop.f32.mrf.mxu0
    %v690 = vadd.f32 0.0, %v689
    %691 = vmatprep.mubr.f32.mxu0 0.0
    %692 = vmatmul.mubr.f32.gmra.mxu0 %v521
    %v693 = vpop.f32.mrf.mxu0
    %v694 = vadd.f32 0.0, %v693
    %v695 = vpop.f32.mrf.mxu0
    %v696 = vadd.f32 0.0, %v695
    %697 = vmatprep.mubr.f32.mxu0 0.0
    %698 = vmatmul.mubr.f32.gmra.mxu0 %v524
    %v699 = vpop.f32.mrf.mxu0
    %v700 = vadd.f32 0.0, %v699
    %v701 = vpop.f32.mrf.mxu0
    %v702 = vadd.f32 0.0, %v701
    %703 = vdwg.mxu0
    %704 = vrot.lane.b32.xlu0 %v593, 16
    %v705 = vpop.permute.xlu0 %704
    %706 = vrot.lane.b32.xlu0 %v599, 16
    %v707 = vpop.permute.xlu0 %706
    %708 = vrot.lane.b32.xlu0 %v605, 16
    %v709 = vpop.permute.xlu0 %708
    %710 = vrot.lane.b32.xlu0 %v611, 16
    %v711 = vpop.permute.xlu0 %710
    %712 = vrot.lane.b32.xlu0 %v595, 16
    %v713 = vpop.permute.xlu0 %712
    %714 = vrot.lane.b32.xlu0 %v601, 16
    %v715 = vpop.permute.xlu0 %714
    %716 = vrot.lane.b32.xlu0 %v607, 16
    %v717 = vpop.permute.xlu0 %716
    %718 = vrot.lane.b32.xlu0 %v613, 16
    %v719 = vpop.permute.xlu0 %718
    %720 = vrot.lane.b32.xlu0 %v682, 16
    %v721 = vpop.permute.xlu0 %720
    %722 = vrot.lane.b32.xlu0 %v688, 16
    %v723 = vpop.permute.xlu0 %722
    %724 = vrot.lane.b32.xlu0 %v694, 16
    %v725 = vpop.permute.xlu0 %724
    %726 = vrot.lane.b32.xlu0 %v700, 16
    %v727 = vpop.permute.xlu0 %726
    %728 = vrot.lane.b32.xlu0 %v684, 16
    %v729 = vpop.permute.xlu0 %728
    %730 = vrot.lane.b32.xlu0 %v690, 16
    %v731 = vpop.permute.xlu0 %730
    %732 = vrot.lane.b32.xlu0 %v696, 16
    %v733 = vpop.permute.xlu0 %732
    %734 = vrot.lane.b32.xlu0 %v702, 16
    %v735 = vpop.permute.xlu0 %734
    %vm736 = vcmp.lt.s32.totalorder %v427, 16
    %v737 = vsel %vm736, %v721, %v729
    %v738 = vsel %vm736, %v723, %v731
    %v739 = vsel %vm736, %v725, %v733
    %v740 = vsel %vm736, %v727, %v735
    %v741 = vsel %vm736, %v713, %v721
    %v742 = vsel %vm736, %v715, %v723
    %v743 = vsel %vm736, %v717, %v725
    %v744 = vsel %vm736, %v719, %v727
    %v745 = vsel %vm736, %v705, %v713
    %v746 = vsel %vm736, %v707, %v715
    %v747 = vsel %vm736, %v709, %v717
    %v748 = vsel %vm736, %v711, %v719
    %v749 = vsel %vm736, %v729, %v705
    %v750 = vsel %vm736, %v731, %v707
    %v751 = vsel %vm736, %v733, %v709
    %v752 = vsel %vm736, %v735, %v711
    %v753 = vlaneseq
    %v754 = vshrl.u32 %v753, 7
    %v755 = vsub.s32 0, %v754
    %v756 = vrot.slane %v53, %v755
    %v757 = vlaneseq
    %v758 = vshrl.u32 %v757, 7
    %v759 = vsub.s32 4, %v758
    %v760 = vrot.slane %v53, %v759
    %v761 = vlaneseq
    %v762 = vshrl.u32 %v761, 7
    %v763 = vsub.s32 0, %v762
    %v764 = vrot.slane %v54, %v763
    %v765 = vlaneseq
    %v766 = vshrl.u32 %v765, 7
    %v767 = vsub.s32 4, %v766
    %v768 = vrot.slane %v54, %v767
    %v773 = vlaneseq
    %v774 = vshrl.u32 %v773, 7
    %v775 = vsub.s32 0, %v774
    %v776 = vrot.slane %v756, %v775
    %v777 = vlaneseq
    %v778 = vshrl.u32 %v777, 7
    %v779 = vsub.s32 0, %v778
    %v780 = vrot.slane %v760, %v779
    %v781 = vlaneseq
    %v782 = vshrl.u32 %v781, 7
    %v783 = vsub.s32 0, %v782
    %v784 = vrot.slane %v764, %v783
    %v785 = vlaneseq
    %v786 = vshrl.u32 %v785, 7
    %v787 = vsub.s32 0, %v786
    %v788 = vrot.slane %v768, %v787
    %v789 = vmul.f32 %v749, %v776
    %v790 = vmul.f32 %v745, %v780
    %v791 = vmul.f32 %v741, %v784
    %v792 = vmul.f32 %v737, %v788
    %v793 = vmul.f32 %v750, %v776
    %v794 = vmul.f32 %v746, %v780
    %v795 = vmul.f32 %v742, %v784
    %v796 = vmul.f32 %v738, %v788
    %v797 = vmul.f32 %v751, %v776
    %v798 = vmul.f32 %v747, %v780
    %v799 = vmul.f32 %v743, %v784
    %v800 = vmul.f32 %v739, %v788
    %v801 = vmul.f32 %v752, %v776
    %v802 = vmul.f32 %v748, %v780
    %v803 = vmul.f32 %v744, %v784
    %v804 = vmul.f32 %v740, %v788
    %v805 = vadd.f32 %v493, %v789
    %v806 = vadd.f32 %v494, %v790
    %v807 = vadd.f32 %v495, %v791
    %v808 = vadd.f32 %v496, %v792
    %v809 = vadd.f32 %v497, %v793
    %v810 = vadd.f32 %v498, %v794
    %v811 = vadd.f32 %v499, %v795
    %v812 = vadd.f32 %v500, %v796
    %v813 = vadd.f32 %v501, %v797
    %v814 = vadd.f32 %v502, %v798
    %v815 = vadd.f32 %v503, %v799
    %v816 = vadd.f32 %v504, %v800
    %v817 = vadd.f32 %v505, %v801
    %v818 = vadd.f32 %v506, %v802
    %v819 = vadd.f32 %v507, %v803
    %v820 = vadd.f32 %v508, %v804
    %s821 = scalar_lea.vmem %s6, 64
    %v822 = vld [vmem:[%s821] sm:$0xff]
    %v823 = vld [vmem:[%s821 + $0x8] sm:$0xff]
    %v824 = vld [vmem:[%s821 + $0x10] sm:$0xff]
    %v825 = vld [vmem:[%s821 + $0x18] sm:$0xff]
    %v827 = vsel %vm195, %v822, 0
    %v830 = vsel %vm195, %v823, 0
    %v833 = vsel %vm195, %v824, 0
    %v836 = vsel %vm195, %v825, 0
    %838 = vmatprep.subr.mxu0 0.0
    %839 = vmatpush1.msra.mxu0 0.0
    %840 = vmatprep.subr.mxu0 0.0
    %841 = vmatpush1.msra.mxu0 0.0
    %842 = vmatprep.subr.mxu0 0.0
    %843 = vmatpush1.msra.mxu0 0.0
    %844 = vmatprep.subr.mxu0 0.0
    %845 = vmatpush1.msra.mxu0 0.0
    %846 = vmatprep.subr.mxu0 0.0
    %847 = vmatpush1.msra.mxu0 0.0
    %848 = vmatprep.subr.mxu0 0.0
    %849 = vmatpush1.msra.mxu0 0.0
    %850 = vmatprep.subr.mxu0 0.0
    %851 = vmatpush1.msra.mxu0 0.0
    %852 = vmatprep.subr.mxu0 0.0
    %853 = vmatpush1.msra.mxu0 0.0
    %854 = vmatprep.subr.mxu0 0.0
    %855 = vmatpush1.msra.mxu0 0.0
    %856 = vmatprep.subr.mxu0 0.0
    %857 = vmatpush1.msra.mxu0 0.0
    %858 = vmatprep.subr.mxu0 0.0
    %859 = vmatpush1.msra.mxu0 0.0
    %860 = vmatprep.subr.mxu0 0.0
    %861 = vmatpush1.msra.mxu0 0.0
    %862 = vmatprep.subr.mxu0 0.0
    %863 = vmatpush1.msra.mxu0 0.0
    %864 = vmatprep.subr.mxu0 0.0
    %865 = vmatpush1.msra.mxu0 0.0
    %866 = vmatprep.subr.mxu0 0.0
    %867 = vmatpush1.msra.mxu0 0.0
    %868 = vmatprep.subr.mxu0 %v210
    %869 = vmatpush1.msra.mxu0 %v208
    %870 = vmatprep.subr.mxu0 0.0
    %871 = vmatpush2.msra.mxu0 0.0
    %872 = vmatprep.subr.mxu0 0.0
    %873 = vmatpush2.msra.mxu0 0.0
    %874 = vmatprep.subr.mxu0 0.0
    %875 = vmatpush2.msra.mxu0 0.0
    %876 = vmatprep.subr.mxu0 0.0
    %877 = vmatpush2.msra.mxu0 0.0
    %878 = vmatprep.subr.mxu0 0.0
    %879 = vmatpush2.msra.mxu0 0.0
    %880 = vmatprep.subr.mxu0 0.0
    %881 = vmatpush2.msra.mxu0 0.0
    %882 = vmatprep.subr.mxu0 0.0
    %883 = vmatpush2.msra.mxu0 0.0
    %884 = vmatprep.subr.mxu0 0.0
    %885 = vmatpush2.msra.mxu0 0.0
    %886 = vmatprep.subr.mxu0 0.0
    %887 = vmatpush2.msra.mxu0 0.0
    %888 = vmatprep.subr.mxu0 0.0
    %889 = vmatpush2.msra.mxu0 0.0
    %890 = vmatprep.subr.mxu0 0.0
    %891 = vmatpush2.msra.mxu0 0.0
    %892 = vmatprep.subr.mxu0 0.0
    %893 = vmatpush2.msra.mxu0 0.0
    %894 = vmatprep.subr.mxu0 0.0
    %895 = vmatpush2.msra.mxu0 0.0
    %896 = vmatprep.subr.mxu0 0.0
    %897 = vmatpush2.msra.mxu0 0.0
    %898 = vmatprep.subr.mxu0 0.0
    %899 = vmatpush2.msra.mxu0 0.0
    %900 = vmatprep.subr.mxu0 0.0
    %901 = vmatpush2.msra.mxu0 0.0
    %902 = vmatprep.mubr.f32.mxu0 0.0
    %903 = vmatmul.mubr.f32.gmra.mxu0 %v827
    %v904 = vpop.f32.mrf.mxu0
    %v905 = vadd.f32 0.0, %v904
    %v906 = vpop.f32.mrf.mxu0
    %v907 = vadd.f32 0.0, %v906
    %908 = vmatprep.mubr.f32.mxu0 0.0
    %909 = vmatmul.mubr.f32.gmra.mxu0 %v830
    %v910 = vpop.f32.mrf.mxu0
    %v911 = vadd.f32 0.0, %v910
    %v912 = vpop.f32.mrf.mxu0
    %v913 = vadd.f32 0.0, %v912
    %914 = vmatprep.mubr.f32.mxu0 0.0
    %915 = vmatmul.mubr.f32.gmra.mxu0 %v833
    %v916 = vpop.f32.mrf.mxu0
    %v917 = vadd.f32 0.0, %v916
    %v918 = vpop.f32.mrf.mxu0
    %v919 = vadd.f32 0.0, %v918
    %920 = vmatprep.mubr.f32.mxu0 0.0
    %921 = vmatmul.mubr.f32.gmra.mxu0 %v836
    %v922 = vpop.f32.mrf.mxu0
    %v923 = vadd.f32 0.0, %v922
    %v924 = vpop.f32.mrf.mxu0
    %v925 = vadd.f32 0.0, %v924
    %926 = vdwg.mxu0
    %927 = vmatprep.subr.mxu0 0.0
    %928 = vmatpush1.msra.mxu0 0.0
    %929 = vmatprep.subr.mxu0 0.0
    %930 = vmatpush1.msra.mxu0 0.0
    %931 = vmatprep.subr.mxu0 0.0
    %932 = vmatpush1.msra.mxu0 0.0
    %933 = vmatprep.subr.mxu0 0.0
    %934 = vmatpush1.msra.mxu0 0.0
    %935 = vmatprep.subr.mxu0 0.0
    %936 = vmatpush1.msra.mxu0 0.0
    %937 = vmatprep.subr.mxu0 0.0
    %938 = vmatpush1.msra.mxu0 0.0
    %939 = vmatprep.subr.mxu0 0.0
    %940 = vmatpush1.msra.mxu0 0.0
    %941 = vmatprep.subr.mxu0 0.0
    %942 = vmatpush1.msra.mxu0 0.0
    %943 = vmatprep.subr.mxu0 0.0
    %944 = vmatpush1.msra.mxu0 0.0
    %945 = vmatprep.subr.mxu0 0.0
    %946 = vmatpush1.msra.mxu0 0.0
    %947 = vmatprep.subr.mxu0 0.0
    %948 = vmatpush1.msra.mxu0 0.0
    %949 = vmatprep.subr.mxu0 0.0
    %950 = vmatpush1.msra.mxu0 0.0
    %951 = vmatprep.subr.mxu0 0.0
    %952 = vmatpush1.msra.mxu0 0.0
    %953 = vmatprep.subr.mxu0 0.0
    %954 = vmatpush1.msra.mxu0 0.0
    %955 = vmatprep.subr.mxu0 0.0
    %956 = vmatpush1.msra.mxu0 0.0
    %957 = vmatprep.subr.mxu0 %v214
    %958 = vmatpush1.msra.mxu0 %v212
    %959 = vmatprep.subr.mxu0 0.0
    %960 = vmatpush2.msra.mxu0 0.0
    %961 = vmatprep.subr.mxu0 0.0
    %962 = vmatpush2.msra.mxu0 0.0
    %963 = vmatprep.subr.mxu0 0.0
    %964 = vmatpush2.msra.mxu0 0.0
    %965 = vmatprep.subr.mxu0 0.0
    %966 = vmatpush2.msra.mxu0 0.0
    %967 = vmatprep.subr.mxu0 0.0
    %968 = vmatpush2.msra.mxu0 0.0
    %969 = vmatprep.subr.mxu0 0.0
    %970 = vmatpush2.msra.mxu0 0.0
    %971 = vmatprep.subr.mxu0 0.0
    %972 = vmatpush2.msra.mxu0 0.0
    %973 = vmatprep.subr.mxu0 0.0
    %974 = vmatpush2.msra.mxu0 0.0
    %975 = vmatprep.subr.mxu0 0.0
    %976 = vmatpush2.msra.mxu0 0.0
    %977 = vmatprep.subr.mxu0 0.0
    %978 = vmatpush2.msra.mxu0 0.0
    %979 = vmatprep.subr.mxu0 0.0
    %980 = vmatpush2.msra.mxu0 0.0
    %981 = vmatprep.subr.mxu0 0.0
    %982 = vmatpush2.msra.mxu0 0.0
    %983 = vmatprep.subr.mxu0 0.0
    %984 = vmatpush2.msra.mxu0 0.0
    %985 = vmatprep.subr.mxu0 0.0
    %986 = vmatpush2.msra.mxu0 0.0
    %987 = vmatprep.subr.mxu0 0.0
    %988 = vmatpush2.msra.mxu0 0.0
    %989 = vmatprep.subr.mxu0 0.0
    %990 = vmatpush2.msra.mxu0 0.0
    %991 = vmatprep.mubr.f32.mxu0 0.0
    %992 = vmatmul.mubr.f32.gmra.mxu0 %v827
    %v993 = vpop.f32.mrf.mxu0
    %v994 = vadd.f32 0.0, %v993
    %v995 = vpop.f32.mrf.mxu0
    %v996 = vadd.f32 0.0, %v995
    %997 = vmatprep.mubr.f32.mxu0 0.0
    %998 = vmatmul.mubr.f32.gmra.mxu0 %v830
    %v999 = vpop.f32.mrf.mxu0
    %v1000 = vadd.f32 0.0, %v999
    %v1001 = vpop.f32.mrf.mxu0
    %v1002 = vadd.f32 0.0, %v1001
    %1003 = vmatprep.mubr.f32.mxu0 0.0
    %1004 = vmatmul.mubr.f32.gmra.mxu0 %v833
    %v1005 = vpop.f32.mrf.mxu0
    %v1006 = vadd.f32 0.0, %v1005
    %v1007 = vpop.f32.mrf.mxu0
    %v1008 = vadd.f32 0.0, %v1007
    %1009 = vmatprep.mubr.f32.mxu0 0.0
    %1010 = vmatmul.mubr.f32.gmra.mxu0 %v836
    %v1011 = vpop.f32.mrf.mxu0
    %v1012 = vadd.f32 0.0, %v1011
    %v1013 = vpop.f32.mrf.mxu0
    %v1014 = vadd.f32 0.0, %v1013
    %1015 = vdwg.mxu0
    %1016 = vrot.lane.b32.xlu0 %v905, 15
    %v1017 = vpop.permute.xlu0 %1016
    %1018 = vrot.lane.b32.xlu0 %v911, 15
    %v1019 = vpop.permute.xlu0 %1018
    %1020 = vrot.lane.b32.xlu0 %v917, 15
    %v1021 = vpop.permute.xlu0 %1020
    %1022 = vrot.lane.b32.xlu0 %v923, 15
    %v1023 = vpop.permute.xlu0 %1022
    %1024 = vrot.lane.b32.xlu0 %v907, 15
    %v1025 = vpop.permute.xlu0 %1024
    %1026 = vrot.lane.b32.xlu0 %v913, 15
    %v1027 = vpop.permute.xlu0 %1026
    %1028 = vrot.lane.b32.xlu0 %v919, 15
    %v1029 = vpop.permute.xlu0 %1028
    %1030 = vrot.lane.b32.xlu0 %v925, 15
    %v1031 = vpop.permute.xlu0 %1030
    %1032 = vrot.lane.b32.xlu0 %v994, 15
    %v1033 = vpop.permute.xlu0 %1032
    %1034 = vrot.lane.b32.xlu0 %v1000, 15
    %v1035 = vpop.permute.xlu0 %1034
    %1036 = vrot.lane.b32.xlu0 %v1006, 15
    %v1037 = vpop.permute.xlu0 %1036
    %1038 = vrot.lane.b32.xlu0 %v1012, 15
    %v1039 = vpop.permute.xlu0 %1038
    %1040 = vrot.lane.b32.xlu0 %v996, 15
    %v1041 = vpop.permute.xlu0 %1040
    %1042 = vrot.lane.b32.xlu0 %v1002, 15
    %v1043 = vpop.permute.xlu0 %1042
    %1044 = vrot.lane.b32.xlu0 %v1008, 15
    %v1045 = vpop.permute.xlu0 %1044
    %1046 = vrot.lane.b32.xlu0 %v1014, 15
    %v1047 = vpop.permute.xlu0 %1046
    %vm1048 = vcmp.lt.s32.totalorder %v427, 15
    %v1049 = vsel %vm1048, %v1033, %v1041
    %v1050 = vsel %vm1048, %v1035, %v1043
    %v1051 = vsel %vm1048, %v1037, %v1045
    %v1052 = vsel %vm1048, %v1039, %v1047
    %v1053 = vsel %vm1048, %v1025, %v1033
    %v1054 = vsel %vm1048, %v1027, %v1035
    %v1055 = vsel %vm1048, %v1029, %v1037
    %v1056 = vsel %vm1048, %v1031, %v1039
    %v1057 = vsel %vm1048, %v1017, %v1025
    %v1058 = vsel %vm1048, %v1019, %v1027
    %v1059 = vsel %vm1048, %v1021, %v1029
    %v1060 = vsel %vm1048, %v1023, %v1031
    %v1061 = vsel %vm1048, %v1041, %v1017
    %v1062 = vsel %vm1048, %v1043, %v1019
    %v1063 = vsel %vm1048, %v1045, %v1021
    %v1064 = vsel %vm1048, %v1047, %v1023
    %v1065 = vrot.slane %v53, 7
    %v1066 = vrot.slane %v1065, 4
    %v1067 = vrot.slane %v54, 7
    %v1068 = vrot.slane %v1067, 4
    %v1071 = vmul.f32 %v53, %v1066
    %v1072 = vmul.f32 %v54, %v1068
    %v1075 = vlaneseq
    %v1076 = vshrl.u32 %v1075, 7
    %v1077 = vsub.s32 0, %v1076
    %v1078 = vrot.slane %v1071, %v1077
    %v1079 = vlaneseq
    %v1080 = vshrl.u32 %v1079, 7
    %v1081 = vsub.s32 4, %v1080
    %v1082 = vrot.slane %v1071, %v1081
    %v1083 = vlaneseq
    %v1084 = vshrl.u32 %v1083, 7
    %v1085 = vsub.s32 0, %v1084
    %v1086 = vrot.slane %v1072, %v1085
    %v1087 = vlaneseq
    %v1088 = vshrl.u32 %v1087, 7
    %v1089 = vsub.s32 4, %v1088
    %v1090 = vrot.slane %v1072, %v1089
    %v1095 = vlaneseq
    %v1096 = vshrl.u32 %v1095, 7
    %v1097 = vsub.s32 0, %v1096
    %v1098 = vrot.slane %v1078, %v1097
    %v1099 = vlaneseq
    %v1100 = vshrl.u32 %v1099, 7
    %v1101 = vsub.s32 0, %v1100
    %v1102 = vrot.slane %v1082, %v1101
    %v1103 = vlaneseq
    %v1104 = vshrl.u32 %v1103, 7
    %v1105 = vsub.s32 0, %v1104
    %v1106 = vrot.slane %v1086, %v1105
    %v1107 = vlaneseq
    %v1108 = vshrl.u32 %v1107, 7
    %v1109 = vsub.s32 0, %v1108
    %v1110 = vrot.slane %v1090, %v1109
    %v1111 = vmul.f32 %v1061, %v1098
    %v1112 = vmul.f32 %v1057, %v1102
    %v1113 = vmul.f32 %v1053, %v1106
    %v1114 = vmul.f32 %v1049, %v1110
    %v1115 = vmul.f32 %v1062, %v1098
    %v1116 = vmul.f32 %v1058, %v1102
    %v1117 = vmul.f32 %v1054, %v1106
    %v1118 = vmul.f32 %v1050, %v1110
    %v1119 = vmul.f32 %v1063, %v1098
    %v1120 = vmul.f32 %v1059, %v1102
    %v1121 = vmul.f32 %v1055, %v1106
    %v1122 = vmul.f32 %v1051, %v1110
    %v1123 = vmul.f32 %v1064, %v1098
    %v1124 = vmul.f32 %v1060, %v1102
    %v1125 = vmul.f32 %v1056, %v1106
    %v1126 = vmul.f32 %v1052, %v1110
    %v1127 = vadd.f32 %v805, %v1111
    %v1128 = vadd.f32 %v806, %v1112
    %v1129 = vadd.f32 %v807, %v1113
    %v1130 = vadd.f32 %v808, %v1114
    %v1131 = vadd.f32 %v809, %v1115
    %v1132 = vadd.f32 %v810, %v1116
    %v1133 = vadd.f32 %v811, %v1117
    %v1134 = vadd.f32 %v812, %v1118
    %v1135 = vadd.f32 %v813, %v1119
    %v1136 = vadd.f32 %v814, %v1120
    %v1137 = vadd.f32 %v815, %v1121
    %v1138 = vadd.f32 %v816, %v1122
    %v1139 = vadd.f32 %v817, %v1123
    %v1140 = vadd.f32 %v818, %v1124
    %v1141 = vadd.f32 %v819, %v1125
    %v1142 = vadd.f32 %v820, %v1126
    %s1143 = scalar_lea.vmem %s6, 96
    %v1144 = vld [vmem:[%s1143] sm:$0xff]
    %v1145 = vld [vmem:[%s1143 + $0x8] sm:$0xff]
    %v1146 = vld [vmem:[%s1143 + $0x10] sm:$0xff]
    %v1147 = vld [vmem:[%s1143 + $0x18] sm:$0xff]
    %v1149 = vsel %vm195, %v1144, 0
    %v1152 = vsel %vm195, %v1145, 0
    %v1155 = vsel %vm195, %v1146, 0
    %v1158 = vsel %vm195, %v1147, 0
    %1160 = vmatprep.subr.mxu0 0.0
    %1161 = vmatpush1.msra.mxu0 0.0
    %1162 = vmatprep.subr.mxu0 0.0
    %1163 = vmatpush1.msra.mxu0 0.0
    %1164 = vmatprep.subr.mxu0 0.0
    %1165 = vmatpush1.msra.mxu0 0.0
    %1166 = vmatprep.subr.mxu0 0.0
    %1167 = vmatpush1.msra.mxu0 0.0
    %1168 = vmatprep.subr.mxu0 0.0
    %1169 = vmatpush1.msra.mxu0 0.0
    %1170 = vmatprep.subr.mxu0 0.0
    %1171 = vmatpush1.msra.mxu0 0.0
    %1172 = vmatprep.subr.mxu0 0.0
    %1173 = vmatpush1.msra.mxu0 0.0
    %1174 = vmatprep.subr.mxu0 0.0
    %1175 = vmatpush1.msra.mxu0 0.0
    %1176 = vmatprep.subr.mxu0 0.0
    %1177 = vmatpush1.msra.mxu0 0.0
    %1178 = vmatprep.subr.mxu0 0.0
    %1179 = vmatpush1.msra.mxu0 0.0
    %1180 = vmatprep.subr.mxu0 0.0
    %1181 = vmatpush1.msra.mxu0 0.0
    %1182 = vmatprep.subr.mxu0 0.0
    %1183 = vmatpush1.msra.mxu0 0.0
    %1184 = vmatprep.subr.mxu0 0.0
    %1185 = vmatpush1.msra.mxu0 0.0
    %1186 = vmatprep.subr.mxu0 0.0
    %1187 = vmatpush1.msra.mxu0 0.0
    %1188 = vmatprep.subr.mxu0 0.0
    %1189 = vmatpush1.msra.mxu0 0.0
    %1190 = vmatprep.subr.mxu0 %v210
    %1191 = vmatpush1.msra.mxu0 %v208
    %1192 = vmatprep.subr.mxu0 0.0
    %1193 = vmatpush2.msra.mxu0 0.0
    %1194 = vmatprep.subr.mxu0 0.0
    %1195 = vmatpush2.msra.mxu0 0.0
    %1196 = vmatprep.subr.mxu0 0.0
    %1197 = vmatpush2.msra.mxu0 0.0
    %1198 = vmatprep.subr.mxu0 0.0
    %1199 = vmatpush2.msra.mxu0 0.0
    %1200 = vmatprep.subr.mxu0 0.0
    %1201 = vmatpush2.msra.mxu0 0.0
    %1202 = vmatprep.subr.mxu0 0.0
    %1203 = vmatpush2.msra.mxu0 0.0
    %1204 = vmatprep.subr.mxu0 0.0
    %1205 = vmatpush2.msra.mxu0 0.0
    %1206 = vmatprep.subr.mxu0 0.0
    %1207 = vmatpush2.msra.mxu0 0.0
    %1208 = vmatprep.subr.mxu0 0.0
    %1209 = vmatpush2.msra.mxu0 0.0
    %1210 = vmatprep.subr.mxu0 0.0
    %1211 = vmatpush2.msra.mxu0 0.0
    %1212 = vmatprep.subr.mxu0 0.0
    %1213 = vmatpush2.msra.mxu0 0.0
    %1214 = vmatprep.subr.mxu0 0.0
    %1215 = vmatpush2.msra.mxu0 0.0
    %1216 = vmatprep.subr.mxu0 0.0
    %1217 = vmatpush2.msra.mxu0 0.0
    %1218 = vmatprep.subr.mxu0 0.0
    %1219 = vmatpush2.msra.mxu0 0.0
    %1220 = vmatprep.subr.mxu0 0.0
    %1221 = vmatpush2.msra.mxu0 0.0
    %1222 = vmatprep.subr.mxu0 0.0
    %1223 = vmatpush2.msra.mxu0 0.0
    %1224 = vmatprep.mubr.f32.mxu0 0.0
    %1225 = vmatmul.mubr.f32.gmra.mxu0 %v1149
    %v1226 = vpop.f32.mrf.mxu0
    %v1227 = vadd.f32 0.0, %v1226
    %v1228 = vpop.f32.mrf.mxu0
    %v1229 = vadd.f32 0.0, %v1228
    %1230 = vmatprep.mubr.f32.mxu0 0.0
    %1231 = vmatmul.mubr.f32.gmra.mxu0 %v1152
    %v1232 = vpop.f32.mrf.mxu0
    %v1233 = vadd.f32 0.0, %v1232
    %v1234 = vpop.f32.mrf.mxu0
    %v1235 = vadd.f32 0.0, %v1234
    %1236 = vmatprep.mubr.f32.mxu0 0.0
    %1237 = vmatmul.mubr.f32.gmra.mxu0 %v1155
    %v1238 = vpop.f32.mrf.mxu0
    %v1239 = vadd.f32 0.0, %v1238
    %v1240 = vpop.f32.mrf.mxu0
    %v1241 = vadd.f32 0.0, %v1240
    %1242 = vmatprep.mubr.f32.mxu0 0.0
    %1243 = vmatmul.mubr.f32.gmra.mxu0 %v1158
    %v1244 = vpop.f32.mrf.mxu0
    %v1245 = vadd.f32 0.0, %v1244
    %v1246 = vpop.f32.mrf.mxu0
    %v1247 = vadd.f32 0.0, %v1246
    %1248 = vdwg.mxu0
    %1249 = vmatprep.subr.mxu0 0.0
    %1250 = vmatpush1.msra.mxu0 0.0
    %1251 = vmatprep.subr.mxu0 0.0
    %1252 = vmatpush1.msra.mxu0 0.0
    %1253 = vmatprep.subr.mxu0 0.0
    %1254 = vmatpush1.msra.mxu0 0.0
    %1255 = vmatprep.subr.mxu0 0.0
    %1256 = vmatpush1.msra.mxu0 0.0
    %1257 = vmatprep.subr.mxu0 0.0
    %1258 = vmatpush1.msra.mxu0 0.0
    %1259 = vmatprep.subr.mxu0 0.0
    %1260 = vmatpush1.msra.mxu0 0.0
    %1261 = vmatprep.subr.mxu0 0.0
    %1262 = vmatpush1.msra.mxu0 0.0
    %1263 = vmatprep.subr.mxu0 0.0
    %1264 = vmatpush1.msra.mxu0 0.0
    %1265 = vmatprep.subr.mxu0 0.0
    %1266 = vmatpush1.msra.mxu0 0.0
    %1267 = vmatprep.subr.mxu0 0.0
    %1268 = vmatpush1.msra.mxu0 0.0
    %1269 = vmatprep.subr.mxu0 0.0
    %1270 = vmatpush1.msra.mxu0 0.0
    %1271 = vmatprep.subr.mxu0 0.0
    %1272 = vmatpush1.msra.mxu0 0.0
    %1273 = vmatprep.subr.mxu0 0.0
    %1274 = vmatpush1.msra.mxu0 0.0
    %1275 = vmatprep.subr.mxu0 0.0
    %1276 = vmatpush1.msra.mxu0 0.0
    %1277 = vmatprep.subr.mxu0 0.0
    %1278 = vmatpush1.msra.mxu0 0.0
    %1279 = vmatprep.subr.mxu0 %v214
    %1280 = vmatpush1.msra.mxu0 %v212
    %1281 = vmatprep.subr.mxu0 0.0
    %1282 = vmatpush2.msra.mxu0 0.0
    %1283 = vmatprep.subr.mxu0 0.0
    %1284 = vmatpush2.msra.mxu0 0.0
    %1285 = vmatprep.subr.mxu0 0.0
    %1286 = vmatpush2.msra.mxu0 0.0
    %1287 = vmatprep.subr.mxu0 0.0
    %1288 = vmatpush2.msra.mxu0 0.0
    %1289 = vmatprep.subr.mxu0 0.0
    %1290 = vmatpush2.msra.mxu0 0.0
    %1291 = vmatprep.subr.mxu0 0.0
    %1292 = vmatpush2.msra.mxu0 0.0
    %1293 = vmatprep.subr.mxu0 0.0
    %1294 = vmatpush2.msra.mxu0 0.0
    %1295 = vmatprep.subr.mxu0 0.0
    %1296 = vmatpush2.msra.mxu0 0.0
    %1297 = vmatprep.subr.mxu0 0.0
    %1298 = vmatpush2.msra.mxu0 0.0
    %1299 = vmatprep.subr.mxu0 0.0
    %1300 = vmatpush2.msra.mxu0 0.0
    %1301 = vmatprep.subr.mxu0 0.0
    %1302 = vmatpush2.msra.mxu0 0.0
    %1303 = vmatprep.subr.mxu0 0.0
    %1304 = vmatpush2.msra.mxu0 0.0
    %1305 = vmatprep.subr.mxu0 0.0
    %1306 = vmatpush2.msra.mxu0 0.0
    %1307 = vmatprep.subr.mxu0 0.0
    %1308 = vmatpush2.msra.mxu0 0.0
    %1309 = vmatprep.subr.mxu0 0.0
    %1310 = vmatpush2.msra.mxu0 0.0
    %1311 = vmatprep.subr.mxu0 0.0
    %1312 = vmatpush2.msra.mxu0 0.0
    %1313 = vmatprep.mubr.f32.mxu0 0.0
    %1314 = vmatmul.mubr.f32.gmra.mxu0 %v1149
    %v1315 = vpop.f32.mrf.mxu0
    %v1316 = vadd.f32 0.0, %v1315
    %v1317 = vpop.f32.mrf.mxu0
    %v1318 = vadd.f32 0.0, %v1317
    %1319 = vmatprep.mubr.f32.mxu0 0.0
    %1320 = vmatmul.mubr.f32.gmra.mxu0 %v1152
    %v1321 = vpop.f32.mrf.mxu0
    %v1322 = vadd.f32 0.0, %v1321
    %v1323 = vpop.f32.mrf.mxu0
    %v1324 = vadd.f32 0.0, %v1323
    %1325 = vmatprep.mubr.f32.mxu0 0.0
    %1326 = vmatmul.mubr.f32.gmra.mxu0 %v1155
    %v1327 = vpop.f32.mrf.mxu0
    %v1328 = vadd.f32 0.0, %v1327
    %v1329 = vpop.f32.mrf.mxu0
    %v1330 = vadd.f32 0.0, %v1329
    %1331 = vmatprep.mubr.f32.mxu0 0.0
    %1332 = vmatmul.mubr.f32.gmra.mxu0 %v1158
    %v1333 = vpop.f32.mrf.mxu0
    %v1334 = vadd.f32 0.0, %v1333
    %v1335 = vpop.f32.mrf.mxu0
    %v1336 = vadd.f32 0.0, %v1335
    %1337 = vdwg.mxu0
    %1338 = vrot.lane.b32.xlu0 %v1227, 1
    %v1339 = vpop.permute.xlu0 %1338
    %1340 = vrot.lane.b32.xlu0 %v1233, 1
    %v1341 = vpop.permute.xlu0 %1340
    %1342 = vrot.lane.b32.xlu0 %v1239, 1
    %v1343 = vpop.permute.xlu0 %1342
    %1344 = vrot.lane.b32.xlu0 %v1245, 1
    %v1345 = vpop.permute.xlu0 %1344
    %1346 = vrot.lane.b32.xlu0 %v1229, 1
    %v1347 = vpop.permute.xlu0 %1346
    %1348 = vrot.lane.b32.xlu0 %v1235, 1
    %v1349 = vpop.permute.xlu0 %1348
    %1350 = vrot.lane.b32.xlu0 %v1241, 1
    %v1351 = vpop.permute.xlu0 %1350
    %1352 = vrot.lane.b32.xlu0 %v1247, 1
    %v1353 = vpop.permute.xlu0 %1352
    %1354 = vrot.lane.b32.xlu0 %v1316, 1
    %v1355 = vpop.permute.xlu0 %1354
    %1356 = vrot.lane.b32.xlu0 %v1322, 1
    %v1357 = vpop.permute.xlu0 %1356
    %1358 = vrot.lane.b32.xlu0 %v1328, 1
    %v1359 = vpop.permute.xlu0 %1358
    %1360 = vrot.lane.b32.xlu0 %v1334, 1
    %v1361 = vpop.permute.xlu0 %1360
    %1362 = vrot.lane.b32.xlu0 %v1318, 1
    %v1363 = vpop.permute.xlu0 %1362
    %1364 = vrot.lane.b32.xlu0 %v1324, 1
    %v1365 = vpop.permute.xlu0 %1364
    %1366 = vrot.lane.b32.xlu0 %v1330, 1
    %v1367 = vpop.permute.xlu0 %1366
    %1368 = vrot.lane.b32.xlu0 %v1336, 1
    %v1369 = vpop.permute.xlu0 %1368
    %vm1370 = vcmp.lt.s32.totalorder %v427, 1
    %v1371 = vsel %vm1370, %v1355, %v1363
    %v1372 = vsel %vm1370, %v1357, %v1365
    %v1373 = vsel %vm1370, %v1359, %v1367
    %v1374 = vsel %vm1370, %v1361, %v1369
    %v1375 = vsel %vm1370, %v1347, %v1355
    %v1376 = vsel %vm1370, %v1349, %v1357
    %v1377 = vsel %vm1370, %v1351, %v1359
    %v1378 = vsel %vm1370, %v1353, %v1361
    %v1379 = vsel %vm1370, %v1339, %v1347
    %v1380 = vsel %vm1370, %v1341, %v1349
    %v1381 = vsel %vm1370, %v1343, %v1351
    %v1382 = vsel %vm1370, %v1345, %v1353
    %v1383 = vsel %vm1370, %v1363, %v1339
    %v1384 = vsel %vm1370, %v1365, %v1341
    %v1385 = vsel %vm1370, %v1367, %v1343
    %v1386 = vsel %vm1370, %v1369, %v1345
    %v1387 = vlaneseq
    %v1388 = vshrl.u32 %v1387, 7
    %v1389 = vsub.s32 2, %v1388
    %v1390 = vrot.slane %v53, %v1389
    %v1391 = vlaneseq
    %v1392 = vshrl.u32 %v1391, 7
    %v1393 = vsub.s32 6, %v1392
    %v1394 = vrot.slane %v53, %v1393
    %v1395 = vlaneseq
    %v1396 = vshrl.u32 %v1395, 7
    %v1397 = vsub.s32 2, %v1396
    %v1398 = vrot.slane %v54, %v1397
    %v1399 = vlaneseq
    %v1400 = vshrl.u32 %v1399, 7
    %v1401 = vsub.s32 6, %v1400
    %v1402 = vrot.slane %v54, %v1401
    %v1407 = vlaneseq
    %v1408 = vshrl.u32 %v1407, 7
    %v1409 = vsub.s32 2, %v1408
    %v1410 = vrot.slane %v1390, %v1409
    %v1411 = vlaneseq
    %v1412 = vshrl.u32 %v1411, 7
    %v1413 = vsub.s32 2, %v1412
    %v1414 = vrot.slane %v1394, %v1413
    %v1415 = vlaneseq
    %v1416 = vshrl.u32 %v1415, 7
    %v1417 = vsub.s32 2, %v1416
    %v1418 = vrot.slane %v1398, %v1417
    %v1419 = vlaneseq
    %v1420 = vshrl.u32 %v1419, 7
    %v1421 = vsub.s32 2, %v1420
    %v1422 = vrot.slane %v1402, %v1421
    %v1423 = vmul.f32 %v1383, %v1410
    %v1424 = vmul.f32 %v1379, %v1414
    %v1425 = vmul.f32 %v1375, %v1418
    %v1426 = vmul.f32 %v1371, %v1422
    %v1427 = vmul.f32 %v1384, %v1410
    %v1428 = vmul.f32 %v1380, %v1414
    %v1429 = vmul.f32 %v1376, %v1418
    %v1430 = vmul.f32 %v1372, %v1422
    %v1431 = vmul.f32 %v1385, %v1410
    %v1432 = vmul.f32 %v1381, %v1414
    %v1433 = vmul.f32 %v1377, %v1418
    %v1434 = vmul.f32 %v1373, %v1422
    %v1435 = vmul.f32 %v1386, %v1410
    %v1436 = vmul.f32 %v1382, %v1414
    %v1437 = vmul.f32 %v1378, %v1418
    %v1438 = vmul.f32 %v1374, %v1422
    %v1439 = vadd.f32 %v1127, %v1423
    %v1440 = vadd.f32 %v1128, %v1424
    %v1441 = vadd.f32 %v1129, %v1425
    %v1442 = vadd.f32 %v1130, %v1426
    %v1443 = vadd.f32 %v1131, %v1427
    %v1444 = vadd.f32 %v1132, %v1428
    %v1445 = vadd.f32 %v1133, %v1429
    %v1446 = vadd.f32 %v1134, %v1430
    %v1447 = vadd.f32 %v1135, %v1431
    %v1448 = vadd.f32 %v1136, %v1432
    %v1449 = vadd.f32 %v1137, %v1433
    %v1450 = vadd.f32 %v1138, %v1434
    %v1451 = vadd.f32 %v1139, %v1435
    %v1452 = vadd.f32 %v1140, %v1436
    %v1453 = vadd.f32 %v1141, %v1437
    %v1454 = vadd.f32 %v1142, %v1438
    %s1455 = scalar_lea.vmem %s6, 128
    %v1456 = vld [vmem:[%s1455] sm:$0xff]
    %v1457 = vld [vmem:[%s1455 + $0x8] sm:$0xff]
    %v1458 = vld [vmem:[%s1455 + $0x10] sm:$0xff]
    %v1459 = vld [vmem:[%s1455 + $0x18] sm:$0xff]
    %v1461 = vsel %vm195, %v1456, 0
    %v1464 = vsel %vm195, %v1457, 0
    %v1467 = vsel %vm195, %v1458, 0
    %v1470 = vsel %vm195, %v1459, 0
    %1472 = vmatprep.subr.mxu0 0.0
    %1473 = vmatpush1.msra.mxu0 0.0
    %1474 = vmatprep.subr.mxu0 0.0
    %1475 = vmatpush1.msra.mxu0 0.0
    %1476 = vmatprep.subr.mxu0 0.0
    %1477 = vmatpush1.msra.mxu0 0.0
    %1478 = vmatprep.subr.mxu0 0.0
    %1479 = vmatpush1.msra.mxu0 0.0
    %1480 = vmatprep.subr.mxu0 0.0
    %1481 = vmatpush1.msra.mxu0 0.0
    %1482 = vmatprep.subr.mxu0 0.0
    %1483 = vmatpush1.msra.mxu0 0.0
    %1484 = vmatprep.subr.mxu0 0.0
    %1485 = vmatpush1.msra.mxu0 0.0
    %1486 = vmatprep.subr.mxu0 0.0
    %1487 = vmatpush1.msra.mxu0 0.0
    %1488 = vmatprep.subr.mxu0 0.0
    %1489 = vmatpush1.msra.mxu0 0.0
    %1490 = vmatprep.subr.mxu0 0.0
    %1491 = vmatpush1.msra.mxu0 0.0
    %1492 = vmatprep.subr.mxu0 0.0
    %1493 = vmatpush1.msra.mxu0 0.0
    %1494 = vmatprep.subr.mxu0 0.0
    %1495 = vmatpush1.msra.mxu0 0.0
    %1496 = vmatprep.subr.mxu0 0.0
    %1497 = vmatpush1.msra.mxu0 0.0
    %1498 = vmatprep.subr.mxu0 0.0
    %1499 = vmatpush1.msra.mxu0 0.0
    %1500 = vmatprep.subr.mxu0 0.0
    %1501 = vmatpush1.msra.mxu0 0.0
    %1502 = vmatprep.subr.mxu0 %v210
    %1503 = vmatpush1.msra.mxu0 %v208
    %1504 = vmatprep.subr.mxu0 0.0
    %1505 = vmatpush2.msra.mxu0 0.0
    %1506 = vmatprep.subr.mxu0 0.0
    %1507 = vmatpush2.msra.mxu0 0.0
    %1508 = vmatprep.subr.mxu0 0.0
    %1509 = vmatpush2.msra.mxu0 0.0
    %1510 = vmatprep.subr.mxu0 0.0
    %1511 = vmatpush2.msra.mxu0 0.0
    %1512 = vmatprep.subr.mxu0 0.0
    %1513 = vmatpush2.msra.mxu0 0.0
    %1514 = vmatprep.subr.mxu0 0.0
    %1515 = vmatpush2.msra.mxu0 0.0
    %1516 = vmatprep.subr.mxu0 0.0
    %1517 = vmatpush2.msra.mxu0 0.0
    %1518 = vmatprep.subr.mxu0 0.0
    %1519 = vmatpush2.msra.mxu0 0.0
    %1520 = vmatprep.subr.mxu0 0.0
    %1521 = vmatpush2.msra.mxu0 0.0
    %1522 = vmatprep.subr.mxu0 0.0
    %1523 = vmatpush2.msra.mxu0 0.0
    %1524 = vmatprep.subr.mxu0 0.0
    %1525 = vmatpush2.msra.mxu0 0.0
    %1526 = vmatprep.subr.mxu0 0.0
    %1527 = vmatpush2.msra.mxu0 0.0
    %1528 = vmatprep.subr.mxu0 0.0
    %1529 = vmatpush2.msra.mxu0 0.0
    %1530 = vmatprep.subr.mxu0 0.0
    %1531 = vmatpush2.msra.mxu0 0.0
    %1532 = vmatprep.subr.mxu0 0.0
    %1533 = vmatpush2.msra.mxu0 0.0
    %1534 = vmatprep.subr.mxu0 0.0
    %1535 = vmatpush2.msra.mxu0 0.0
    %1536 = vmatprep.mubr.f32.mxu0 0.0
    %1537 = vmatmul.mubr.f32.gmra.mxu0 %v1461
    %v1538 = vpop.f32.mrf.mxu0
    %v1539 = vadd.f32 0.0, %v1538
    %v1540 = vpop.f32.mrf.mxu0
    %v1541 = vadd.f32 0.0, %v1540
    %1542 = vmatprep.mubr.f32.mxu0 0.0
    %1543 = vmatmul.mubr.f32.gmra.mxu0 %v1464
    %v1544 = vpop.f32.mrf.mxu0
    %v1545 = vadd.f32 0.0, %v1544
    %v1546 = vpop.f32.mrf.mxu0
    %v1547 = vadd.f32 0.0, %v1546
    %1548 = vmatprep.mubr.f32.mxu0 0.0
    %1549 = vmatmul.mubr.f32.gmra.mxu0 %v1467
    %v1550 = vpop.f32.mrf.mxu0
    %v1551 = vadd.f32 0.0, %v1550
    %v1552 = vpop.f32.mrf.mxu0
    %v1553 = vadd.f32 0.0, %v1552
    %1554 = vmatprep.mubr.f32.mxu0 0.0
    %1555 = vmatmul.mubr.f32.gmra.mxu0 %v1470
    %v1556 = vpop.f32.mrf.mxu0
    %v1557 = vadd.f32 0.0, %v1556
    %v1558 = vpop.f32.mrf.mxu0
    %v1559 = vadd.f32 0.0, %v1558
    %1560 = vdwg.mxu0
    %1561 = vmatprep.subr.mxu0 0.0
    %1562 = vmatpush1.msra.mxu0 0.0
    %1563 = vmatprep.subr.mxu0 0.0
    %1564 = vmatpush1.msra.mxu0 0.0
    %1565 = vmatprep.subr.mxu0 0.0
    %1566 = vmatpush1.msra.mxu0 0.0
    %1567 = vmatprep.subr.mxu0 0.0
    %1568 = vmatpush1.msra.mxu0 0.0
    %1569 = vmatprep.subr.mxu0 0.0
    %1570 = vmatpush1.msra.mxu0 0.0
    %1571 = vmatprep.subr.mxu0 0.0
    %1572 = vmatpush1.msra.mxu0 0.0
    %1573 = vmatprep.subr.mxu0 0.0
    %1574 = vmatpush1.msra.mxu0 0.0
    %1575 = vmatprep.subr.mxu0 0.0
    %1576 = vmatpush1.msra.mxu0 0.0
    %1577 = vmatprep.subr.mxu0 0.0
    %1578 = vmatpush1.msra.mxu0 0.0
    %1579 = vmatprep.subr.mxu0 0.0
    %1580 = vmatpush1.msra.mxu0 0.0
    %1581 = vmatprep.subr.mxu0 0.0
    %1582 = vmatpush1.msra.mxu0 0.0
    %1583 = vmatprep.subr.mxu0 0.0
    %1584 = vmatpush1.msra.mxu0 0.0
    %1585 = vmatprep.subr.mxu0 0.0
    %1586 = vmatpush1.msra.mxu0 0.0
    %1587 = vmatprep.subr.mxu0 0.0
    %1588 = vmatpush1.msra.mxu0 0.0
    %1589 = vmatprep.subr.mxu0 0.0
    %1590 = vmatpush1.msra.mxu0 0.0
    %1591 = vmatprep.subr.mxu0 %v214
    %1592 = vmatpush1.msra.mxu0 %v212
    %1593 = vmatprep.subr.mxu0 0.0
    %1594 = vmatpush2.msra.mxu0 0.0
    %1595 = vmatprep.subr.mxu0 0.0
    %1596 = vmatpush2.msra.mxu0 0.0
    %1597 = vmatprep.subr.mxu0 0.0
    %1598 = vmatpush2.msra.mxu0 0.0
    %1599 = vmatprep.subr.mxu0 0.0
    %1600 = vmatpush2.msra.mxu0 0.0
    %1601 = vmatprep.subr.mxu0 0.0
    %1602 = vmatpush2.msra.mxu0 0.0
    %1603 = vmatprep.subr.mxu0 0.0
    %1604 = vmatpush2.msra.mxu0 0.0
    %1605 = vmatprep.subr.mxu0 0.0
    %1606 = vmatpush2.msra.mxu0 0.0
    %1607 = vmatprep.subr.mxu0 0.0
    %1608 = vmatpush2.msra.mxu0 0.0
    %1609 = vmatprep.subr.mxu0 0.0
    %1610 = vmatpush2.msra.mxu0 0.0
    %1611 = vmatprep.subr.mxu0 0.0
    %1612 = vmatpush2.msra.mxu0 0.0
    %1613 = vmatprep.subr.mxu0 0.0
    %1614 = vmatpush2.msra.mxu0 0.0
    %1615 = vmatprep.subr.mxu0 0.0
    %1616 = vmatpush2.msra.mxu0 0.0
    %1617 = vmatprep.subr.mxu0 0.0
    %1618 = vmatpush2.msra.mxu0 0.0
    %1619 = vmatprep.subr.mxu0 0.0
    %1620 = vmatpush2.msra.mxu0 0.0
    %1621 = vmatprep.subr.mxu0 0.0
    %1622 = vmatpush2.msra.mxu0 0.0
    %1623 = vmatprep.subr.mxu0 0.0
    %1624 = vmatpush2.msra.mxu0 0.0
    %1625 = vmatprep.mubr.f32.mxu0 0.0
    %1626 = vmatmul.mubr.f32.gmra.mxu0 %v1461
    %v1627 = vpop.f32.mrf.mxu0
    %v1628 = vadd.f32 0.0, %v1627
    %v1629 = vpop.f32.mrf.mxu0
    %v1630 = vadd.f32 0.0, %v1629
    %1631 = vmatprep.mubr.f32.mxu0 0.0
    %1632 = vmatmul.mubr.f32.gmra.mxu0 %v1464
    %v1633 = vpop.f32.mrf.mxu0
    %v1634 = vadd.f32 0.0, %v1633
    %v1635 = vpop.f32.mrf.mxu0
    %v1636 = vadd.f32 0.0, %v1635
    %1637 = vmatprep.mubr.f32.mxu0 0.0
    %1638 = vmatmul.mubr.f32.gmra.mxu0 %v1467
    %v1639 = vpop.f32.mrf.mxu0
    %v1640 = vadd.f32 0.0, %v1639
    %v1641 = vpop.f32.mrf.mxu0
    %v1642 = vadd.f32 0.0, %v1641
    %1643 = vmatprep.mubr.f32.mxu0 0.0
    %1644 = vmatmul.mubr.f32.gmra.mxu0 %v1470
    %v1645 = vpop.f32.mrf.mxu0
    %v1646 = vadd.f32 0.0, %v1645
    %v1647 = vpop.f32.mrf.mxu0
    %v1648 = vadd.f32 0.0, %v1647
    %1649 = vdwg.mxu0
    %v1650 = vadd.f32 %v1439, %v1539
    %v1651 = vadd.f32 %v1440, %v1541
    %v1652 = vadd.f32 %v1441, %v1628
    %v1653 = vadd.f32 %v1442, %v1630
    %v1654 = vadd.f32 %v1443, %v1545
    %v1655 = vadd.f32 %v1444, %v1547
    %v1656 = vadd.f32 %v1445, %v1634
    %v1657 = vadd.f32 %v1446, %v1636
    %v1658 = vadd.f32 %v1447, %v1551
    %v1659 = vadd.f32 %v1448, %v1553
    %v1660 = vadd.f32 %v1449, %v1640
    %v1661 = vadd.f32 %v1450, %v1642
    %v1662 = vadd.f32 %v1451, %v1557
    %v1663 = vadd.f32 %v1452, %v1559
    %v1664 = vadd.f32 %v1453, %v1646
    %v1665 = vadd.f32 %v1454, %v1648
    %s1666 = scalar_lea.vmem %s6, 160
    %v1667 = vld [vmem:[%s1666] sm:$0xff]
    %v1668 = vld [vmem:[%s1666 + $0x8] sm:$0xff]
    %v1669 = vld [vmem:[%s1666 + $0x10] sm:$0xff]
    %v1670 = vld [vmem:[%s1666 + $0x18] sm:$0xff]
    %v1672 = vsel %vm195, %v1667, 0
    %v1675 = vsel %vm195, %v1668, 0
    %v1678 = vsel %vm195, %v1669, 0
    %v1681 = vsel %vm195, %v1670, 0
    %1683 = vmatprep.subr.mxu0 0.0
    %1684 = vmatpush1.msra.mxu0 0.0
    %1685 = vmatprep.subr.mxu0 0.0
    %1686 = vmatpush1.msra.mxu0 0.0
    %1687 = vmatprep.subr.mxu0 0.0
    %1688 = vmatpush1.msra.mxu0 0.0
    %1689 = vmatprep.subr.mxu0 0.0
    %1690 = vmatpush1.msra.mxu0 0.0
    %1691 = vmatprep.subr.mxu0 0.0
    %1692 = vmatpush1.msra.mxu0 0.0
    %1693 = vmatprep.subr.mxu0 0.0
    %1694 = vmatpush1.msra.mxu0 0.0
    %1695 = vmatprep.subr.mxu0 0.0
    %1696 = vmatpush1.msra.mxu0 0.0
    %1697 = vmatprep.subr.mxu0 0.0
    %1698 = vmatpush1.msra.mxu0 0.0
    %1699 = vmatprep.subr.mxu0 0.0
    %1700 = vmatpush1.msra.mxu0 0.0
    %1701 = vmatprep.subr.mxu0 0.0
    %1702 = vmatpush1.msra.mxu0 0.0
    %1703 = vmatprep.subr.mxu0 0.0
    %1704 = vmatpush1.msra.mxu0 0.0
    %1705 = vmatprep.subr.mxu0 0.0
    %1706 = vmatpush1.msra.mxu0 0.0
    %1707 = vmatprep.subr.mxu0 0.0
    %1708 = vmatpush1.msra.mxu0 0.0
    %1709 = vmatprep.subr.mxu0 0.0
    %1710 = vmatpush1.msra.mxu0 0.0
    %1711 = vmatprep.subr.mxu0 0.0
    %1712 = vmatpush1.msra.mxu0 0.0
    %1713 = vmatprep.subr.mxu0 %v210
    %1714 = vmatpush1.msra.mxu0 %v208
    %1715 = vmatprep.subr.mxu0 0.0
    %1716 = vmatpush2.msra.mxu0 0.0
    %1717 = vmatprep.subr.mxu0 0.0
    %1718 = vmatpush2.msra.mxu0 0.0
    %1719 = vmatprep.subr.mxu0 0.0
    %1720 = vmatpush2.msra.mxu0 0.0
    %1721 = vmatprep.subr.mxu0 0.0
    %1722 = vmatpush2.msra.mxu0 0.0
    %1723 = vmatprep.subr.mxu0 0.0
    %1724 = vmatpush2.msra.mxu0 0.0
    %1725 = vmatprep.subr.mxu0 0.0
    %1726 = vmatpush2.msra.mxu0 0.0
    %1727 = vmatprep.subr.mxu0 0.0
    %1728 = vmatpush2.msra.mxu0 0.0
    %1729 = vmatprep.subr.mxu0 0.0
    %1730 = vmatpush2.msra.mxu0 0.0
    %1731 = vmatprep.subr.mxu0 0.0
    %1732 = vmatpush2.msra.mxu0 0.0
    %1733 = vmatprep.subr.mxu0 0.0
    %1734 = vmatpush2.msra.mxu0 0.0
    %1735 = vmatprep.subr.mxu0 0.0
    %1736 = vmatpush2.msra.mxu0 0.0
    %1737 = vmatprep.subr.mxu0 0.0
    %1738 = vmatpush2.msra.mxu0 0.0
    %1739 = vmatprep.subr.mxu0 0.0
    %1740 = vmatpush2.msra.mxu0 0.0
    %1741 = vmatprep.subr.mxu0 0.0
    %1742 = vmatpush2.msra.mxu0 0.0
    %1743 = vmatprep.subr.mxu0 0.0
    %1744 = vmatpush2.msra.mxu0 0.0
    %1745 = vmatprep.subr.mxu0 0.0
    %1746 = vmatpush2.msra.mxu0 0.0
    %1747 = vmatprep.mubr.f32.mxu0 0.0
    %1748 = vmatmul.mubr.f32.gmra.mxu0 %v1672
    %v1749 = vpop.f32.mrf.mxu0
    %v1750 = vadd.f32 0.0, %v1749
    %v1751 = vpop.f32.mrf.mxu0
    %v1752 = vadd.f32 0.0, %v1751
    %1753 = vmatprep.mubr.f32.mxu0 0.0
    %1754 = vmatmul.mubr.f32.gmra.mxu0 %v1675
    %v1755 = vpop.f32.mrf.mxu0
    %v1756 = vadd.f32 0.0, %v1755
    %v1757 = vpop.f32.mrf.mxu0
    %v1758 = vadd.f32 0.0, %v1757
    %1759 = vmatprep.mubr.f32.mxu0 0.0
    %1760 = vmatmul.mubr.f32.gmra.mxu0 %v1678
    %v1761 = vpop.f32.mrf.mxu0
    %v1762 = vadd.f32 0.0, %v1761
    %v1763 = vpop.f32.mrf.mxu0
    %v1764 = vadd.f32 0.0, %v1763
    %1765 = vmatprep.mubr.f32.mxu0 0.0
    %1766 = vmatmul.mubr.f32.gmra.mxu0 %v1681
    %v1767 = vpop.f32.mrf.mxu0
    %v1768 = vadd.f32 0.0, %v1767
    %v1769 = vpop.f32.mrf.mxu0
    %v1770 = vadd.f32 0.0, %v1769
    %1771 = vdwg.mxu0
    %1772 = vmatprep.subr.mxu0 0.0
    %1773 = vmatpush1.msra.mxu0 0.0
    %1774 = vmatprep.subr.mxu0 0.0
    %1775 = vmatpush1.msra.mxu0 0.0
    %1776 = vmatprep.subr.mxu0 0.0
    %1777 = vmatpush1.msra.mxu0 0.0
    %1778 = vmatprep.subr.mxu0 0.0
    %1779 = vmatpush1.msra.mxu0 0.0
    %1780 = vmatprep.subr.mxu0 0.0
    %1781 = vmatpush1.msra.mxu0 0.0
    %1782 = vmatprep.subr.mxu0 0.0
    %1783 = vmatpush1.msra.mxu0 0.0
    %1784 = vmatprep.subr.mxu0 0.0
    %1785 = vmatpush1.msra.mxu0 0.0
    %1786 = vmatprep.subr.mxu0 0.0
    %1787 = vmatpush1.msra.mxu0 0.0
    %1788 = vmatprep.subr.mxu0 0.0
    %1789 = vmatpush1.msra.mxu0 0.0
    %1790 = vmatprep.subr.mxu0 0.0
    %1791 = vmatpush1.msra.mxu0 0.0
    %1792 = vmatprep.subr.mxu0 0.0
    %1793 = vmatpush1.msra.mxu0 0.0
    %1794 = vmatprep.subr.mxu0 0.0
    %1795 = vmatpush1.msra.mxu0 0.0
    %1796 = vmatprep.subr.mxu0 0.0
    %1797 = vmatpush1.msra.mxu0 0.0
    %1798 = vmatprep.subr.mxu0 0.0
    %1799 = vmatpush1.msra.mxu0 0.0
    %1800 = vmatprep.subr.mxu0 0.0
    %1801 = vmatpush1.msra.mxu0 0.0
    %1802 = vmatprep.subr.mxu0 %v214
    %1803 = vmatpush1.msra.mxu0 %v212
    %1804 = vmatprep.subr.mxu0 0.0
    %1805 = vmatpush2.msra.mxu0 0.0
    %1806 = vmatprep.subr.mxu0 0.0
    %1807 = vmatpush2.msra.mxu0 0.0
    %1808 = vmatprep.subr.mxu0 0.0
    %1809 = vmatpush2.msra.mxu0 0.0
    %1810 = vmatprep.subr.mxu0 0.0
    %1811 = vmatpush2.msra.mxu0 0.0
    %1812 = vmatprep.subr.mxu0 0.0
    %1813 = vmatpush2.msra.mxu0 0.0
    %1814 = vmatprep.subr.mxu0 0.0
    %1815 = vmatpush2.msra.mxu0 0.0
    %1816 = vmatprep.subr.mxu0 0.0
    %1817 = vmatpush2.msra.mxu0 0.0
    %1818 = vmatprep.subr.mxu0 0.0
    %1819 = vmatpush2.msra.mxu0 0.0
    %1820 = vmatprep.subr.mxu0 0.0
    %1821 = vmatpush2.msra.mxu0 0.0
    %1822 = vmatprep.subr.mxu0 0.0
    %1823 = vmatpush2.msra.mxu0 0.0
    %1824 = vmatprep.subr.mxu0 0.0
    %1825 = vmatpush2.msra.mxu0 0.0
    %1826 = vmatprep.subr.mxu0 0.0
    %1827 = vmatpush2.msra.mxu0 0.0
    %1828 = vmatprep.subr.mxu0 0.0
    %1829 = vmatpush2.msra.mxu0 0.0
    %1830 = vmatprep.subr.mxu0 0.0
    %1831 = vmatpush2.msra.mxu0 0.0
    %1832 = vmatprep.subr.mxu0 0.0
    %1833 = vmatpush2.msra.mxu0 0.0
    %1834 = vmatprep.subr.mxu0 0.0
    %1835 = vmatpush2.msra.mxu0 0.0
    %1836 = vmatprep.mubr.f32.mxu0 0.0
    %1837 = vmatmul.mubr.f32.gmra.mxu0 %v1672
    %v1838 = vpop.f32.mrf.mxu0
    %v1839 = vadd.f32 0.0, %v1838
    %v1840 = vpop.f32.mrf.mxu0
    %v1841 = vadd.f32 0.0, %v1840
    %1842 = vmatprep.mubr.f32.mxu0 0.0
    %1843 = vmatmul.mubr.f32.gmra.mxu0 %v1675
    %v1844 = vpop.f32.mrf.mxu0
    %v1845 = vadd.f32 0.0, %v1844
    %v1846 = vpop.f32.mrf.mxu0
    %v1847 = vadd.f32 0.0, %v1846
    %1848 = vmatprep.mubr.f32.mxu0 0.0
    %1849 = vmatmul.mubr.f32.gmra.mxu0 %v1678
    %v1850 = vpop.f32.mrf.mxu0
    %v1851 = vadd.f32 0.0, %v1850
    %v1852 = vpop.f32.mrf.mxu0
    %v1853 = vadd.f32 0.0, %v1852
    %1854 = vmatprep.mubr.f32.mxu0 0.0
    %1855 = vmatmul.mubr.f32.gmra.mxu0 %v1681
    %v1856 = vpop.f32.mrf.mxu0
    %v1857 = vadd.f32 0.0, %v1856
    %v1858 = vpop.f32.mrf.mxu0
    %v1859 = vadd.f32 0.0, %v1858
    %1860 = vdwg.mxu0
    %1861 = vrot.lane.b32.xlu0 %v1750, 127
    %v1862 = vpop.permute.xlu0 %1861
    %1863 = vrot.lane.b32.xlu0 %v1756, 127
    %v1864 = vpop.permute.xlu0 %1863
    %1865 = vrot.lane.b32.xlu0 %v1762, 127
    %v1866 = vpop.permute.xlu0 %1865
    %1867 = vrot.lane.b32.xlu0 %v1768, 127
    %v1868 = vpop.permute.xlu0 %1867
    %1869 = vrot.lane.b32.xlu0 %v1752, 127
    %v1870 = vpop.permute.xlu0 %1869
    %1871 = vrot.lane.b32.xlu0 %v1758, 127
    %v1872 = vpop.permute.xlu0 %1871
    %1873 = vrot.lane.b32.xlu0 %v1764, 127
    %v1874 = vpop.permute.xlu0 %1873
    %1875 = vrot.lane.b32.xlu0 %v1770, 127
    %v1876 = vpop.permute.xlu0 %1875
    %1877 = vrot.lane.b32.xlu0 %v1839, 127
    %v1878 = vpop.permute.xlu0 %1877
    %1879 = vrot.lane.b32.xlu0 %v1845, 127
    %v1880 = vpop.permute.xlu0 %1879
    %1881 = vrot.lane.b32.xlu0 %v1851, 127
    %v1882 = vpop.permute.xlu0 %1881
    %1883 = vrot.lane.b32.xlu0 %v1857, 127
    %v1884 = vpop.permute.xlu0 %1883
    %1885 = vrot.lane.b32.xlu0 %v1841, 127
    %v1886 = vpop.permute.xlu0 %1885
    %1887 = vrot.lane.b32.xlu0 %v1847, 127
    %v1888 = vpop.permute.xlu0 %1887
    %1889 = vrot.lane.b32.xlu0 %v1853, 127
    %v1890 = vpop.permute.xlu0 %1889
    %1891 = vrot.lane.b32.xlu0 %v1859, 127
    %v1892 = vpop.permute.xlu0 %1891
    %vm1893 = vcmp.lt.s32.totalorder %v427, 127
    %v1894 = vsel %vm1893, %v1878, %v1886
    %v1895 = vsel %vm1893, %v1880, %v1888
    %v1896 = vsel %vm1893, %v1882, %v1890
    %v1897 = vsel %vm1893, %v1884, %v1892
    %v1898 = vsel %vm1893, %v1870, %v1878
    %v1899 = vsel %vm1893, %v1872, %v1880
    %v1900 = vsel %vm1893, %v1874, %v1882
    %v1901 = vsel %vm1893, %v1876, %v1884
    %v1902 = vsel %vm1893, %v1862, %v1870
    %v1903 = vsel %vm1893, %v1864, %v1872
    %v1904 = vsel %vm1893, %v1866, %v1874
    %v1905 = vsel %vm1893, %v1868, %v1876
    %v1906 = vsel %vm1893, %v1886, %v1862
    %v1907 = vsel %vm1893, %v1888, %v1864
    %v1908 = vsel %vm1893, %v1890, %v1866
    %v1909 = vsel %vm1893, %v1892, %v1868
    %v1910 = vlaneseq
    %v1911 = vshrl.u32 %v1910, 7
    %v1912 = vsub.s32 3, %v1911
    %v1913 = vrot.slane %v53, %v1912
    %v1914 = vlaneseq
    %v1915 = vshrl.u32 %v1914, 7
    %v1916 = vsub.s32 7, %v1915
    %v1917 = vrot.slane %v53, %v1916
    %v1918 = vlaneseq
    %v1919 = vshrl.u32 %v1918, 7
    %v1920 = vsub.s32 3, %v1919
    %v1921 = vrot.slane %v54, %v1920
    %v1922 = vlaneseq
    %v1923 = vshrl.u32 %v1922, 7
    %v1924 = vsub.s32 7, %v1923
    %v1925 = vrot.slane %v54, %v1924
    %v1930 = vlaneseq
    %v1931 = vshrl.u32 %v1930, 7
    %v1932 = vsub.s32 3, %v1931
    %v1933 = vrot.slane %v1913, %v1932
    %v1934 = vlaneseq
    %v1935 = vshrl.u32 %v1934, 7
    %v1936 = vsub.s32 3, %v1935
    %v1937 = vrot.slane %v1917, %v1936
    %v1938 = vlaneseq
    %v1939 = vshrl.u32 %v1938, 7
    %v1940 = vsub.s32 3, %v1939
    %v1941 = vrot.slane %v1921, %v1940
    %v1942 = vlaneseq
    %v1943 = vshrl.u32 %v1942, 7
    %v1944 = vsub.s32 3, %v1943
    %v1945 = vrot.slane %v1925, %v1944
    %v1946 = vmul.f32 %v1902, %v1933
    %v1947 = vmul.f32 %v1898, %v1937
    %v1948 = vmul.f32 %v1894, %v1941
    %v1949 = vmul.f32 %v1906, %v1945
    %v1950 = vmul.f32 %v1903, %v1933
    %v1951 = vmul.f32 %v1899, %v1937
    %v1952 = vmul.f32 %v1895, %v1941
    %v1953 = vmul.f32 %v1907, %v1945
    %v1954 = vmul.f32 %v1904, %v1933
    %v1955 = vmul.f32 %v1900, %v1937
    %v1956 = vmul.f32 %v1896, %v1941
    %v1957 = vmul.f32 %v1908, %v1945
    %v1958 = vmul.f32 %v1905, %v1933
    %v1959 = vmul.f32 %v1901, %v1937
    %v1960 = vmul.f32 %v1897, %v1941
    %v1961 = vmul.f32 %v1909, %v1945
    %v1962 = vadd.f32 %v1650, %v1946
    %v1963 = vadd.f32 %v1651, %v1947
    %v1964 = vadd.f32 %v1652, %v1948
    %v1965 = vadd.f32 %v1653, %v1949
    %v1966 = vadd.f32 %v1654, %v1950
    %v1967 = vadd.f32 %v1655, %v1951
    %v1968 = vadd.f32 %v1656, %v1952
    %v1969 = vadd.f32 %v1657, %v1953
    %v1970 = vadd.f32 %v1658, %v1954
    %v1971 = vadd.f32 %v1659, %v1955
    %v1972 = vadd.f32 %v1660, %v1956
    %v1973 = vadd.f32 %v1661, %v1957
    %v1974 = vadd.f32 %v1662, %v1958
    %v1975 = vadd.f32 %v1663, %v1959
    %v1976 = vadd.f32 %v1664, %v1960
    %v1977 = vadd.f32 %v1665, %v1961
    %s1978 = scalar_lea.vmem %s6, 192
    %v1979 = vld [vmem:[%s1978] sm:$0xff]
    %v1980 = vld [vmem:[%s1978 + $0x8] sm:$0xff]
    %v1981 = vld [vmem:[%s1978 + $0x10] sm:$0xff]
    %v1982 = vld [vmem:[%s1978 + $0x18] sm:$0xff]
    %v1984 = vsel %vm195, %v1979, 0
    %v1987 = vsel %vm195, %v1980, 0
    %v1990 = vsel %vm195, %v1981, 0
    %v1993 = vsel %vm195, %v1982, 0
    %1995 = vmatprep.subr.mxu0 0.0
    %1996 = vmatpush1.msra.mxu0 0.0
    %1997 = vmatprep.subr.mxu0 0.0
    %1998 = vmatpush1.msra.mxu0 0.0
    %1999 = vmatprep.subr.mxu0 0.0
    %2000 = vmatpush1.msra.mxu0 0.0
    %2001 = vmatprep.subr.mxu0 0.0
    %2002 = vmatpush1.msra.mxu0 0.0
    %2003 = vmatprep.subr.mxu0 0.0
    %2004 = vmatpush1.msra.mxu0 0.0
    %2005 = vmatprep.subr.mxu0 0.0
    %2006 = vmatpush1.msra.mxu0 0.0
    %2007 = vmatprep.subr.mxu0 0.0
    %2008 = vmatpush1.msra.mxu0 0.0
    %2009 = vmatprep.subr.mxu0 0.0
    %2010 = vmatpush1.msra.mxu0 0.0
    %2011 = vmatprep.subr.mxu0 0.0
    %2012 = vmatpush1.msra.mxu0 0.0
    %2013 = vmatprep.subr.mxu0 0.0
    %2014 = vmatpush1.msra.mxu0 0.0
    %2015 = vmatprep.subr.mxu0 0.0
    %2016 = vmatpush1.msra.mxu0 0.0
    %2017 = vmatprep.subr.mxu0 0.0
    %2018 = vmatpush1.msra.mxu0 0.0
    %2019 = vmatprep.subr.mxu0 0.0
    %2020 = vmatpush1.msra.mxu0 0.0
    %2021 = vmatprep.subr.mxu0 0.0
    %2022 = vmatpush1.msra.mxu0 0.0
    %2023 = vmatprep.subr.mxu0 0.0
    %2024 = vmatpush1.msra.mxu0 0.0
    %2025 = vmatprep.subr.mxu0 %v210
    %2026 = vmatpush1.msra.mxu0 %v208
    %2027 = vmatprep.subr.mxu0 0.0
    %2028 = vmatpush2.msra.mxu0 0.0
    %2029 = vmatprep.subr.mxu0 0.0
    %2030 = vmatpush2.msra.mxu0 0.0
    %2031 = vmatprep.subr.mxu0 0.0
    %2032 = vmatpush2.msra.mxu0 0.0
    %2033 = vmatprep.subr.mxu0 0.0
    %2034 = vmatpush2.msra.mxu0 0.0
    %2035 = vmatprep.subr.mxu0 0.0
    %2036 = vmatpush2.msra.mxu0 0.0
    %2037 = vmatprep.subr.mxu0 0.0
    %2038 = vmatpush2.msra.mxu0 0.0
    %2039 = vmatprep.subr.mxu0 0.0
    %2040 = vmatpush2.msra.mxu0 0.0
    %2041 = vmatprep.subr.mxu0 0.0
    %2042 = vmatpush2.msra.mxu0 0.0
    %2043 = vmatprep.subr.mxu0 0.0
    %2044 = vmatpush2.msra.mxu0 0.0
    %2045 = vmatprep.subr.mxu0 0.0
    %2046 = vmatpush2.msra.mxu0 0.0
    %2047 = vmatprep.subr.mxu0 0.0
    %2048 = vmatpush2.msra.mxu0 0.0
    %2049 = vmatprep.subr.mxu0 0.0
    %2050 = vmatpush2.msra.mxu0 0.0
    %2051 = vmatprep.subr.mxu0 0.0
    %2052 = vmatpush2.msra.mxu0 0.0
    %2053 = vmatprep.subr.mxu0 0.0
    %2054 = vmatpush2.msra.mxu0 0.0
    %2055 = vmatprep.subr.mxu0 0.0
    %2056 = vmatpush2.msra.mxu0 0.0
    %2057 = vmatprep.subr.mxu0 0.0
    %2058 = vmatpush2.msra.mxu0 0.0
    %2059 = vmatprep.mubr.f32.mxu0 0.0
    %2060 = vmatmul.mubr.f32.gmra.mxu0 %v1984
    %v2061 = vpop.f32.mrf.mxu0
    %v2062 = vadd.f32 0.0, %v2061
    %v2063 = vpop.f32.mrf.mxu0
    %v2064 = vadd.f32 0.0, %v2063
    %2065 = vmatprep.mubr.f32.mxu0 0.0
    %2066 = vmatmul.mubr.f32.gmra.mxu0 %v1987
    %v2067 = vpop.f32.mrf.mxu0
    %v2068 = vadd.f32 0.0, %v2067
    %v2069 = vpop.f32.mrf.mxu0
    %v2070 = vadd.f32 0.0, %v2069
    %2071 = vmatprep.mubr.f32.mxu0 0.0
    %2072 = vmatmul.mubr.f32.gmra.mxu0 %v1990
    %v2073 = vpop.f32.mrf.mxu0
    %v2074 = vadd.f32 0.0, %v2073
    %v2075 = vpop.f32.mrf.mxu0
    %v2076 = vadd.f32 0.0, %v2075
    %2077 = vmatprep.mubr.f32.mxu0 0.0
    %2078 = vmatmul.mubr.f32.gmra.mxu0 %v1993
    %v2079 = vpop.f32.mrf.mxu0
    %v2080 = vadd.f32 0.0, %v2079
    %v2081 = vpop.f32.mrf.mxu0
    %v2082 = vadd.f32 0.0, %v2081
    %2083 = vdwg.mxu0
    %2084 = vmatprep.subr.mxu0 0.0
    %2085 = vmatpush1.msra.mxu0 0.0
    %2086 = vmatprep.subr.mxu0 0.0
    %2087 = vmatpush1.msra.mxu0 0.0
    %2088 = vmatprep.subr.mxu0 0.0
    %2089 = vmatpush1.msra.mxu0 0.0
    %2090 = vmatprep.subr.mxu0 0.0
    %2091 = vmatpush1.msra.mxu0 0.0
    %2092 = vmatprep.subr.mxu0 0.0
    %2093 = vmatpush1.msra.mxu0 0.0
    %2094 = vmatprep.subr.mxu0 0.0
    %2095 = vmatpush1.msra.mxu0 0.0
    %2096 = vmatprep.subr.mxu0 0.0
    %2097 = vmatpush1.msra.mxu0 0.0
    %2098 = vmatprep.subr.mxu0 0.0
    %2099 = vmatpush1.msra.mxu0 0.0
    %2100 = vmatprep.subr.mxu0 0.0
    %2101 = vmatpush1.msra.mxu0 0.0
    %2102 = vmatprep.subr.mxu0 0.0
    %2103 = vmatpush1.msra.mxu0 0.0
    %2104 = vmatprep.subr.mxu0 0.0
    %2105 = vmatpush1.msra.mxu0 0.0
    %2106 = vmatprep.subr.mxu0 0.0
    %2107 = vmatpush1.msra.mxu0 0.0
    %2108 = vmatprep.subr.mxu0 0.0
    %2109 = vmatpush1.msra.mxu0 0.0
    %2110 = vmatprep.subr.mxu0 0.0
    %2111 = vmatpush1.msra.mxu0 0.0
    %2112 = vmatprep.subr.mxu0 0.0
    %2113 = vmatpush1.msra.mxu0 0.0
    %2114 = vmatprep.subr.mxu0 %v214
    %2115 = vmatpush1.msra.mxu0 %v212
    %2116 = vmatprep.subr.mxu0 0.0
    %2117 = vmatpush2.msra.mxu0 0.0
    %2118 = vmatprep.subr.mxu0 0.0
    %2119 = vmatpush2.msra.mxu0 0.0
    %2120 = vmatprep.subr.mxu0 0.0
    %2121 = vmatpush2.msra.mxu0 0.0
    %2122 = vmatprep.subr.mxu0 0.0
    %2123 = vmatpush2.msra.mxu0 0.0
    %2124 = vmatprep.subr.mxu0 0.0
    %2125 = vmatpush2.msra.mxu0 0.0
    %2126 = vmatprep.subr.mxu0 0.0
    %2127 = vmatpush2.msra.mxu0 0.0
    %2128 = vmatprep.subr.mxu0 0.0
    %2129 = vmatpush2.msra.mxu0 0.0
    %2130 = vmatprep.subr.mxu0 0.0
    %2131 = vmatpush2.msra.mxu0 0.0
    %2132 = vmatprep.subr.mxu0 0.0
    %2133 = vmatpush2.msra.mxu0 0.0
    %2134 = vmatprep.subr.mxu0 0.0
    %2135 = vmatpush2.msra.mxu0 0.0
    %2136 = vmatprep.subr.mxu0 0.0
    %2137 = vmatpush2.msra.mxu0 0.0
    %2138 = vmatprep.subr.mxu0 0.0
    %2139 = vmatpush2.msra.mxu0 0.0
    %2140 = vmatprep.subr.mxu0 0.0
    %2141 = vmatpush2.msra.mxu0 0.0
    %2142 = vmatprep.subr.mxu0 0.0
    %2143 = vmatpush2.msra.mxu0 0.0
    %2144 = vmatprep.subr.mxu0 0.0
    %2145 = vmatpush2.msra.mxu0 0.0
    %2146 = vmatprep.subr.mxu0 0.0
    %2147 = vmatpush2.msra.mxu0 0.0
    %2148 = vmatprep.mubr.f32.mxu0 0.0
    %2149 = vmatmul.mubr.f32.gmra.mxu0 %v1984
    %v2150 = vpop.f32.mrf.mxu0
    %v2151 = vadd.f32 0.0, %v2150
    %v2152 = vpop.f32.mrf.mxu0
    %v2153 = vadd.f32 0.0, %v2152
    %2154 = vmatprep.mubr.f32.mxu0 0.0
    %2155 = vmatmul.mubr.f32.gmra.mxu0 %v1987
    %v2156 = vpop.f32.mrf.mxu0
    %v2157 = vadd.f32 0.0, %v2156
    %v2158 = vpop.f32.mrf.mxu0
    %v2159 = vadd.f32 0.0, %v2158
    %2160 = vmatprep.mubr.f32.mxu0 0.0
    %2161 = vmatmul.mubr.f32.gmra.mxu0 %v1990
    %v2162 = vpop.f32.mrf.mxu0
    %v2163 = vadd.f32 0.0, %v2162
    %v2164 = vpop.f32.mrf.mxu0
    %v2165 = vadd.f32 0.0, %v2164
    %2166 = vmatprep.mubr.f32.mxu0 0.0
    %2167 = vmatmul.mubr.f32.gmra.mxu0 %v1993
    %v2168 = vpop.f32.mrf.mxu0
    %v2169 = vadd.f32 0.0, %v2168
    %v2170 = vpop.f32.mrf.mxu0
    %v2171 = vadd.f32 0.0, %v2170
    %2172 = vdwg.mxu0
    %2173 = vrot.lane.b32.xlu0 %v2062, 113
    %v2174 = vpop.permute.xlu0 %2173
    %2175 = vrot.lane.b32.xlu0 %v2068, 113
    %v2176 = vpop.permute.xlu0 %2175
    %2177 = vrot.lane.b32.xlu0 %v2074, 113
    %v2178 = vpop.permute.xlu0 %2177
    %2179 = vrot.lane.b32.xlu0 %v2080, 113
    %v2180 = vpop.permute.xlu0 %2179
    %2181 = vrot.lane.b32.xlu0 %v2064, 113
    %v2182 = vpop.permute.xlu0 %2181
    %2183 = vrot.lane.b32.xlu0 %v2070, 113
    %v2184 = vpop.permute.xlu0 %2183
    %2185 = vrot.lane.b32.xlu0 %v2076, 113
    %v2186 = vpop.permute.xlu0 %2185
    %2187 = vrot.lane.b32.xlu0 %v2082, 113
    %v2188 = vpop.permute.xlu0 %2187
    %2189 = vrot.lane.b32.xlu0 %v2151, 113
    %v2190 = vpop.permute.xlu0 %2189
    %2191 = vrot.lane.b32.xlu0 %v2157, 113
    %v2192 = vpop.permute.xlu0 %2191
    %2193 = vrot.lane.b32.xlu0 %v2163, 113
    %v2194 = vpop.permute.xlu0 %2193
    %2195 = vrot.lane.b32.xlu0 %v2169, 113
    %v2196 = vpop.permute.xlu0 %2195
    %2197 = vrot.lane.b32.xlu0 %v2153, 113
    %v2198 = vpop.permute.xlu0 %2197
    %2199 = vrot.lane.b32.xlu0 %v2159, 113
    %v2200 = vpop.permute.xlu0 %2199
    %2201 = vrot.lane.b32.xlu0 %v2165, 113
    %v2202 = vpop.permute.xlu0 %2201
    %2203 = vrot.lane.b32.xlu0 %v2171, 113
    %v2204 = vpop.permute.xlu0 %2203
    %vm2205 = vcmp.lt.s32.totalorder %v427, 113
    %v2206 = vsel %vm2205, %v2190, %v2198
    %v2207 = vsel %vm2205, %v2192, %v2200
    %v2208 = vsel %vm2205, %v2194, %v2202
    %v2209 = vsel %vm2205, %v2196, %v2204
    %v2210 = vsel %vm2205, %v2182, %v2190
    %v2211 = vsel %vm2205, %v2184, %v2192
    %v2212 = vsel %vm2205, %v2186, %v2194
    %v2213 = vsel %vm2205, %v2188, %v2196
    %v2214 = vsel %vm2205, %v2174, %v2182
    %v2215 = vsel %vm2205, %v2176, %v2184
    %v2216 = vsel %vm2205, %v2178, %v2186
    %v2217 = vsel %vm2205, %v2180, %v2188
    %v2218 = vsel %vm2205, %v2198, %v2174
    %v2219 = vsel %vm2205, %v2200, %v2176
    %v2220 = vsel %vm2205, %v2202, %v2178
    %v2221 = vsel %vm2205, %v2204, %v2180
    %v2222 = vrot.slane %v53, 5
    %v2223 = vrot.slane %v2222, 4
    %v2224 = vrot.slane %v54, 5
    %v2225 = vrot.slane %v2224, 4
    %v2228 = vmul.f32 %v53, %v2223
    %v2229 = vmul.f32 %v54, %v2225
    %v2232 = vlaneseq
    %v2233 = vshrl.u32 %v2232, 7
    %v2234 = vsub.s32 1, %v2233
    %v2235 = vrot.slane %v2228, %v2234
    %v2236 = vlaneseq
    %v2237 = vshrl.u32 %v2236, 7
    %v2238 = vsub.s32 5, %v2237
    %v2239 = vrot.slane %v2228, %v2238
    %v2240 = vlaneseq
    %v2241 = vshrl.u32 %v2240, 7
    %v2242 = vsub.s32 1, %v2241
    %v2243 = vrot.slane %v2229, %v2242
    %v2244 = vlaneseq
    %v2245 = vshrl.u32 %v2244, 7
    %v2246 = vsub.s32 5, %v2245
    %v2247 = vrot.slane %v2229, %v2246
    %v2252 = vlaneseq
    %v2253 = vshrl.u32 %v2252, 7
    %v2254 = vsub.s32 1, %v2253
    %v2255 = vrot.slane %v2235, %v2254
    %v2256 = vlaneseq
    %v2257 = vshrl.u32 %v2256, 7
    %v2258 = vsub.s32 1, %v2257
    %v2259 = vrot.slane %v2239, %v2258
    %v2260 = vlaneseq
    %v2261 = vshrl.u32 %v2260, 7
    %v2262 = vsub.s32 1, %v2261
    %v2263 = vrot.slane %v2243, %v2262
    %v2264 = vlaneseq
    %v2265 = vshrl.u32 %v2264, 7
    %v2266 = vsub.s32 1, %v2265
    %v2267 = vrot.slane %v2247, %v2266
    %v2268 = vmul.f32 %v2214, %v2255
    %v2269 = vmul.f32 %v2210, %v2259
    %v2270 = vmul.f32 %v2206, %v2263
    %v2271 = vmul.f32 %v2218, %v2267
    %v2272 = vmul.f32 %v2215, %v2255
    %v2273 = vmul.f32 %v2211, %v2259
    %v2274 = vmul.f32 %v2207, %v2263
    %v2275 = vmul.f32 %v2219, %v2267
    %v2276 = vmul.f32 %v2216, %v2255
    %v2277 = vmul.f32 %v2212, %v2259
    %v2278 = vmul.f32 %v2208, %v2263
    %v2279 = vmul.f32 %v2220, %v2267
    %v2280 = vmul.f32 %v2217, %v2255
    %v2281 = vmul.f32 %v2213, %v2259
    %v2282 = vmul.f32 %v2209, %v2263
    %v2283 = vmul.f32 %v2221, %v2267
    %v2284 = vadd.f32 %v1962, %v2268
    %v2285 = vadd.f32 %v1963, %v2269
    %v2286 = vadd.f32 %v1964, %v2270
    %v2287 = vadd.f32 %v1965, %v2271
    %v2288 = vadd.f32 %v1966, %v2272
    %v2289 = vadd.f32 %v1967, %v2273
    %v2290 = vadd.f32 %v1968, %v2274
    %v2291 = vadd.f32 %v1969, %v2275
    %v2292 = vadd.f32 %v1970, %v2276
    %v2293 = vadd.f32 %v1971, %v2277
    %v2294 = vadd.f32 %v1972, %v2278
    %v2295 = vadd.f32 %v1973, %v2279
    %v2296 = vadd.f32 %v1974, %v2280
    %v2297 = vadd.f32 %v1975, %v2281
    %v2298 = vadd.f32 %v1976, %v2282
    %v2299 = vadd.f32 %v1977, %v2283
    %s2300 = scalar_lea.vmem %s6, 224
    %v2301 = vld [vmem:[%s2300] sm:$0xff]
    %v2302 = vld [vmem:[%s2300 + $0x8] sm:$0xff]
    %v2303 = vld [vmem:[%s2300 + $0x10] sm:$0xff]
    %v2304 = vld [vmem:[%s2300 + $0x18] sm:$0xff]
    %v2306 = vsel %vm195, %v2301, 0
    %v2309 = vsel %vm195, %v2302, 0
    %v2312 = vsel %vm195, %v2303, 0
    %v2315 = vsel %vm195, %v2304, 0
    %2317 = vmatprep.subr.mxu0 0.0
    %2318 = vmatpush1.msra.mxu0 0.0
    %2319 = vmatprep.subr.mxu0 0.0
    %2320 = vmatpush1.msra.mxu0 0.0
    %2321 = vmatprep.subr.mxu0 0.0
    %2322 = vmatpush1.msra.mxu0 0.0
    %2323 = vmatprep.subr.mxu0 0.0
    %2324 = vmatpush1.msra.mxu0 0.0
    %2325 = vmatprep.subr.mxu0 0.0
    %2326 = vmatpush1.msra.mxu0 0.0
    %2327 = vmatprep.subr.mxu0 0.0
    %2328 = vmatpush1.msra.mxu0 0.0
    %2329 = vmatprep.subr.mxu0 0.0
    %2330 = vmatpush1.msra.mxu0 0.0
    %2331 = vmatprep.subr.mxu0 0.0
    %2332 = vmatpush1.msra.mxu0 0.0
    %2333 = vmatprep.subr.mxu0 0.0
    %2334 = vmatpush1.msra.mxu0 0.0
    %2335 = vmatprep.subr.mxu0 0.0
    %2336 = vmatpush1.msra.mxu0 0.0
    %2337 = vmatprep.subr.mxu0 0.0
    %2338 = vmatpush1.msra.mxu0 0.0
    %2339 = vmatprep.subr.mxu0 0.0
    %2340 = vmatpush1.msra.mxu0 0.0
    %2341 = vmatprep.subr.mxu0 0.0
    %2342 = vmatpush1.msra.mxu0 0.0
    %2343 = vmatprep.subr.mxu0 0.0
    %2344 = vmatpush1.msra.mxu0 0.0
    %2345 = vmatprep.subr.mxu0 0.0
    %2346 = vmatpush1.msra.mxu0 0.0
    %2347 = vmatprep.subr.mxu0 %v210
    %2348 = vmatpush1.msra.mxu0 %v208
    %2349 = vmatprep.subr.mxu0 0.0
    %2350 = vmatpush2.msra.mxu0 0.0
    %2351 = vmatprep.subr.mxu0 0.0
    %2352 = vmatpush2.msra.mxu0 0.0
    %2353 = vmatprep.subr.mxu0 0.0
    %2354 = vmatpush2.msra.mxu0 0.0
    %2355 = vmatprep.subr.mxu0 0.0
    %2356 = vmatpush2.msra.mxu0 0.0
    %2357 = vmatprep.subr.mxu0 0.0
    %2358 = vmatpush2.msra.mxu0 0.0
    %2359 = vmatprep.subr.mxu0 0.0
    %2360 = vmatpush2.msra.mxu0 0.0
    %2361 = vmatprep.subr.mxu0 0.0
    %2362 = vmatpush2.msra.mxu0 0.0
    %2363 = vmatprep.subr.mxu0 0.0
    %2364 = vmatpush2.msra.mxu0 0.0
    %2365 = vmatprep.subr.mxu0 0.0
    %2366 = vmatpush2.msra.mxu0 0.0
    %2367 = vmatprep.subr.mxu0 0.0
    %2368 = vmatpush2.msra.mxu0 0.0
    %2369 = vmatprep.subr.mxu0 0.0
    %2370 = vmatpush2.msra.mxu0 0.0
    %2371 = vmatprep.subr.mxu0 0.0
    %2372 = vmatpush2.msra.mxu0 0.0
    %2373 = vmatprep.subr.mxu0 0.0
    %2374 = vmatpush2.msra.mxu0 0.0
    %2375 = vmatprep.subr.mxu0 0.0
    %2376 = vmatpush2.msra.mxu0 0.0
    %2377 = vmatprep.subr.mxu0 0.0
    %2378 = vmatpush2.msra.mxu0 0.0
    %2379 = vmatprep.subr.mxu0 0.0
    %2380 = vmatpush2.msra.mxu0 0.0
    %2381 = vmatprep.mubr.f32.mxu0 0.0
    %2382 = vmatmul.mubr.f32.gmra.mxu0 %v2306
    %v2383 = vpop.f32.mrf.mxu0
    %v2384 = vadd.f32 0.0, %v2383
    %v2385 = vpop.f32.mrf.mxu0
    %v2386 = vadd.f32 0.0, %v2385
    %2387 = vmatprep.mubr.f32.mxu0 0.0
    %2388 = vmatmul.mubr.f32.gmra.mxu0 %v2309
    %v2389 = vpop.f32.mrf.mxu0
    %v2390 = vadd.f32 0.0, %v2389
    %v2391 = vpop.f32.mrf.mxu0
    %v2392 = vadd.f32 0.0, %v2391
    %2393 = vmatprep.mubr.f32.mxu0 0.0
    %2394 = vmatmul.mubr.f32.gmra.mxu0 %v2312
    %v2395 = vpop.f32.mrf.mxu0
    %v2396 = vadd.f32 0.0, %v2395
    %v2397 = vpop.f32.mrf.mxu0
    %v2398 = vadd.f32 0.0, %v2397
    %2399 = vmatprep.mubr.f32.mxu0 0.0
    %2400 = vmatmul.mubr.f32.gmra.mxu0 %v2315
    %v2401 = vpop.f32.mrf.mxu0
    %v2402 = vadd.f32 0.0, %v2401
    %v2403 = vpop.f32.mrf.mxu0
    %v2404 = vadd.f32 0.0, %v2403
    %2405 = vdwg.mxu0
    %2406 = vmatprep.subr.mxu0 0.0
    %2407 = vmatpush1.msra.mxu0 0.0
    %2408 = vmatprep.subr.mxu0 0.0
    %2409 = vmatpush1.msra.mxu0 0.0
    %2410 = vmatprep.subr.mxu0 0.0
    %2411 = vmatpush1.msra.mxu0 0.0
    %2412 = vmatprep.subr.mxu0 0.0
    %2413 = vmatpush1.msra.mxu0 0.0
    %2414 = vmatprep.subr.mxu0 0.0
    %2415 = vmatpush1.msra.mxu0 0.0
    %2416 = vmatprep.subr.mxu0 0.0
    %2417 = vmatpush1.msra.mxu0 0.0
    %2418 = vmatprep.subr.mxu0 0.0
    %2419 = vmatpush1.msra.mxu0 0.0
    %2420 = vmatprep.subr.mxu0 0.0
    %2421 = vmatpush1.msra.mxu0 0.0
    %2422 = vmatprep.subr.mxu0 0.0
    %2423 = vmatpush1.msra.mxu0 0.0
    %2424 = vmatprep.subr.mxu0 0.0
    %2425 = vmatpush1.msra.mxu0 0.0
    %2426 = vmatprep.subr.mxu0 0.0
    %2427 = vmatpush1.msra.mxu0 0.0
    %2428 = vmatprep.subr.mxu0 0.0
    %2429 = vmatpush1.msra.mxu0 0.0
    %2430 = vmatprep.subr.mxu0 0.0
    %2431 = vmatpush1.msra.mxu0 0.0
    %2432 = vmatprep.subr.mxu0 0.0
    %2433 = vmatpush1.msra.mxu0 0.0
    %2434 = vmatprep.subr.mxu0 0.0
    %2435 = vmatpush1.msra.mxu0 0.0
    %2436 = vmatprep.subr.mxu0 %v214
    %2437 = vmatpush1.msra.mxu0 %v212
    %2438 = vmatprep.subr.mxu0 0.0
    %2439 = vmatpush2.msra.mxu0 0.0
    %2440 = vmatprep.subr.mxu0 0.0
    %2441 = vmatpush2.msra.mxu0 0.0
    %2442 = vmatprep.subr.mxu0 0.0
    %2443 = vmatpush2.msra.mxu0 0.0
    %2444 = vmatprep.subr.mxu0 0.0
    %2445 = vmatpush2.msra.mxu0 0.0
    %2446 = vmatprep.subr.mxu0 0.0
    %2447 = vmatpush2.msra.mxu0 0.0
    %2448 = vmatprep.subr.mxu0 0.0
    %2449 = vmatpush2.msra.mxu0 0.0
    %2450 = vmatprep.subr.mxu0 0.0
    %2451 = vmatpush2.msra.mxu0 0.0
    %2452 = vmatprep.subr.mxu0 0.0
    %2453 = vmatpush2.msra.mxu0 0.0
    %2454 = vmatprep.subr.mxu0 0.0
    %2455 = vmatpush2.msra.mxu0 0.0
    %2456 = vmatprep.subr.mxu0 0.0
    %2457 = vmatpush2.msra.mxu0 0.0
    %2458 = vmatprep.subr.mxu0 0.0
    %2459 = vmatpush2.msra.mxu0 0.0
    %2460 = vmatprep.subr.mxu0 0.0
    %2461 = vmatpush2.msra.mxu0 0.0
    %2462 = vmatprep.subr.mxu0 0.0
    %2463 = vmatpush2.msra.mxu0 0.0
    %2464 = vmatprep.subr.mxu0 0.0
    %2465 = vmatpush2.msra.mxu0 0.0
    %2466 = vmatprep.subr.mxu0 0.0
    %2467 = vmatpush2.msra.mxu0 0.0
    %2468 = vmatprep.subr.mxu0 0.0
    %2469 = vmatpush2.msra.mxu0 0.0
    %2470 = vmatprep.mubr.f32.mxu0 0.0
    %2471 = vmatmul.mubr.f32.gmra.mxu0 %v2306
    %v2472 = vpop.f32.mrf.mxu0
    %v2473 = vadd.f32 0.0, %v2472
    %v2474 = vpop.f32.mrf.mxu0
    %v2475 = vadd.f32 0.0, %v2474
    %2476 = vmatprep.mubr.f32.mxu0 0.0
    %2477 = vmatmul.mubr.f32.gmra.mxu0 %v2309
    %v2478 = vpop.f32.mrf.mxu0
    %v2479 = vadd.f32 0.0, %v2478
    %v2480 = vpop.f32.mrf.mxu0
    %v2481 = vadd.f32 0.0, %v2480
    %2482 = vmatprep.mubr.f32.mxu0 0.0
    %2483 = vmatmul.mubr.f32.gmra.mxu0 %v2312
    %v2484 = vpop.f32.mrf.mxu0
    %v2485 = vadd.f32 0.0, %v2484
    %v2486 = vpop.f32.mrf.mxu0
    %v2487 = vadd.f32 0.0, %v2486
    %2488 = vmatprep.mubr.f32.mxu0 0.0
    %2489 = vmatmul.mubr.f32.gmra.mxu0 %v2315
    %v2490 = vpop.f32.mrf.mxu0
    %v2491 = vadd.f32 0.0, %v2490
    %v2492 = vpop.f32.mrf.mxu0
    %v2493 = vadd.f32 0.0, %v2492
    %2494 = vdwg.mxu0
    %2495 = vrot.lane.b32.xlu0 %v2384, 112
    %v2496 = vpop.permute.xlu0 %2495
    %2497 = vrot.lane.b32.xlu0 %v2390, 112
    %v2498 = vpop.permute.xlu0 %2497
    %2499 = vrot.lane.b32.xlu0 %v2396, 112
    %v2500 = vpop.permute.xlu0 %2499
    %2501 = vrot.lane.b32.xlu0 %v2402, 112
    %v2502 = vpop.permute.xlu0 %2501
    %2503 = vrot.lane.b32.xlu0 %v2386, 112
    %v2504 = vpop.permute.xlu0 %2503
    %2505 = vrot.lane.b32.xlu0 %v2392, 112
    %v2506 = vpop.permute.xlu0 %2505
    %2507 = vrot.lane.b32.xlu0 %v2398, 112
    %v2508 = vpop.permute.xlu0 %2507
    %2509 = vrot.lane.b32.xlu0 %v2404, 112
    %v2510 = vpop.permute.xlu0 %2509
    %2511 = vrot.lane.b32.xlu0 %v2473, 112
    %v2512 = vpop.permute.xlu0 %2511
    %2513 = vrot.lane.b32.xlu0 %v2479, 112
    %v2514 = vpop.permute.xlu0 %2513
    %2515 = vrot.lane.b32.xlu0 %v2485, 112
    %v2516 = vpop.permute.xlu0 %2515
    %2517 = vrot.lane.b32.xlu0 %v2491, 112
    %v2518 = vpop.permute.xlu0 %2517
    %2519 = vrot.lane.b32.xlu0 %v2475, 112
    %v2520 = vpop.permute.xlu0 %2519
    %2521 = vrot.lane.b32.xlu0 %v2481, 112
    %v2522 = vpop.permute.xlu0 %2521
    %2523 = vrot.lane.b32.xlu0 %v2487, 112
    %v2524 = vpop.permute.xlu0 %2523
    %2525 = vrot.lane.b32.xlu0 %v2493, 112
    %v2526 = vpop.permute.xlu0 %2525
    %vm2527 = vcmp.lt.s32.totalorder %v427, 112
    %v2528 = vsel %vm2527, %v2512, %v2520
    %v2529 = vsel %vm2527, %v2514, %v2522
    %v2530 = vsel %vm2527, %v2516, %v2524
    %v2531 = vsel %vm2527, %v2518, %v2526
    %v2532 = vsel %vm2527, %v2504, %v2512
    %v2533 = vsel %vm2527, %v2506, %v2514
    %v2534 = vsel %vm2527, %v2508, %v2516
    %v2535 = vsel %vm2527, %v2510, %v2518
    %v2536 = vsel %vm2527, %v2496, %v2504
    %v2537 = vsel %vm2527, %v2498, %v2506
    %v2538 = vsel %vm2527, %v2500, %v2508
    %v2539 = vsel %vm2527, %v2502, %v2510
    %v2540 = vsel %vm2527, %v2520, %v2496
    %v2541 = vsel %vm2527, %v2522, %v2498
    %v2542 = vsel %vm2527, %v2524, %v2500
    %v2543 = vsel %vm2527, %v2526, %v2502
    %v2544 = vlaneseq
    %v2545 = vshrl.u32 %v2544, 7
    %v2546 = vsub.s32 1, %v2545
    %v2547 = vrot.slane %v53, %v2546
    %v2548 = vlaneseq
    %v2549 = vshrl.u32 %v2548, 7
    %v2550 = vsub.s32 5, %v2549
    %v2551 = vrot.slane %v53, %v2550
    %v2552 = vlaneseq
    %v2553 = vshrl.u32 %v2552, 7
    %v2554 = vsub.s32 1, %v2553
    %v2555 = vrot.slane %v54, %v2554
    %v2556 = vlaneseq
    %v2557 = vshrl.u32 %v2556, 7
    %v2558 = vsub.s32 5, %v2557
    %v2559 = vrot.slane %v54, %v2558
    %v2564 = vlaneseq
    %v2565 = vshrl.u32 %v2564, 7
    %v2566 = vsub.s32 1, %v2565
    %v2567 = vrot.slane %v2547, %v2566
    %v2568 = vlaneseq
    %v2569 = vshrl.u32 %v2568, 7
    %v2570 = vsub.s32 1, %v2569
    %v2571 = vrot.slane %v2551, %v2570
    %v2572 = vlaneseq
    %v2573 = vshrl.u32 %v2572, 7
    %v2574 = vsub.s32 1, %v2573
    %v2575 = vrot.slane %v2555, %v2574
    %v2576 = vlaneseq
    %v2577 = vshrl.u32 %v2576, 7
    %v2578 = vsub.s32 1, %v2577
    %v2579 = vrot.slane %v2559, %v2578
    %v2580 = vmul.f32 %v2536, %v2567
    %v2581 = vmul.f32 %v2532, %v2571
    %v2582 = vmul.f32 %v2528, %v2575
    %v2583 = vmul.f32 %v2540, %v2579
    %v2584 = vmul.f32 %v2537, %v2567
    %v2585 = vmul.f32 %v2533, %v2571
    %v2586 = vmul.f32 %v2529, %v2575
    %v2587 = vmul.f32 %v2541, %v2579
    %v2588 = vmul.f32 %v2538, %v2567
    %v2589 = vmul.f32 %v2534, %v2571
    %v2590 = vmul.f32 %v2530, %v2575
    %v2591 = vmul.f32 %v2542, %v2579
    %v2592 = vmul.f32 %v2539, %v2567
    %v2593 = vmul.f32 %v2535, %v2571
    %v2594 = vmul.f32 %v2531, %v2575
    %v2595 = vmul.f32 %v2543, %v2579
    %v2596 = vadd.f32 %v2284, %v2580
    %v2597 = vadd.f32 %v2285, %v2581
    %v2598 = vadd.f32 %v2286, %v2582
    %v2599 = vadd.f32 %v2287, %v2583
    %v2600 = vadd.f32 %v2288, %v2584
    %v2601 = vadd.f32 %v2289, %v2585
    %v2602 = vadd.f32 %v2290, %v2586
    %v2603 = vadd.f32 %v2291, %v2587
    %v2604 = vadd.f32 %v2292, %v2588
    %v2605 = vadd.f32 %v2293, %v2589
    %v2606 = vadd.f32 %v2294, %v2590
    %v2607 = vadd.f32 %v2295, %v2591
    %v2608 = vadd.f32 %v2296, %v2592
    %v2609 = vadd.f32 %v2297, %v2593
    %v2610 = vadd.f32 %v2298, %v2594
    %v2611 = vadd.f32 %v2299, %v2595
    %s2612 = scalar_lea.vmem %s6, 256
    %v2613 = vld [vmem:[%s2612] sm:$0xff]
    %v2614 = vld [vmem:[%s2612 + $0x8] sm:$0xff]
    %v2615 = vld [vmem:[%s2612 + $0x10] sm:$0xff]
    %v2616 = vld [vmem:[%s2612 + $0x18] sm:$0xff]
    %v2618 = vsel %vm195, %v2613, 0
    %v2621 = vsel %vm195, %v2614, 0
    %v2624 = vsel %vm195, %v2615, 0
    %v2627 = vsel %vm195, %v2616, 0
    %2629 = vmatprep.subr.mxu0 0.0
    %2630 = vmatpush1.msra.mxu0 0.0
    %2631 = vmatprep.subr.mxu0 0.0
    %2632 = vmatpush1.msra.mxu0 0.0
    %2633 = vmatprep.subr.mxu0 0.0
    %2634 = vmatpush1.msra.mxu0 0.0
    %2635 = vmatprep.subr.mxu0 0.0
    %2636 = vmatpush1.msra.mxu0 0.0
    %2637 = vmatprep.subr.mxu0 0.0
    %2638 = vmatpush1.msra.mxu0 0.0
    %2639 = vmatprep.subr.mxu0 0.0
    %2640 = vmatpush1.msra.mxu0 0.0
    %2641 = vmatprep.subr.mxu0 0.0
    %2642 = vmatpush1.msra.mxu0 0.0
    %2643 = vmatprep.subr.mxu0 0.0
    %2644 = vmatpush1.msra.mxu0 0.0
    %2645 = vmatprep.subr.mxu0 0.0
    %2646 = vmatpush1.msra.mxu0 0.0
    %2647 = vmatprep.subr.mxu0 0.0
    %2648 = vmatpush1.msra.mxu0 0.0
    %2649 = vmatprep.subr.mxu0 0.0
    %2650 = vmatpush1.msra.mxu0 0.0
    %2651 = vmatprep.subr.mxu0 0.0
    %2652 = vmatpush1.msra.mxu0 0.0
    %2653 = vmatprep.subr.mxu0 0.0
    %2654 = vmatpush1.msra.mxu0 0.0
    %2655 = vmatprep.subr.mxu0 0.0
    %2656 = vmatpush1.msra.mxu0 0.0
    %2657 = vmatprep.subr.mxu0 0.0
    %2658 = vmatpush1.msra.mxu0 0.0
    %2659 = vmatprep.subr.mxu0 %v210
    %2660 = vmatpush1.msra.mxu0 %v208
    %2661 = vmatprep.subr.mxu0 0.0
    %2662 = vmatpush2.msra.mxu0 0.0
    %2663 = vmatprep.subr.mxu0 0.0
    %2664 = vmatpush2.msra.mxu0 0.0
    %2665 = vmatprep.subr.mxu0 0.0
    %2666 = vmatpush2.msra.mxu0 0.0
    %2667 = vmatprep.subr.mxu0 0.0
    %2668 = vmatpush2.msra.mxu0 0.0
    %2669 = vmatprep.subr.mxu0 0.0
    %2670 = vmatpush2.msra.mxu0 0.0
    %2671 = vmatprep.subr.mxu0 0.0
    %2672 = vmatpush2.msra.mxu0 0.0
    %2673 = vmatprep.subr.mxu0 0.0
    %2674 = vmatpush2.msra.mxu0 0.0
    %2675 = vmatprep.subr.mxu0 0.0
    %2676 = vmatpush2.msra.mxu0 0.0
    %2677 = vmatprep.subr.mxu0 0.0
    %2678 = vmatpush2.msra.mxu0 0.0
    %2679 = vmatprep.subr.mxu0 0.0
    %2680 = vmatpush2.msra.mxu0 0.0
    %2681 = vmatprep.subr.mxu0 0.0
    %2682 = vmatpush2.msra.mxu0 0.0
    %2683 = vmatprep.subr.mxu0 0.0
    %2684 = vmatpush2.msra.mxu0 0.0
    %2685 = vmatprep.subr.mxu0 0.0
    %2686 = vmatpush2.msra.mxu0 0.0
    %2687 = vmatprep.subr.mxu0 0.0
    %2688 = vmatpush2.msra.mxu0 0.0
    %2689 = vmatprep.subr.mxu0 0.0
    %2690 = vmatpush2.msra.mxu0 0.0
    %2691 = vmatprep.subr.mxu0 0.0
    %2692 = vmatpush2.msra.mxu0 0.0
    %2693 = vmatprep.mubr.f32.mxu0 0.0
    %2694 = vmatmul.mubr.f32.gmra.mxu0 %v2618
    %v2695 = vpop.f32.mrf.mxu0
    %v2696 = vadd.f32 0.0, %v2695
    %v2697 = vpop.f32.mrf.mxu0
    %v2698 = vadd.f32 0.0, %v2697
    %2699 = vmatprep.mubr.f32.mxu0 0.0
    %2700 = vmatmul.mubr.f32.gmra.mxu0 %v2621
    %v2701 = vpop.f32.mrf.mxu0
    %v2702 = vadd.f32 0.0, %v2701
    %v2703 = vpop.f32.mrf.mxu0
    %v2704 = vadd.f32 0.0, %v2703
    %2705 = vmatprep.mubr.f32.mxu0 0.0
    %2706 = vmatmul.mubr.f32.gmra.mxu0 %v2624
    %v2707 = vpop.f32.mrf.mxu0
    %v2708 = vadd.f32 0.0, %v2707
    %v2709 = vpop.f32.mrf.mxu0
    %v2710 = vadd.f32 0.0, %v2709
    %2711 = vmatprep.mubr.f32.mxu0 0.0
    %2712 = vmatmul.mubr.f32.gmra.mxu0 %v2627
    %v2713 = vpop.f32.mrf.mxu0
    %v2714 = vadd.f32 0.0, %v2713
    %v2715 = vpop.f32.mrf.mxu0
    %v2716 = vadd.f32 0.0, %v2715
    %2717 = vdwg.mxu0
    %2718 = vmatprep.subr.mxu0 0.0
    %2719 = vmatpush1.msra.mxu0 0.0
    %2720 = vmatprep.subr.mxu0 0.0
    %2721 = vmatpush1.msra.mxu0 0.0
    %2722 = vmatprep.subr.mxu0 0.0
    %2723 = vmatpush1.msra.mxu0 0.0
    %2724 = vmatprep.subr.mxu0 0.0
    %2725 = vmatpush1.msra.mxu0 0.0
    %2726 = vmatprep.subr.mxu0 0.0
    %2727 = vmatpush1.msra.mxu0 0.0
    %2728 = vmatprep.subr.mxu0 0.0
    %2729 = vmatpush1.msra.mxu0 0.0
    %2730 = vmatprep.subr.mxu0 0.0
    %2731 = vmatpush1.msra.mxu0 0.0
    %2732 = vmatprep.subr.mxu0 0.0
    %2733 = vmatpush1.msra.mxu0 0.0
    %2734 = vmatprep.subr.mxu0 0.0
    %2735 = vmatpush1.msra.mxu0 0.0
    %2736 = vmatprep.subr.mxu0 0.0
    %2737 = vmatpush1.msra.mxu0 0.0
    %2738 = vmatprep.subr.mxu0 0.0
    %2739 = vmatpush1.msra.mxu0 0.0
    %2740 = vmatprep.subr.mxu0 0.0
    %2741 = vmatpush1.msra.mxu0 0.0
    %2742 = vmatprep.subr.mxu0 0.0
    %2743 = vmatpush1.msra.mxu0 0.0
    %2744 = vmatprep.subr.mxu0 0.0
    %2745 = vmatpush1.msra.mxu0 0.0
    %2746 = vmatprep.subr.mxu0 0.0
    %2747 = vmatpush1.msra.mxu0 0.0
    %2748 = vmatprep.subr.mxu0 %v214
    %2749 = vmatpush1.msra.mxu0 %v212
    %2750 = vmatprep.subr.mxu0 0.0
    %2751 = vmatpush2.msra.mxu0 0.0
    %2752 = vmatprep.subr.mxu0 0.0
    %2753 = vmatpush2.msra.mxu0 0.0
    %2754 = vmatprep.subr.mxu0 0.0
    %2755 = vmatpush2.msra.mxu0 0.0
    %2756 = vmatprep.subr.mxu0 0.0
    %2757 = vmatpush2.msra.mxu0 0.0
    %2758 = vmatprep.subr.mxu0 0.0
    %2759 = vmatpush2.msra.mxu0 0.0
    %2760 = vmatprep.subr.mxu0 0.0
    %2761 = vmatpush2.msra.mxu0 0.0
    %2762 = vmatprep.subr.mxu0 0.0
    %2763 = vmatpush2.msra.mxu0 0.0
    %2764 = vmatprep.subr.mxu0 0.0
    %2765 = vmatpush2.msra.mxu0 0.0
    %2766 = vmatprep.subr.mxu0 0.0
    %2767 = vmatpush2.msra.mxu0 0.0
    %2768 = vmatprep.subr.mxu0 0.0
    %2769 = vmatpush2.msra.mxu0 0.0
    %2770 = vmatprep.subr.mxu0 0.0
    %2771 = vmatpush2.msra.mxu0 0.0
    %2772 = vmatprep.subr.mxu0 0.0
    %2773 = vmatpush2.msra.mxu0 0.0
    %2774 = vmatprep.subr.mxu0 0.0
    %2775 = vmatpush2.msra.mxu0 0.0
    %2776 = vmatprep.subr.mxu0 0.0
    %2777 = vmatpush2.msra.mxu0 0.0
    %2778 = vmatprep.subr.mxu0 0.0
    %2779 = vmatpush2.msra.mxu0 0.0
    %2780 = vmatprep.subr.mxu0 0.0
    %2781 = vmatpush2.msra.mxu0 0.0
    %2782 = vmatprep.mubr.f32.mxu0 0.0
    %2783 = vmatmul.mubr.f32.gmra.mxu0 %v2618
    %v2784 = vpop.f32.mrf.mxu0
    %v2785 = vadd.f32 0.0, %v2784
    %v2786 = vpop.f32.mrf.mxu0
    %v2787 = vadd.f32 0.0, %v2786
    %2788 = vmatprep.mubr.f32.mxu0 0.0
    %2789 = vmatmul.mubr.f32.gmra.mxu0 %v2621
    %v2790 = vpop.f32.mrf.mxu0
    %v2791 = vadd.f32 0.0, %v2790
    %v2792 = vpop.f32.mrf.mxu0
    %v2793 = vadd.f32 0.0, %v2792
    %2794 = vmatprep.mubr.f32.mxu0 0.0
    %2795 = vmatmul.mubr.f32.gmra.mxu0 %v2624
    %v2796 = vpop.f32.mrf.mxu0
    %v2797 = vadd.f32 0.0, %v2796
    %v2798 = vpop.f32.mrf.mxu0
    %v2799 = vadd.f32 0.0, %v2798
    %2800 = vmatprep.mubr.f32.mxu0 0.0
    %2801 = vmatmul.mubr.f32.gmra.mxu0 %v2627
    %v2802 = vpop.f32.mrf.mxu0
    %v2803 = vadd.f32 0.0, %v2802
    %v2804 = vpop.f32.mrf.mxu0
    %v2805 = vadd.f32 0.0, %v2804
    %2806 = vdwg.mxu0
    %2807 = vrot.lane.b32.xlu0 %v2696, 111
    %v2808 = vpop.permute.xlu0 %2807
    %2809 = vrot.lane.b32.xlu0 %v2702, 111
    %v2810 = vpop.permute.xlu0 %2809
    %2811 = vrot.lane.b32.xlu0 %v2708, 111
    %v2812 = vpop.permute.xlu0 %2811
    %2813 = vrot.lane.b32.xlu0 %v2714, 111
    %v2814 = vpop.permute.xlu0 %2813
    %2815 = vrot.lane.b32.xlu0 %v2698, 111
    %v2816 = vpop.permute.xlu0 %2815
    %2817 = vrot.lane.b32.xlu0 %v2704, 111
    %v2818 = vpop.permute.xlu0 %2817
    %2819 = vrot.lane.b32.xlu0 %v2710, 111
    %v2820 = vpop.permute.xlu0 %2819
    %2821 = vrot.lane.b32.xlu0 %v2716, 111
    %v2822 = vpop.permute.xlu0 %2821
    %2823 = vrot.lane.b32.xlu0 %v2785, 111
    %v2824 = vpop.permute.xlu0 %2823
    %2825 = vrot.lane.b32.xlu0 %v2791, 111
    %v2826 = vpop.permute.xlu0 %2825
    %2827 = vrot.lane.b32.xlu0 %v2797, 111
    %v2828 = vpop.permute.xlu0 %2827
    %2829 = vrot.lane.b32.xlu0 %v2803, 111
    %v2830 = vpop.permute.xlu0 %2829
    %2831 = vrot.lane.b32.xlu0 %v2787, 111
    %v2832 = vpop.permute.xlu0 %2831
    %2833 = vrot.lane.b32.xlu0 %v2793, 111
    %v2834 = vpop.permute.xlu0 %2833
    %2835 = vrot.lane.b32.xlu0 %v2799, 111
    %v2836 = vpop.permute.xlu0 %2835
    %2837 = vrot.lane.b32.xlu0 %v2805, 111
    %v2838 = vpop.permute.xlu0 %2837
    %vm2839 = vcmp.lt.s32.totalorder %v427, 111
    %v2840 = vsel %vm2839, %v2824, %v2832
    %v2841 = vsel %vm2839, %v2826, %v2834
    %v2842 = vsel %vm2839, %v2828, %v2836
    %v2843 = vsel %vm2839, %v2830, %v2838
    %v2844 = vsel %vm2839, %v2816, %v2824
    %v2845 = vsel %vm2839, %v2818, %v2826
    %v2846 = vsel %vm2839, %v2820, %v2828
    %v2847 = vsel %vm2839, %v2822, %v2830
    %v2848 = vsel %vm2839, %v2808, %v2816
    %v2849 = vsel %vm2839, %v2810, %v2818
    %v2850 = vsel %vm2839, %v2812, %v2820
    %v2851 = vsel %vm2839, %v2814, %v2822
    %v2852 = vsel %vm2839, %v2832, %v2808
    %v2853 = vsel %vm2839, %v2834, %v2810
    %v2854 = vsel %vm2839, %v2836, %v2812
    %v2855 = vsel %vm2839, %v2838, %v2814
    %v2856 = vlaneseq
    %v2857 = vshrl.u32 %v2856, 7
    %v2858 = vsub.s32 1, %v2857
    %v2859 = vrot.slane %v453, %v2858
    %v2860 = vlaneseq
    %v2861 = vshrl.u32 %v2860, 7
    %v2862 = vsub.s32 5, %v2861
    %v2863 = vrot.slane %v453, %v2862
    %v2864 = vlaneseq
    %v2865 = vshrl.u32 %v2864, 7
    %v2866 = vsub.s32 1, %v2865
    %v2867 = vrot.slane %v454, %v2866
    %v2868 = vlaneseq
    %v2869 = vshrl.u32 %v2868, 7
    %v2870 = vsub.s32 5, %v2869
    %v2871 = vrot.slane %v454, %v2870
    %v2876 = vlaneseq
    %v2877 = vshrl.u32 %v2876, 7
    %v2878 = vsub.s32 1, %v2877
    %v2879 = vrot.slane %v2859, %v2878
    %v2880 = vlaneseq
    %v2881 = vshrl.u32 %v2880, 7
    %v2882 = vsub.s32 1, %v2881
    %v2883 = vrot.slane %v2863, %v2882
    %v2884 = vlaneseq
    %v2885 = vshrl.u32 %v2884, 7
    %v2886 = vsub.s32 1, %v2885
    %v2887 = vrot.slane %v2867, %v2886
    %v2888 = vlaneseq
    %v2889 = vshrl.u32 %v2888, 7
    %v2890 = vsub.s32 1, %v2889
    %v2891 = vrot.slane %v2871, %v2890
    %v2892 = vmul.f32 %v2848, %v2879
    %v2893 = vmul.f32 %v2844, %v2883
    %v2894 = vmul.f32 %v2840, %v2887
    %v2895 = vmul.f32 %v2852, %v2891
    %v2896 = vmul.f32 %v2849, %v2879
    %v2897 = vmul.f32 %v2845, %v2883
    %v2898 = vmul.f32 %v2841, %v2887
    %v2899 = vmul.f32 %v2853, %v2891
    %v2900 = vmul.f32 %v2850, %v2879
    %v2901 = vmul.f32 %v2846, %v2883
    %v2902 = vmul.f32 %v2842, %v2887
    %v2903 = vmul.f32 %v2854, %v2891
    %v2904 = vmul.f32 %v2851, %v2879
    %v2905 = vmul.f32 %v2847, %v2883
    %v2906 = vmul.f32 %v2843, %v2887
    %v2907 = vmul.f32 %v2855, %v2891
    %v2908 = vadd.f32 %v2596, %v2892
    %v2909 = vadd.f32 %v2597, %v2893
    %v2910 = vadd.f32 %v2598, %v2894
    %v2911 = vadd.f32 %v2599, %v2895
    %v2912 = vadd.f32 %v2600, %v2896
    %v2913 = vadd.f32 %v2601, %v2897
    %v2914 = vadd.f32 %v2602, %v2898
    %v2915 = vadd.f32 %v2603, %v2899
    %v2916 = vadd.f32 %v2604, %v2900
    %v2917 = vadd.f32 %v2605, %v2901
    %v2918 = vadd.f32 %v2606, %v2902
    %v2919 = vadd.f32 %v2607, %v2903
    %v2920 = vadd.f32 %v2608, %v2904
    %v2921 = vadd.f32 %v2609, %v2905
    %v2922 = vadd.f32 %v2610, %v2906
    %v2923 = vadd.f32 %v2611, %v2907
    %v2924 = vld [vmem:[%s7] sm:$0xff]
    %v2925 = vld [vmem:[%s7 + $0x8] sm:$0xff]
    %v2926 = vld [vmem:[%s7 + $0x10] sm:$0xff]
    %v2927 = vld [vmem:[%s7 + $0x18] sm:$0xff]
    %v2928 = vld [vmem:[%s8] sm:$0xff]
    %v2929 = vld [vmem:[%s8 + $0x8] sm:$0xff]
    %v2930 = vld [vmem:[%s8 + $0x10] sm:$0xff]
    %v2931 = vld [vmem:[%s8 + $0x18] sm:$0xff]
    %v2932 = vadd.f32 %v2908, %v2909
    %v2933 = vadd.f32 %v2932, %v2910
    %v2934 = vadd.f32 %v2933, %v2911
    %2935 = vadd.xlane.f32.xlu0 %v2934
    %v2936 = vpop.xlane.xlu0 %2935
    %v2937 = vadd.f32 %v2912, %v2913
    %v2938 = vadd.f32 %v2937, %v2914
    %v2939 = vadd.f32 %v2938, %v2915
    %2940 = vadd.xlane.f32.xlu0 %v2939
    %v2941 = vpop.xlane.xlu0 %2940
    %v2942 = vadd.f32 %v2916, %v2917
    %v2943 = vadd.f32 %v2942, %v2918
    %v2944 = vadd.f32 %v2943, %v2919
    %2945 = vadd.xlane.f32.xlu0 %v2944
    %v2946 = vpop.xlane.xlu0 %2945
    %v2947 = vadd.f32 %v2920, %v2921
    %v2948 = vadd.f32 %v2947, %v2922
    %v2949 = vadd.f32 %v2948, %v2923
    %2950 = vadd.xlane.f32.xlu0 %v2949
    %v2951 = vpop.xlane.xlu0 %2950
    %v2952 = vmul.f32 %v2936, 0.001953125
    %v2953 = vmul.f32 %v2941, 0.001953125
    %v2954 = vmul.f32 %v2946, 0.001953125
    %v2955 = vmul.f32 %v2951, 0.001953125
    %v2956 = vsub.f32 %v2908, %v2952
    %v2957 = vsub.f32 %v2909, %v2952
    %v2958 = vsub.f32 %v2910, %v2952
    %v2959 = vsub.f32 %v2911, %v2952
    %v2960 = vsub.f32 %v2912, %v2953
    %v2961 = vsub.f32 %v2913, %v2953
    %v2962 = vsub.f32 %v2914, %v2953
    %v2963 = vsub.f32 %v2915, %v2953
    %v2964 = vsub.f32 %v2916, %v2954
    %v2965 = vsub.f32 %v2917, %v2954
    %v2966 = vsub.f32 %v2918, %v2954
    %v2967 = vsub.f32 %v2919, %v2954
    %v2968 = vsub.f32 %v2920, %v2955
    %v2969 = vsub.f32 %v2921, %v2955
    %v2970 = vsub.f32 %v2922, %v2955
    %v2971 = vsub.f32 %v2923, %v2955
    %v2972 = vmul.f32 %v2956, %v2956
    %v2973 = vmul.f32 %v2957, %v2957
    %v2974 = vmul.f32 %v2958, %v2958
    %v2975 = vmul.f32 %v2959, %v2959
    %v2976 = vmul.f32 %v2960, %v2960
    %v2977 = vmul.f32 %v2961, %v2961
    %v2978 = vmul.f32 %v2962, %v2962
    %v2979 = vmul.f32 %v2963, %v2963
    %v2980 = vmul.f32 %v2964, %v2964
    %v2981 = vmul.f32 %v2965, %v2965
    %v2982 = vmul.f32 %v2966, %v2966
    %v2983 = vmul.f32 %v2967, %v2967
    %v2984 = vmul.f32 %v2968, %v2968
    %v2985 = vmul.f32 %v2969, %v2969
    %v2986 = vmul.f32 %v2970, %v2970
    %v2987 = vmul.f32 %v2971, %v2971
    %v2988 = vadd.f32 %v2972, %v2973
    %v2989 = vadd.f32 %v2988, %v2974
    %v2990 = vadd.f32 %v2989, %v2975
    %2991 = vadd.xlane.f32.xlu0 %v2990
    %v2992 = vpop.xlane.xlu0 %2991
    %v2993 = vadd.f32 %v2976, %v2977
    %v2994 = vadd.f32 %v2993, %v2978
    %v2995 = vadd.f32 %v2994, %v2979
    %2996 = vadd.xlane.f32.xlu0 %v2995
    %v2997 = vpop.xlane.xlu0 %2996
    %v2998 = vadd.f32 %v2980, %v2981
    %v2999 = vadd.f32 %v2998, %v2982
    %v3000 = vadd.f32 %v2999, %v2983
    %3001 = vadd.xlane.f32.xlu0 %v3000
    %v3002 = vpop.xlane.xlu0 %3001
    %v3003 = vadd.f32 %v2984, %v2985
    %v3004 = vadd.f32 %v3003, %v2986
    %v3005 = vadd.f32 %v3004, %v2987
    %3006 = vadd.xlane.f32.xlu0 %v3005
    %v3007 = vpop.xlane.xlu0 %3006
    %v3008 = vmul.f32 %v2992, 0.001953125
    %v3009 = vmul.f32 %v2997, 0.001953125
    %v3010 = vmul.f32 %v3002, 0.001953125
    %v3011 = vmul.f32 %v3007, 0.001953125
    %v3012 = vadd.f32 %v3008, 1e-05
    %v3013 = vadd.f32 %v3009, 1e-05
    %v3014 = vadd.f32 %v3010, 1e-05
    %v3015 = vadd.f32 %v3011, 1e-05
    %v3016 = vrsqrt.pop %v3012
    %v3017 = vrsqrt.pop %v3013
    %v3018 = vrsqrt.pop %v3014
    %v3019 = vrsqrt.pop %v3015
    %v3020 = vmul.f32 %v2956, %v3016
    %v3021 = vmul.f32 %v2957, %v3016
    %v3022 = vmul.f32 %v2958, %v3016
    %v3023 = vmul.f32 %v2959, %v3016
    %v3024 = vmul.f32 %v2960, %v3017
    %v3025 = vmul.f32 %v2961, %v3017
    %v3026 = vmul.f32 %v2962, %v3017
    %v3027 = vmul.f32 %v2963, %v3017
    %v3028 = vmul.f32 %v2964, %v3018
    %v3029 = vmul.f32 %v2965, %v3018
    %v3030 = vmul.f32 %v2966, %v3018
    %v3031 = vmul.f32 %v2967, %v3018
    %v3032 = vmul.f32 %v2968, %v3019
    %v3033 = vmul.f32 %v2969, %v3019
    %v3034 = vmul.f32 %v2970, %v3019
    %v3035 = vmul.f32 %v2971, %v3019
    %3037 = vset.pattern.permute.xlu0 0
    %3038 = vperm.xlu0 %3037, %v2924
    %v3039 = vpop.permute.xlu0 %3038
    %3042 = vset.pattern.permute.xlu0 0
    %3043 = vperm.xlu0 %3042, %v2925
    %v3044 = vpop.permute.xlu0 %3043
    %3047 = vset.pattern.permute.xlu0 0
    %3048 = vperm.xlu0 %3047, %v2926
    %v3049 = vpop.permute.xlu0 %3048
    %3052 = vset.pattern.permute.xlu0 0
    %3053 = vperm.xlu0 %3052, %v2927
    %v3054 = vpop.permute.xlu0 %3053
    %v3056 = vmul.f32 %v3020, %v3039
    %v3057 = vmul.f32 %v3021, %v3039
    %v3058 = vmul.f32 %v3022, %v3039
    %v3059 = vmul.f32 %v3023, %v3039
    %v3060 = vmul.f32 %v3024, %v3044
    %v3061 = vmul.f32 %v3025, %v3044
    %v3062 = vmul.f32 %v3026, %v3044
    %v3063 = vmul.f32 %v3027, %v3044
    %v3064 = vmul.f32 %v3028, %v3049
    %v3065 = vmul.f32 %v3029, %v3049
    %v3066 = vmul.f32 %v3030, %v3049
    %v3067 = vmul.f32 %v3031, %v3049
    %v3068 = vmul.f32 %v3032, %v3054
    %v3069 = vmul.f32 %v3033, %v3054
    %v3070 = vmul.f32 %v3034, %v3054
    %v3071 = vmul.f32 %v3035, %v3054
    %3073 = vset.pattern.permute.xlu0 0
    %3074 = vperm.xlu0 %3073, %v2928
    %v3075 = vpop.permute.xlu0 %3074
    %3078 = vset.pattern.permute.xlu0 0
    %3079 = vperm.xlu0 %3078, %v2929
    %v3080 = vpop.permute.xlu0 %3079
    %3083 = vset.pattern.permute.xlu0 0
    %3084 = vperm.xlu0 %3083, %v2930
    %v3085 = vpop.permute.xlu0 %3084
    %3088 = vset.pattern.permute.xlu0 0
    %3089 = vperm.xlu0 %3088, %v2931
    %v3090 = vpop.permute.xlu0 %3089
    %v3092 = vadd.f32 %v3056, %v3075
    %v3093 = vadd.f32 %v3057, %v3075
    %v3094 = vadd.f32 %v3058, %v3075
    %v3095 = vadd.f32 %v3059, %v3075
    %v3096 = vadd.f32 %v3060, %v3080
    %v3097 = vadd.f32 %v3061, %v3080
    %v3098 = vadd.f32 %v3062, %v3080
    %v3099 = vadd.f32 %v3063, %v3080
    %v3100 = vadd.f32 %v3064, %v3085
    %v3101 = vadd.f32 %v3065, %v3085
    %v3102 = vadd.f32 %v3066, %v3085
    %v3103 = vadd.f32 %v3067, %v3085
    %v3104 = vadd.f32 %v3068, %v3090
    %v3105 = vadd.f32 %v3069, %v3090
    %v3106 = vadd.f32 %v3070, %v3090
    %v3107 = vadd.f32 %v3071, %v3090
    %v3108 = vmax.f32 %v3092, 0.0
    %v3109 = vmax.f32 %v3093, 0.0
    %v3110 = vmax.f32 %v3094, 0.0
    %v3111 = vmax.f32 %v3095, 0.0
    %v3112 = vmax.f32 %v3096, 0.0
    %v3113 = vmax.f32 %v3097, 0.0
    %v3114 = vmax.f32 %v3098, 0.0
    %v3115 = vmax.f32 %v3099, 0.0
    %v3116 = vmax.f32 %v3100, 0.0
    %v3117 = vmax.f32 %v3101, 0.0
    %v3118 = vmax.f32 %v3102, 0.0
    %v3119 = vmax.f32 %v3103, 0.0
    %v3120 = vmax.f32 %v3104, 0.0
    %v3121 = vmax.f32 %v3105, 0.0
    %v3122 = vmax.f32 %v3106, 0.0
    %v3123 = vmax.f32 %v3107, 0.0
    %v3124 = vld [vmem:[%s9] sm:$0xff]
    %v3125 = vld [vmem:[%s9 + $0x8] sm:$0xff]
    %v3126 = vld [vmem:[%s9 + $0x10] sm:$0xff]
    %v3127 = vld [vmem:[%s9 + $0x18] sm:$0xff]
    %vm3128 = vcmask 261120
    %v3130 = vsel %vm3128, %v3124, 0
    %v3133 = vsel %vm3128, %v3125, 0
    %v3136 = vsel %vm3128, %v3126, 0
    %v3139 = vsel %vm3128, %v3127, 0
    %3141 = vmatprep.subr.mxu0 0.0
    %3142 = vmatpush1.msra.mxu0 0.0
    %3143 = vmatprep.subr.mxu0 0.0
    %3144 = vmatpush1.msra.mxu0 0.0
    %3145 = vmatprep.subr.mxu0 0.0
    %3146 = vmatpush1.msra.mxu0 0.0
    %3147 = vmatprep.subr.mxu0 0.0
    %3148 = vmatpush1.msra.mxu0 0.0
    %3149 = vmatprep.subr.mxu0 0.0
    %3150 = vmatpush1.msra.mxu0 0.0
    %3151 = vmatprep.subr.mxu0 0.0
    %3152 = vmatpush1.msra.mxu0 0.0
    %3153 = vmatprep.subr.mxu0 0.0
    %3154 = vmatpush1.msra.mxu0 0.0
    %3155 = vmatprep.subr.mxu0 0.0
    %3156 = vmatpush1.msra.mxu0 0.0
    %3157 = vmatprep.subr.mxu0 0.0
    %3158 = vmatpush1.msra.mxu0 0.0
    %3159 = vmatprep.subr.mxu0 0.0
    %3160 = vmatpush1.msra.mxu0 0.0
    %3161 = vmatprep.subr.mxu0 0.0
    %3162 = vmatpush1.msra.mxu0 0.0
    %3163 = vmatprep.subr.mxu0 0.0
    %3164 = vmatpush1.msra.mxu0 0.0
    %3165 = vmatprep.subr.mxu0 %v3121
    %3166 = vmatpush1.msra.mxu0 %v3120
    %3167 = vmatprep.subr.mxu0 %v3117
    %3168 = vmatpush1.msra.mxu0 %v3116
    %3169 = vmatprep.subr.mxu0 %v3113
    %3170 = vmatpush1.msra.mxu0 %v3112
    %3171 = vmatprep.subr.mxu0 %v3109
    %3172 = vmatpush1.msra.mxu0 %v3108
    %3173 = vmatprep.subr.mxu0 0.0
    %3174 = vmatpush2.msra.mxu0 0.0
    %3175 = vmatprep.subr.mxu0 0.0
    %3176 = vmatpush2.msra.mxu0 0.0
    %3177 = vmatprep.subr.mxu0 0.0
    %3178 = vmatpush2.msra.mxu0 0.0
    %3179 = vmatprep.subr.mxu0 0.0
    %3180 = vmatpush2.msra.mxu0 0.0
    %3181 = vmatprep.subr.mxu0 0.0
    %3182 = vmatpush2.msra.mxu0 0.0
    %3183 = vmatprep.subr.mxu0 0.0
    %3184 = vmatpush2.msra.mxu0 0.0
    %3185 = vmatprep.subr.mxu0 0.0
    %3186 = vmatpush2.msra.mxu0 0.0
    %3187 = vmatprep.subr.mxu0 0.0
    %3188 = vmatpush2.msra.mxu0 0.0
    %3189 = vmatprep.subr.mxu0 0.0
    %3190 = vmatpush2.msra.mxu0 0.0
    %3191 = vmatprep.subr.mxu0 0.0
    %3192 = vmatpush2.msra.mxu0 0.0
    %3193 = vmatprep.subr.mxu0 0.0
    %3194 = vmatpush2.msra.mxu0 0.0
    %3195 = vmatprep.subr.mxu0 0.0
    %3196 = vmatpush2.msra.mxu0 0.0
    %3197 = vmatprep.subr.mxu0 0.0
    %3198 = vmatpush2.msra.mxu0 0.0
    %3199 = vmatprep.subr.mxu0 0.0
    %3200 = vmatpush2.msra.mxu0 0.0
    %3201 = vmatprep.subr.mxu0 0.0
    %3202 = vmatpush2.msra.mxu0 0.0
    %3203 = vmatprep.subr.mxu0 0.0
    %3204 = vmatpush2.msra.mxu0 0.0
    %3205 = vmatprep.mubr.f32.mxu0 0.0
    %3206 = vmatmul.mubr.f32.gmra.mxu0 %v3130
    %v3207 = vpop.f32.mrf.mxu0
    %v3208 = vadd.f32 0.0, %v3207
    %v3209 = vpop.f32.mrf.mxu0
    %v3210 = vadd.f32 0.0, %v3209
    %3211 = vmatprep.mubr.f32.mxu0 0.0
    %3212 = vmatmul.mubr.f32.gmra.mxu0 %v3133
    %v3213 = vpop.f32.mrf.mxu0
    %v3214 = vadd.f32 0.0, %v3213
    %v3215 = vpop.f32.mrf.mxu0
    %v3216 = vadd.f32 0.0, %v3215
    %3217 = vmatprep.mubr.f32.mxu0 0.0
    %3218 = vmatmul.mubr.f32.gmra.mxu0 %v3136
    %v3219 = vpop.f32.mrf.mxu0
    %v3220 = vadd.f32 0.0, %v3219
    %v3221 = vpop.f32.mrf.mxu0
    %v3222 = vadd.f32 0.0, %v3221
    %3223 = vmatprep.mubr.f32.mxu0 0.0
    %3224 = vmatmul.mubr.f32.gmra.mxu0 %v3139
    %v3225 = vpop.f32.mrf.mxu0
    %v3226 = vadd.f32 0.0, %v3225
    %v3227 = vpop.f32.mrf.mxu0
    %v3228 = vadd.f32 0.0, %v3227
    %3229 = vdwg.mxu0
    %3230 = vmatprep.subr.mxu0 0.0
    %3231 = vmatpush1.msra.mxu0 0.0
    %3232 = vmatprep.subr.mxu0 0.0
    %3233 = vmatpush1.msra.mxu0 0.0
    %3234 = vmatprep.subr.mxu0 0.0
    %3235 = vmatpush1.msra.mxu0 0.0
    %3236 = vmatprep.subr.mxu0 0.0
    %3237 = vmatpush1.msra.mxu0 0.0
    %3238 = vmatprep.subr.mxu0 0.0
    %3239 = vmatpush1.msra.mxu0 0.0
    %3240 = vmatprep.subr.mxu0 0.0
    %3241 = vmatpush1.msra.mxu0 0.0
    %3242 = vmatprep.subr.mxu0 0.0
    %3243 = vmatpush1.msra.mxu0 0.0
    %3244 = vmatprep.subr.mxu0 0.0
    %3245 = vmatpush1.msra.mxu0 0.0
    %3246 = vmatprep.subr.mxu0 0.0
    %3247 = vmatpush1.msra.mxu0 0.0
    %3248 = vmatprep.subr.mxu0 0.0
    %3249 = vmatpush1.msra.mxu0 0.0
    %3250 = vmatprep.subr.mxu0 0.0
    %3251 = vmatpush1.msra.mxu0 0.0
    %3252 = vmatprep.subr.mxu0 0.0
    %3253 = vmatpush1.msra.mxu0 0.0
    %3254 = vmatprep.subr.mxu0 %v3123
    %3255 = vmatpush1.msra.mxu0 %v3122
    %3256 = vmatprep.subr.mxu0 %v3119
    %3257 = vmatpush1.msra.mxu0 %v3118
    %3258 = vmatprep.subr.mxu0 %v3115
    %3259 = vmatpush1.msra.mxu0 %v3114
    %3260 = vmatprep.subr.mxu0 %v3111
    %3261 = vmatpush1.msra.mxu0 %v3110
    %3262 = vmatprep.subr.mxu0 0.0
    %3263 = vmatpush2.msra.mxu0 0.0
    %3264 = vmatprep.subr.mxu0 0.0
    %3265 = vmatpush2.msra.mxu0 0.0
    %3266 = vmatprep.subr.mxu0 0.0
    %3267 = vmatpush2.msra.mxu0 0.0
    %3268 = vmatprep.subr.mxu0 0.0
    %3269 = vmatpush2.msra.mxu0 0.0
    %3270 = vmatprep.subr.mxu0 0.0
    %3271 = vmatpush2.msra.mxu0 0.0
    %3272 = vmatprep.subr.mxu0 0.0
    %3273 = vmatpush2.msra.mxu0 0.0
    %3274 = vmatprep.subr.mxu0 0.0
    %3275 = vmatpush2.msra.mxu0 0.0
    %3276 = vmatprep.subr.mxu0 0.0
    %3277 = vmatpush2.msra.mxu0 0.0
    %3278 = vmatprep.subr.mxu0 0.0
    %3279 = vmatpush2.msra.mxu0 0.0
    %3280 = vmatprep.subr.mxu0 0.0
    %3281 = vmatpush2.msra.mxu0 0.0
    %3282 = vmatprep.subr.mxu0 0.0
    %3283 = vmatpush2.msra.mxu0 0.0
    %3284 = vmatprep.subr.mxu0 0.0
    %3285 = vmatpush2.msra.mxu0 0.0
    %3286 = vmatprep.subr.mxu0 0.0
    %3287 = vmatpush2.msra.mxu0 0.0
    %3288 = vmatprep.subr.mxu0 0.0
    %3289 = vmatpush2.msra.mxu0 0.0
    %3290 = vmatprep.subr.mxu0 0.0
    %3291 = vmatpush2.msra.mxu0 0.0
    %3292 = vmatprep.subr.mxu0 0.0
    %3293 = vmatpush2.msra.mxu0 0.0
    %3294 = vmatprep.mubr.f32.mxu0 0.0
    %3295 = vmatmul.mubr.f32.gmra.mxu0 %v3130
    %v3296 = vpop.f32.mrf.mxu0
    %v3297 = vadd.f32 0.0, %v3296
    %v3298 = vpop.f32.mrf.mxu0
    %v3299 = vadd.f32 0.0, %v3298
    %3300 = vmatprep.mubr.f32.mxu0 0.0
    %3301 = vmatmul.mubr.f32.gmra.mxu0 %v3133
    %v3302 = vpop.f32.mrf.mxu0
    %v3303 = vadd.f32 0.0, %v3302
    %v3304 = vpop.f32.mrf.mxu0
    %v3305 = vadd.f32 0.0, %v3304
    %3306 = vmatprep.mubr.f32.mxu0 0.0
    %3307 = vmatmul.mubr.f32.gmra.mxu0 %v3136
    %v3308 = vpop.f32.mrf.mxu0
    %v3309 = vadd.f32 0.0, %v3308
    %v3310 = vpop.f32.mrf.mxu0
    %v3311 = vadd.f32 0.0, %v3310
    %3312 = vmatprep.mubr.f32.mxu0 0.0
    %3313 = vmatmul.mubr.f32.gmra.mxu0 %v3139
    %v3314 = vpop.f32.mrf.mxu0
    %v3315 = vadd.f32 0.0, %v3314
    %v3316 = vpop.f32.mrf.mxu0
    %v3317 = vadd.f32 0.0, %v3316
    %3318 = vdwg.mxu0
    %v3319 = vld [vmem:[%s10] sm:$0xff]
    %v3320 = vld [vmem:[%s10 + $0x8] sm:$0xff]
    %v3321 = vld [vmem:[%s10 + $0x10] sm:$0xff]
    %v3322 = vld [vmem:[%s10 + $0x18] sm:$0xff]
    %v3323 = vld [vmem:[%s11] sm:$0xff]
    %v3324 = vld [vmem:[%s11 + $0x8] sm:$0xff]
    %v3325 = vld [vmem:[%s11 + $0x10] sm:$0xff]
    %v3326 = vld [vmem:[%s11 + $0x18] sm:$0xff]
    %v3327 = vadd.f32 %v3208, %v3210
    %v3328 = vadd.f32 %v3327, %v3297
    %v3329 = vadd.f32 %v3328, %v3299
    %3330 = vadd.xlane.f32.xlu0 %v3329
    %v3331 = vpop.xlane.xlu0 %3330
    %v3332 = vadd.f32 %v3214, %v3216
    %v3333 = vadd.f32 %v3332, %v3303
    %v3334 = vadd.f32 %v3333, %v3305
    %3335 = vadd.xlane.f32.xlu0 %v3334
    %v3336 = vpop.xlane.xlu0 %3335
    %v3337 = vadd.f32 %v3220, %v3222
    %v3338 = vadd.f32 %v3337, %v3309
    %v3339 = vadd.f32 %v3338, %v3311
    %3340 = vadd.xlane.f32.xlu0 %v3339
    %v3341 = vpop.xlane.xlu0 %3340
    %v3342 = vadd.f32 %v3226, %v3228
    %v3343 = vadd.f32 %v3342, %v3315
    %v3344 = vadd.f32 %v3343, %v3317
    %3345 = vadd.xlane.f32.xlu0 %v3344
    %v3346 = vpop.xlane.xlu0 %3345
    %v3347 = vmul.f32 %v3331, 0.001953125
    %v3348 = vmul.f32 %v3336, 0.001953125
    %v3349 = vmul.f32 %v3341, 0.001953125
    %v3350 = vmul.f32 %v3346, 0.001953125
    %v3351 = vsub.f32 %v3208, %v3347
    %v3352 = vsub.f32 %v3210, %v3347
    %v3353 = vsub.f32 %v3297, %v3347
    %v3354 = vsub.f32 %v3299, %v3347
    %v3355 = vsub.f32 %v3214, %v3348
    %v3356 = vsub.f32 %v3216, %v3348
    %v3357 = vsub.f32 %v3303, %v3348
    %v3358 = vsub.f32 %v3305, %v3348
    %v3359 = vsub.f32 %v3220, %v3349
    %v3360 = vsub.f32 %v3222, %v3349
    %v3361 = vsub.f32 %v3309, %v3349
    %v3362 = vsub.f32 %v3311, %v3349
    %v3363 = vsub.f32 %v3226, %v3350
    %v3364 = vsub.f32 %v3228, %v3350
    %v3365 = vsub.f32 %v3315, %v3350
    %v3366 = vsub.f32 %v3317, %v3350
    %v3367 = vmul.f32 %v3351, %v3351
    %v3368 = vmul.f32 %v3352, %v3352
    %v3369 = vmul.f32 %v3353, %v3353
    %v3370 = vmul.f32 %v3354, %v3354
    %v3371 = vmul.f32 %v3355, %v3355
    %v3372 = vmul.f32 %v3356, %v3356
    %v3373 = vmul.f32 %v3357, %v3357
    %v3374 = vmul.f32 %v3358, %v3358
    %v3375 = vmul.f32 %v3359, %v3359
    %v3376 = vmul.f32 %v3360, %v3360
    %v3377 = vmul.f32 %v3361, %v3361
    %v3378 = vmul.f32 %v3362, %v3362
    %v3379 = vmul.f32 %v3363, %v3363
    %v3380 = vmul.f32 %v3364, %v3364
    %v3381 = vmul.f32 %v3365, %v3365
    %v3382 = vmul.f32 %v3366, %v3366
    %v3383 = vadd.f32 %v3367, %v3368
    %v3384 = vadd.f32 %v3383, %v3369
    %v3385 = vadd.f32 %v3384, %v3370
    %3386 = vadd.xlane.f32.xlu0 %v3385
    %v3387 = vpop.xlane.xlu0 %3386
    %v3388 = vadd.f32 %v3371, %v3372
    %v3389 = vadd.f32 %v3388, %v3373
    %v3390 = vadd.f32 %v3389, %v3374
    %3391 = vadd.xlane.f32.xlu0 %v3390
    %v3392 = vpop.xlane.xlu0 %3391
    %v3393 = vadd.f32 %v3375, %v3376
    %v3394 = vadd.f32 %v3393, %v3377
    %v3395 = vadd.f32 %v3394, %v3378
    %3396 = vadd.xlane.f32.xlu0 %v3395
    %v3397 = vpop.xlane.xlu0 %3396
    %v3398 = vadd.f32 %v3379, %v3380
    %v3399 = vadd.f32 %v3398, %v3381
    %v3400 = vadd.f32 %v3399, %v3382
    %3401 = vadd.xlane.f32.xlu0 %v3400
    %v3402 = vpop.xlane.xlu0 %3401
    %v3403 = vmul.f32 %v3387, 0.001953125
    %v3404 = vmul.f32 %v3392, 0.001953125
    %v3405 = vmul.f32 %v3397, 0.001953125
    %v3406 = vmul.f32 %v3402, 0.001953125
    %v3407 = vadd.f32 %v3403, 1e-05
    %v3408 = vadd.f32 %v3404, 1e-05
    %v3409 = vadd.f32 %v3405, 1e-05
    %v3410 = vadd.f32 %v3406, 1e-05
    %v3411 = vrsqrt.pop %v3407
    %v3412 = vrsqrt.pop %v3408
    %v3413 = vrsqrt.pop %v3409
    %v3414 = vrsqrt.pop %v3410
    %v3415 = vmul.f32 %v3351, %v3411
    %v3416 = vmul.f32 %v3352, %v3411
    %v3417 = vmul.f32 %v3353, %v3411
    %v3418 = vmul.f32 %v3354, %v3411
    %v3419 = vmul.f32 %v3355, %v3412
    %v3420 = vmul.f32 %v3356, %v3412
    %v3421 = vmul.f32 %v3357, %v3412
    %v3422 = vmul.f32 %v3358, %v3412
    %v3423 = vmul.f32 %v3359, %v3413
    %v3424 = vmul.f32 %v3360, %v3413
    %v3425 = vmul.f32 %v3361, %v3413
    %v3426 = vmul.f32 %v3362, %v3413
    %v3427 = vmul.f32 %v3363, %v3414
    %v3428 = vmul.f32 %v3364, %v3414
    %v3429 = vmul.f32 %v3365, %v3414
    %v3430 = vmul.f32 %v3366, %v3414
    %3432 = vset.pattern.permute.xlu0 0
    %3433 = vperm.xlu0 %3432, %v3319
    %v3434 = vpop.permute.xlu0 %3433
    %3437 = vset.pattern.permute.xlu0 0
    %3438 = vperm.xlu0 %3437, %v3320
    %v3439 = vpop.permute.xlu0 %3438
    %3442 = vset.pattern.permute.xlu0 0
    %3443 = vperm.xlu0 %3442, %v3321
    %v3444 = vpop.permute.xlu0 %3443
    %3447 = vset.pattern.permute.xlu0 0
    %3448 = vperm.xlu0 %3447, %v3322
    %v3449 = vpop.permute.xlu0 %3448
    %v3451 = vmul.f32 %v3415, %v3434
    %v3452 = vmul.f32 %v3416, %v3434
    %v3453 = vmul.f32 %v3417, %v3434
    %v3454 = vmul.f32 %v3418, %v3434
    %v3455 = vmul.f32 %v3419, %v3439
    %v3456 = vmul.f32 %v3420, %v3439
    %v3457 = vmul.f32 %v3421, %v3439
    %v3458 = vmul.f32 %v3422, %v3439
    %v3459 = vmul.f32 %v3423, %v3444
    %v3460 = vmul.f32 %v3424, %v3444
    %v3461 = vmul.f32 %v3425, %v3444
    %v3462 = vmul.f32 %v3426, %v3444
    %v3463 = vmul.f32 %v3427, %v3449
    %v3464 = vmul.f32 %v3428, %v3449
    %v3465 = vmul.f32 %v3429, %v3449
    %v3466 = vmul.f32 %v3430, %v3449
    %3468 = vset.pattern.permute.xlu0 0
    %3469 = vperm.xlu0 %3468, %v3323
    %v3470 = vpop.permute.xlu0 %3469
    %3473 = vset.pattern.permute.xlu0 0
    %3474 = vperm.xlu0 %3473, %v3324
    %v3475 = vpop.permute.xlu0 %3474
    %3478 = vset.pattern.permute.xlu0 0
    %3479 = vperm.xlu0 %3478, %v3325
    %v3480 = vpop.permute.xlu0 %3479
    %3483 = vset.pattern.permute.xlu0 0
    %3484 = vperm.xlu0 %3483, %v3326
    %v3485 = vpop.permute.xlu0 %3484
    %v3487 = vadd.f32 %v3451, %v3470
    %v3488 = vadd.f32 %v3452, %v3470
    %v3489 = vadd.f32 %v3453, %v3470
    %v3490 = vadd.f32 %v3454, %v3470
    %v3491 = vadd.f32 %v3455, %v3475
    %v3492 = vadd.f32 %v3456, %v3475
    %v3493 = vadd.f32 %v3457, %v3475
    %v3494 = vadd.f32 %v3458, %v3475
    %v3495 = vadd.f32 %v3459, %v3480
    %v3496 = vadd.f32 %v3460, %v3480
    %v3497 = vadd.f32 %v3461, %v3480
    %v3498 = vadd.f32 %v3462, %v3480
    %v3499 = vadd.f32 %v3463, %v3485
    %v3500 = vadd.f32 %v3464, %v3485
    %v3501 = vadd.f32 %v3465, %v3485
    %v3502 = vadd.f32 %v3466, %v3485
    %v3503 = vmax.f32 %v3487, 0.0
    %v3504 = vmax.f32 %v3488, 0.0
    %v3505 = vmax.f32 %v3489, 0.0
    %v3506 = vmax.f32 %v3490, 0.0
    %v3507 = vmax.f32 %v3491, 0.0
    %v3508 = vmax.f32 %v3492, 0.0
    %v3509 = vmax.f32 %v3493, 0.0
    %v3510 = vmax.f32 %v3494, 0.0
    %v3511 = vmax.f32 %v3495, 0.0
    %v3512 = vmax.f32 %v3496, 0.0
    %v3513 = vmax.f32 %v3497, 0.0
    %v3514 = vmax.f32 %v3498, 0.0
    %v3515 = vmax.f32 %v3499, 0.0
    %v3516 = vmax.f32 %v3500, 0.0
    %v3517 = vmax.f32 %v3501, 0.0
    %v3518 = vmax.f32 %v3502, 0.0
    %v3519 = vld [vmem:[%s12] sm:$0xf]
    %v3521 = vsel %vm3128, %v3519, 0
    %3523 = vmatprep.subr.mxu0 0.0
    %3524 = vmatpush1.msra.mxu0 0.0
    %3525 = vmatprep.subr.mxu0 0.0
    %3526 = vmatpush1.msra.mxu0 0.0
    %3527 = vmatprep.subr.mxu0 0.0
    %3528 = vmatpush1.msra.mxu0 0.0
    %3529 = vmatprep.subr.mxu0 0.0
    %3530 = vmatpush1.msra.mxu0 0.0
    %3531 = vmatprep.subr.mxu0 0.0
    %3532 = vmatpush1.msra.mxu0 0.0
    %3533 = vmatprep.subr.mxu0 0.0
    %3534 = vmatpush1.msra.mxu0 0.0
    %3535 = vmatprep.subr.mxu0 0.0
    %3536 = vmatpush1.msra.mxu0 0.0
    %3537 = vmatprep.subr.mxu0 0.0
    %3538 = vmatpush1.msra.mxu0 0.0
    %3539 = vmatprep.subr.mxu0 0.0
    %3540 = vmatpush1.msra.mxu0 0.0
    %3541 = vmatprep.subr.mxu0 0.0
    %3542 = vmatpush1.msra.mxu0 0.0
    %3543 = vmatprep.subr.mxu0 0.0
    %3544 = vmatpush1.msra.mxu0 0.0
    %3545 = vmatprep.subr.mxu0 0.0
    %3546 = vmatpush1.msra.mxu0 0.0
    %3547 = vmatprep.subr.mxu0 %v3516
    %3548 = vmatpush1.msra.mxu0 %v3515
    %3549 = vmatprep.subr.mxu0 %v3512
    %3550 = vmatpush1.msra.mxu0 %v3511
    %3551 = vmatprep.subr.mxu0 %v3508
    %3552 = vmatpush1.msra.mxu0 %v3507
    %3553 = vmatprep.subr.mxu0 %v3504
    %3554 = vmatpush1.msra.mxu0 %v3503
    %3555 = vmatprep.subr.mxu0 0.0
    %3556 = vmatpush2.msra.mxu0 0.0
    %3557 = vmatprep.subr.mxu0 0.0
    %3558 = vmatpush2.msra.mxu0 0.0
    %3559 = vmatprep.subr.mxu0 0.0
    %3560 = vmatpush2.msra.mxu0 0.0
    %3561 = vmatprep.subr.mxu0 0.0
    %3562 = vmatpush2.msra.mxu0 0.0
    %3563 = vmatprep.subr.mxu0 0.0
    %3564 = vmatpush2.msra.mxu0 0.0
    %3565 = vmatprep.subr.mxu0 0.0
    %3566 = vmatpush2.msra.mxu0 0.0
    %3567 = vmatprep.subr.mxu0 0.0
    %3568 = vmatpush2.msra.mxu0 0.0
    %3569 = vmatprep.subr.mxu0 0.0
    %3570 = vmatpush2.msra.mxu0 0.0
    %3571 = vmatprep.subr.mxu0 0.0
    %3572 = vmatpush2.msra.mxu0 0.0
    %3573 = vmatprep.subr.mxu0 0.0
    %3574 = vmatpush2.msra.mxu0 0.0
    %3575 = vmatprep.subr.mxu0 0.0
    %3576 = vmatpush2.msra.mxu0 0.0
    %3577 = vmatprep.subr.mxu0 0.0
    %3578 = vmatpush2.msra.mxu0 0.0
    %3579 = vmatprep.subr.mxu0 0.0
    %3580 = vmatpush2.msra.mxu0 0.0
    %3581 = vmatprep.subr.mxu0 0.0
    %3582 = vmatpush2.msra.mxu0 0.0
    %3583 = vmatprep.subr.mxu0 0.0
    %3584 = vmatpush2.msra.mxu0 0.0
    %3585 = vmatprep.subr.mxu0 0.0
    %3586 = vmatpush2.msra.mxu0 0.0
    %3587 = vmatprep.mubr.f32.mxu0 0.0
    %3588 = vmatmul.mubr.f32.gmra.mxu0 %v3521
    %v3589 = vpop.f32.mrf.mxu0
    %v3590 = vadd.f32 0.0, %v3589
    %v3591 = vpop.f32.mrf.mxu0
    %v3592 = vadd.f32 0.0, %v3591
    %3593 = vdwg.mxu0
    %3594 = vmatprep.subr.mxu0 0.0
    %3595 = vmatpush1.msra.mxu0 0.0
    %3596 = vmatprep.subr.mxu0 0.0
    %3597 = vmatpush1.msra.mxu0 0.0
    %3598 = vmatprep.subr.mxu0 0.0
    %3599 = vmatpush1.msra.mxu0 0.0
    %3600 = vmatprep.subr.mxu0 0.0
    %3601 = vmatpush1.msra.mxu0 0.0
    %3602 = vmatprep.subr.mxu0 0.0
    %3603 = vmatpush1.msra.mxu0 0.0
    %3604 = vmatprep.subr.mxu0 0.0
    %3605 = vmatpush1.msra.mxu0 0.0
    %3606 = vmatprep.subr.mxu0 0.0
    %3607 = vmatpush1.msra.mxu0 0.0
    %3608 = vmatprep.subr.mxu0 0.0
    %3609 = vmatpush1.msra.mxu0 0.0
    %3610 = vmatprep.subr.mxu0 0.0
    %3611 = vmatpush1.msra.mxu0 0.0
    %3612 = vmatprep.subr.mxu0 0.0
    %3613 = vmatpush1.msra.mxu0 0.0
    %3614 = vmatprep.subr.mxu0 0.0
    %3615 = vmatpush1.msra.mxu0 0.0
    %3616 = vmatprep.subr.mxu0 0.0
    %3617 = vmatpush1.msra.mxu0 0.0
    %3618 = vmatprep.subr.mxu0 %v3518
    %3619 = vmatpush1.msra.mxu0 %v3517
    %3620 = vmatprep.subr.mxu0 %v3514
    %3621 = vmatpush1.msra.mxu0 %v3513
    %3622 = vmatprep.subr.mxu0 %v3510
    %3623 = vmatpush1.msra.mxu0 %v3509
    %3624 = vmatprep.subr.mxu0 %v3506
    %3625 = vmatpush1.msra.mxu0 %v3505
    %3626 = vmatprep.subr.mxu0 0.0
    %3627 = vmatpush2.msra.mxu0 0.0
    %3628 = vmatprep.subr.mxu0 0.0
    %3629 = vmatpush2.msra.mxu0 0.0
    %3630 = vmatprep.subr.mxu0 0.0
    %3631 = vmatpush2.msra.mxu0 0.0
    %3632 = vmatprep.subr.mxu0 0.0
    %3633 = vmatpush2.msra.mxu0 0.0
    %3634 = vmatprep.subr.mxu0 0.0
    %3635 = vmatpush2.msra.mxu0 0.0
    %3636 = vmatprep.subr.mxu0 0.0
    %3637 = vmatpush2.msra.mxu0 0.0
    %3638 = vmatprep.subr.mxu0 0.0
    %3639 = vmatpush2.msra.mxu0 0.0
    %3640 = vmatprep.subr.mxu0 0.0
    %3641 = vmatpush2.msra.mxu0 0.0
    %3642 = vmatprep.subr.mxu0 0.0
    %3643 = vmatpush2.msra.mxu0 0.0
    %3644 = vmatprep.subr.mxu0 0.0
    %3645 = vmatpush2.msra.mxu0 0.0
    %3646 = vmatprep.subr.mxu0 0.0
    %3647 = vmatpush2.msra.mxu0 0.0
    %3648 = vmatprep.subr.mxu0 0.0
    %3649 = vmatpush2.msra.mxu0 0.0
    %3650 = vmatprep.subr.mxu0 0.0
    %3651 = vmatpush2.msra.mxu0 0.0
    %3652 = vmatprep.subr.mxu0 0.0
    %3653 = vmatpush2.msra.mxu0 0.0
    %3654 = vmatprep.subr.mxu0 0.0
    %3655 = vmatpush2.msra.mxu0 0.0
    %3656 = vmatprep.subr.mxu0 0.0
    %3657 = vmatpush2.msra.mxu0 0.0
    %3658 = vmatprep.mubr.f32.mxu0 0.0
    %3659 = vmatmul.mubr.f32.gmra.mxu0 %v3521
    %v3660 = vpop.f32.mrf.mxu0
    %v3661 = vadd.f32 0.0, %v3660
    %v3662 = vpop.f32.mrf.mxu0
    %v3663 = vadd.f32 0.0, %v3662
    %3664 = vdwg.mxu0
    %3665 = vrot.lane.b32.xlu0 %v3590, 17
    %v3666 = vpop.permute.xlu0 %3665
    %3667 = vrot.lane.b32.xlu0 %v3592, 17
    %v3668 = vpop.permute.xlu0 %3667
    %3669 = vrot.lane.b32.xlu0 %v3661, 17
    %v3670 = vpop.permute.xlu0 %3669
    %3671 = vrot.lane.b32.xlu0 %v3663, 17
    %v3672 = vpop.permute.xlu0 %3671
    %v3673 = vsel %vm428, %v3670, %v3672
    %v3674 = vsel %vm428, %v3668, %v3670
    %v3675 = vsel %vm428, %v3666, %v3668
    %v3676 = vsel %vm428, %v3672, %v3666
    %v3677 = vmul.f32 %v3676, %v480
    %v3678 = vmul.f32 %v3675, %v484
    %v3679 = vmul.f32 %v3674, %v488
    %v3680 = vmul.f32 %v3673, %v492
    %s3681 = scalar_lea.vmem %s12, 4
    %v3682 = vld [vmem:[%s3681] sm:$0xf]
    %v3684 = vsel %vm3128, %v3682, 0
    %3686 = vmatprep.subr.mxu0 0.0
    %3687 = vmatpush1.msra.mxu0 0.0
    %3688 = vmatprep.subr.mxu0 0.0
    %3689 = vmatpush1.msra.mxu0 0.0
    %3690 = vmatprep.subr.mxu0 0.0
    %3691 = vmatpush1.msra.mxu0 0.0
    %3692 = vmatprep.subr.mxu0 0.0
    %3693 = vmatpush1.msra.mxu0 0.0
    %3694 = vmatprep.subr.mxu0 0.0
    %3695 = vmatpush1.msra.mxu0 0.0
    %3696 = vmatprep.subr.mxu0 0.0
    %3697 = vmatpush1.msra.mxu0 0.0
    %3698 = vmatprep.subr.mxu0 0.0
    %3699 = vmatpush1.msra.mxu0 0.0
    %3700 = vmatprep.subr.mxu0 0.0
    %3701 = vmatpush1.msra.mxu0 0.0
    %3702 = vmatprep.subr.mxu0 0.0
    %3703 = vmatpush1.msra.mxu0 0.0
    %3704 = vmatprep.subr.mxu0 0.0
    %3705 = vmatpush1.msra.mxu0 0.0
    %3706 = vmatprep.subr.mxu0 0.0
    %3707 = vmatpush1.msra.mxu0 0.0
    %3708 = vmatprep.subr.mxu0 0.0
    %3709 = vmatpush1.msra.mxu0 0.0
    %3710 = vmatprep.subr.mxu0 %v3516
    %3711 = vmatpush1.msra.mxu0 %v3515
    %3712 = vmatprep.subr.mxu0 %v3512
    %3713 = vmatpush1.msra.mxu0 %v3511
    %3714 = vmatprep.subr.mxu0 %v3508
    %3715 = vmatpush1.msra.mxu0 %v3507
    %3716 = vmatprep.subr.mxu0 %v3504
    %3717 = vmatpush1.msra.mxu0 %v3503
    %3718 = vmatprep.subr.mxu0 0.0
    %3719 = vmatpush2.msra.mxu0 0.0
    %3720 = vmatprep.subr.mxu0 0.0
    %3721 = vmatpush2.msra.mxu0 0.0
    %3722 = vmatprep.subr.mxu0 0.0
    %3723 = vmatpush2.msra.mxu0 0.0
    %3724 = vmatprep.subr.mxu0 0.0
    %3725 = vmatpush2.msra.mxu0 0.0
    %3726 = vmatprep.subr.mxu0 0.0
    %3727 = vmatpush2.msra.mxu0 0.0
    %3728 = vmatprep.subr.mxu0 0.0
    %3729 = vmatpush2.msra.mxu0 0.0
    %3730 = vmatprep.subr.mxu0 0.0
    %3731 = vmatpush2.msra.mxu0 0.0
    %3732 = vmatprep.subr.mxu0 0.0
    %3733 = vmatpush2.msra.mxu0 0.0
    %3734 = vmatprep.subr.mxu0 0.0
    %3735 = vmatpush2.msra.mxu0 0.0
    %3736 = vmatprep.subr.mxu0 0.0
    %3737 = vmatpush2.msra.mxu0 0.0
    %3738 = vmatprep.subr.mxu0 0.0
    %3739 = vmatpush2.msra.mxu0 0.0
    %3740 = vmatprep.subr.mxu0 0.0
    %3741 = vmatpush2.msra.mxu0 0.0
    %3742 = vmatprep.subr.mxu0 0.0
    %3743 = vmatpush2.msra.mxu0 0.0
    %3744 = vmatprep.subr.mxu0 0.0
    %3745 = vmatpush2.msra.mxu0 0.0
    %3746 = vmatprep.subr.mxu0 0.0
    %3747 = vmatpush2.msra.mxu0 0.0
    %3748 = vmatprep.subr.mxu0 0.0
    %3749 = vmatpush2.msra.mxu0 0.0
    %3750 = vmatprep.mubr.f32.mxu0 0.0
    %3751 = vmatmul.mubr.f32.gmra.mxu0 %v3684
    %v3752 = vpop.f32.mrf.mxu0
    %v3753 = vadd.f32 0.0, %v3752
    %v3754 = vpop.f32.mrf.mxu0
    %v3755 = vadd.f32 0.0, %v3754
    %3756 = vdwg.mxu0
    %3757 = vmatprep.subr.mxu0 0.0
    %3758 = vmatpush1.msra.mxu0 0.0
    %3759 = vmatprep.subr.mxu0 0.0
    %3760 = vmatpush1.msra.mxu0 0.0
    %3761 = vmatprep.subr.mxu0 0.0
    %3762 = vmatpush1.msra.mxu0 0.0
    %3763 = vmatprep.subr.mxu0 0.0
    %3764 = vmatpush1.msra.mxu0 0.0
    %3765 = vmatprep.subr.mxu0 0.0
    %3766 = vmatpush1.msra.mxu0 0.0
    %3767 = vmatprep.subr.mxu0 0.0
    %3768 = vmatpush1.msra.mxu0 0.0
    %3769 = vmatprep.subr.mxu0 0.0
    %3770 = vmatpush1.msra.mxu0 0.0
    %3771 = vmatprep.subr.mxu0 0.0
    %3772 = vmatpush1.msra.mxu0 0.0
    %3773 = vmatprep.subr.mxu0 0.0
    %3774 = vmatpush1.msra.mxu0 0.0
    %3775 = vmatprep.subr.mxu0 0.0
    %3776 = vmatpush1.msra.mxu0 0.0
    %3777 = vmatprep.subr.mxu0 0.0
    %3778 = vmatpush1.msra.mxu0 0.0
    %3779 = vmatprep.subr.mxu0 0.0
    %3780 = vmatpush1.msra.mxu0 0.0
    %3781 = vmatprep.subr.mxu0 %v3518
    %3782 = vmatpush1.msra.mxu0 %v3517
    %3783 = vmatprep.subr.mxu0 %v3514
    %3784 = vmatpush1.msra.mxu0 %v3513
    %3785 = vmatprep.subr.mxu0 %v3510
    %3786 = vmatpush1.msra.mxu0 %v3509
    %3787 = vmatprep.subr.mxu0 %v3506
    %3788 = vmatpush1.msra.mxu0 %v3505
    %3789 = vmatprep.subr.mxu0 0.0
    %3790 = vmatpush2.msra.mxu0 0.0
    %3791 = vmatprep.subr.mxu0 0.0
    %3792 = vmatpush2.msra.mxu0 0.0
    %3793 = vmatprep.subr.mxu0 0.0
    %3794 = vmatpush2.msra.mxu0 0.0
    %3795 = vmatprep.subr.mxu0 0.0
    %3796 = vmatpush2.msra.mxu0 0.0
    %3797 = vmatprep.subr.mxu0 0.0
    %3798 = vmatpush2.msra.mxu0 0.0
    %3799 = vmatprep.subr.mxu0 0.0
    %3800 = vmatpush2.msra.mxu0 0.0
    %3801 = vmatprep.subr.mxu0 0.0
    %3802 = vmatpush2.msra.mxu0 0.0
    %3803 = vmatprep.subr.mxu0 0.0
    %3804 = vmatpush2.msra.mxu0 0.0
    %3805 = vmatprep.subr.mxu0 0.0
    %3806 = vmatpush2.msra.mxu0 0.0
    %3807 = vmatprep.subr.mxu0 0.0
    %3808 = vmatpush2.msra.mxu0 0.0
    %3809 = vmatprep.subr.mxu0 0.0
    %3810 = vmatpush2.msra.mxu0 0.0
    %3811 = vmatprep.subr.mxu0 0.0
    %3812 = vmatpush2.msra.mxu0 0.0
    %3813 = vmatprep.subr.mxu0 0.0
    %3814 = vmatpush2.msra.mxu0 0.0
    %3815 = vmatprep.subr.mxu0 0.0
    %3816 = vmatpush2.msra.mxu0 0.0
    %3817 = vmatprep.subr.mxu0 0.0
    %3818 = vmatpush2.msra.mxu0 0.0
    %3819 = vmatprep.subr.mxu0 0.0
    %3820 = vmatpush2.msra.mxu0 0.0
    %3821 = vmatprep.mubr.f32.mxu0 0.0
    %3822 = vmatmul.mubr.f32.gmra.mxu0 %v3684
    %v3823 = vpop.f32.mrf.mxu0
    %v3824 = vadd.f32 0.0, %v3823
    %v3825 = vpop.f32.mrf.mxu0
    %v3826 = vadd.f32 0.0, %v3825
    %3827 = vdwg.mxu0
    %3828 = vrot.lane.b32.xlu0 %v3753, 16
    %v3829 = vpop.permute.xlu0 %3828
    %3830 = vrot.lane.b32.xlu0 %v3755, 16
    %v3831 = vpop.permute.xlu0 %3830
    %3832 = vrot.lane.b32.xlu0 %v3824, 16
    %v3833 = vpop.permute.xlu0 %3832
    %3834 = vrot.lane.b32.xlu0 %v3826, 16
    %v3835 = vpop.permute.xlu0 %3834
    %v3836 = vsel %vm736, %v3833, %v3835
    %v3837 = vsel %vm736, %v3831, %v3833
    %v3838 = vsel %vm736, %v3829, %v3831
    %v3839 = vsel %vm736, %v3835, %v3829
    %v3840 = vmul.f32 %v3839, %v776
    %v3841 = vmul.f32 %v3838, %v780
    %v3842 = vmul.f32 %v3837, %v784
    %v3843 = vmul.f32 %v3836, %v788
    %v3844 = vadd.f32 %v3677, %v3840
    %v3845 = vadd.f32 %v3678, %v3841
    %v3846 = vadd.f32 %v3679, %v3842
    %v3847 = vadd.f32 %v3680, %v3843
    %s3848 = scalar_lea.vmem %s12, 8
    %v3849 = vld [vmem:[%s3848] sm:$0xf]
    %v3851 = vsel %vm3128, %v3849, 0
    %3853 = vmatprep.subr.mxu0 0.0
    %3854 = vmatpush1.msra.mxu0 0.0
    %3855 = vmatprep.subr.mxu0 0.0
    %3856 = vmatpush1.msra.mxu0 0.0
    %3857 = vmatprep.subr.mxu0 0.0
    %3858 = vmatpush1.msra.mxu0 0.0
    %3859 = vmatprep.subr.mxu0 0.0
    %3860 = vmatpush1.msra.mxu0 0.0
    %3861 = vmatprep.subr.mxu0 0.0
    %3862 = vmatpush1.msra.mxu0 0.0
    %3863 = vmatprep.subr.mxu0 0.0
    %3864 = vmatpush1.msra.mxu0 0.0
    %3865 = vmatprep.subr.mxu0 0.0
    %3866 = vmatpush1.msra.mxu0 0.0
    %3867 = vmatprep.subr.mxu0 0.0
    %3868 = vmatpush1.msra.mxu0 0.0
    %3869 = vmatprep.subr.mxu0 0.0
    %3870 = vmatpush1.msra.mxu0 0.0
    %3871 = vmatprep.subr.mxu0 0.0
    %3872 = vmatpush1.msra.mxu0 0.0
    %3873 = vmatprep.subr.mxu0 0.0
    %3874 = vmatpush1.msra.mxu0 0.0
    %3875 = vmatprep.subr.mxu0 0.0
    %3876 = vmatpush1.msra.mxu0 0.0
    %3877 = vmatprep.subr.mxu0 %v3516
    %3878 = vmatpush1.msra.mxu0 %v3515
    %3879 = vmatprep.subr.mxu0 %v3512
    %3880 = vmatpush1.msra.mxu0 %v3511
    %3881 = vmatprep.subr.mxu0 %v3508
    %3882 = vmatpush1.msra.mxu0 %v3507
    %3883 = vmatprep.subr.mxu0 %v3504
    %3884 = vmatpush1.msra.mxu0 %v3503
    %3885 = vmatprep.subr.mxu0 0.0
    %3886 = vmatpush2.msra.mxu0 0.0
    %3887 = vmatprep.subr.mxu0 0.0
    %3888 = vmatpush2.msra.mxu0 0.0
    %3889 = vmatprep.subr.mxu0 0.0
    %3890 = vmatpush2.msra.mxu0 0.0
    %3891 = vmatprep.subr.mxu0 0.0
    %3892 = vmatpush2.msra.mxu0 0.0
    %3893 = vmatprep.subr.mxu0 0.0
    %3894 = vmatpush2.msra.mxu0 0.0
    %3895 = vmatprep.subr.mxu0 0.0
    %3896 = vmatpush2.msra.mxu0 0.0
    %3897 = vmatprep.subr.mxu0 0.0
    %3898 = vmatpush2.msra.mxu0 0.0
    %3899 = vmatprep.subr.mxu0 0.0
    %3900 = vmatpush2.msra.mxu0 0.0
    %3901 = vmatprep.subr.mxu0 0.0
    %3902 = vmatpush2.msra.mxu0 0.0
    %3903 = vmatprep.subr.mxu0 0.0
    %3904 = vmatpush2.msra.mxu0 0.0
    %3905 = vmatprep.subr.mxu0 0.0
    %3906 = vmatpush2.msra.mxu0 0.0
    %3907 = vmatprep.subr.mxu0 0.0
    %3908 = vmatpush2.msra.mxu0 0.0
    %3909 = vmatprep.subr.mxu0 0.0
    %3910 = vmatpush2.msra.mxu0 0.0
    %3911 = vmatprep.subr.mxu0 0.0
    %3912 = vmatpush2.msra.mxu0 0.0
    %3913 = vmatprep.subr.mxu0 0.0
    %3914 = vmatpush2.msra.mxu0 0.0
    %3915 = vmatprep.subr.mxu0 0.0
    %3916 = vmatpush2.msra.mxu0 0.0
    %3917 = vmatprep.mubr.f32.mxu0 0.0
    %3918 = vmatmul.mubr.f32.gmra.mxu0 %v3851
    %v3919 = vpop.f32.mrf.mxu0
    %v3920 = vadd.f32 0.0, %v3919
    %v3921 = vpop.f32.mrf.mxu0
    %v3922 = vadd.f32 0.0, %v3921
    %3923 = vdwg.mxu0
    %3924 = vmatprep.subr.mxu0 0.0
    %3925 = vmatpush1.msra.mxu0 0.0
    %3926 = vmatprep.subr.mxu0 0.0
    %3927 = vmatpush1.msra.mxu0 0.0
    %3928 = vmatprep.subr.mxu0 0.0
    %3929 = vmatpush1.msra.mxu0 0.0
    %3930 = vmatprep.subr.mxu0 0.0
    %3931 = vmatpush1.msra.mxu0 0.0
    %3932 = vmatprep.subr.mxu0 0.0
    %3933 = vmatpush1.msra.mxu0 0.0
    %3934 = vmatprep.subr.mxu0 0.0
    %3935 = vmatpush1.msra.mxu0 0.0
    %3936 = vmatprep.subr.mxu0 0.0
    %3937 = vmatpush1.msra.mxu0 0.0
    %3938 = vmatprep.subr.mxu0 0.0
    %3939 = vmatpush1.msra.mxu0 0.0
    %3940 = vmatprep.subr.mxu0 0.0
    %3941 = vmatpush1.msra.mxu0 0.0
    %3942 = vmatprep.subr.mxu0 0.0
    %3943 = vmatpush1.msra.mxu0 0.0
    %3944 = vmatprep.subr.mxu0 0.0
    %3945 = vmatpush1.msra.mxu0 0.0
    %3946 = vmatprep.subr.mxu0 0.0
    %3947 = vmatpush1.msra.mxu0 0.0
    %3948 = vmatprep.subr.mxu0 %v3518
    %3949 = vmatpush1.msra.mxu0 %v3517
    %3950 = vmatprep.subr.mxu0 %v3514
    %3951 = vmatpush1.msra.mxu0 %v3513
    %3952 = vmatprep.subr.mxu0 %v3510
    %3953 = vmatpush1.msra.mxu0 %v3509
    %3954 = vmatprep.subr.mxu0 %v3506
    %3955 = vmatpush1.msra.mxu0 %v3505
    %3956 = vmatprep.subr.mxu0 0.0
    %3957 = vmatpush2.msra.mxu0 0.0
    %3958 = vmatprep.subr.mxu0 0.0
    %3959 = vmatpush2.msra.mxu0 0.0
    %3960 = vmatprep.subr.mxu0 0.0
    %3961 = vmatpush2.msra.mxu0 0.0
    %3962 = vmatprep.subr.mxu0 0.0
    %3963 = vmatpush2.msra.mxu0 0.0
    %3964 = vmatprep.subr.mxu0 0.0
    %3965 = vmatpush2.msra.mxu0 0.0
    %3966 = vmatprep.subr.mxu0 0.0
    %3967 = vmatpush2.msra.mxu0 0.0
    %3968 = vmatprep.subr.mxu0 0.0
    %3969 = vmatpush2.msra.mxu0 0.0
    %3970 = vmatprep.subr.mxu0 0.0
    %3971 = vmatpush2.msra.mxu0 0.0
    %3972 = vmatprep.subr.mxu0 0.0
    %3973 = vmatpush2.msra.mxu0 0.0
    %3974 = vmatprep.subr.mxu0 0.0
    %3975 = vmatpush2.msra.mxu0 0.0
    %3976 = vmatprep.subr.mxu0 0.0
    %3977 = vmatpush2.msra.mxu0 0.0
    %3978 = vmatprep.subr.mxu0 0.0
    %3979 = vmatpush2.msra.mxu0 0.0
    %3980 = vmatprep.subr.mxu0 0.0
    %3981 = vmatpush2.msra.mxu0 0.0
    %3982 = vmatprep.subr.mxu0 0.0
    %3983 = vmatpush2.msra.mxu0 0.0
    %3984 = vmatprep.subr.mxu0 0.0
    %3985 = vmatpush2.msra.mxu0 0.0
    %3986 = vmatprep.subr.mxu0 0.0
    %3987 = vmatpush2.msra.mxu0 0.0
    %3988 = vmatprep.mubr.f32.mxu0 0.0
    %3989 = vmatmul.mubr.f32.gmra.mxu0 %v3851
    %v3990 = vpop.f32.mrf.mxu0
    %v3991 = vadd.f32 0.0, %v3990
    %v3992 = vpop.f32.mrf.mxu0
    %v3993 = vadd.f32 0.0, %v3992
    %3994 = vdwg.mxu0
    %3995 = vrot.lane.b32.xlu0 %v3920, 15
    %v3996 = vpop.permute.xlu0 %3995
    %3997 = vrot.lane.b32.xlu0 %v3922, 15
    %v3998 = vpop.permute.xlu0 %3997
    %3999 = vrot.lane.b32.xlu0 %v3991, 15
    %v4000 = vpop.permute.xlu0 %3999
    %4001 = vrot.lane.b32.xlu0 %v3993, 15
    %v4002 = vpop.permute.xlu0 %4001
    %v4003 = vsel %vm1048, %v4000, %v4002
    %v4004 = vsel %vm1048, %v3998, %v4000
    %v4005 = vsel %vm1048, %v3996, %v3998
    %v4006 = vsel %vm1048, %v4002, %v3996
    %v4007 = vmul.f32 %v4006, %v1098
    %v4008 = vmul.f32 %v4005, %v1102
    %v4009 = vmul.f32 %v4004, %v1106
    %v4010 = vmul.f32 %v4003, %v1110
    %v4011 = vadd.f32 %v3844, %v4007
    %v4012 = vadd.f32 %v3845, %v4008
    %v4013 = vadd.f32 %v3846, %v4009
    %v4014 = vadd.f32 %v3847, %v4010
    %s4015 = scalar_lea.vmem %s12, 12
    %v4016 = vld [vmem:[%s4015] sm:$0xf]
    %v4018 = vsel %vm3128, %v4016, 0
    %4020 = vmatprep.subr.mxu0 0.0
    %4021 = vmatpush1.msra.mxu0 0.0
    %4022 = vmatprep.subr.mxu0 0.0
    %4023 = vmatpush1.msra.mxu0 0.0
    %4024 = vmatprep.subr.mxu0 0.0
    %4025 = vmatpush1.msra.mxu0 0.0
    %4026 = vmatprep.subr.mxu0 0.0
    %4027 = vmatpush1.msra.mxu0 0.0
    %4028 = vmatprep.subr.mxu0 0.0
    %4029 = vmatpush1.msra.mxu0 0.0
    %4030 = vmatprep.subr.mxu0 0.0
    %4031 = vmatpush1.msra.mxu0 0.0
    %4032 = vmatprep.subr.mxu0 0.0
    %4033 = vmatpush1.msra.mxu0 0.0
    %4034 = vmatprep.subr.mxu0 0.0
    %4035 = vmatpush1.msra.mxu0 0.0
    %4036 = vmatprep.subr.mxu0 0.0
    %4037 = vmatpush1.msra.mxu0 0.0
    %4038 = vmatprep.subr.mxu0 0.0
    %4039 = vmatpush1.msra.mxu0 0.0
    %4040 = vmatprep.subr.mxu0 0.0
    %4041 = vmatpush1.msra.mxu0 0.0
    %4042 = vmatprep.subr.mxu0 0.0
    %4043 = vmatpush1.msra.mxu0 0.0
    %4044 = vmatprep.subr.mxu0 %v3516
    %4045 = vmatpush1.msra.mxu0 %v3515
    %4046 = vmatprep.subr.mxu0 %v3512
    %4047 = vmatpush1.msra.mxu0 %v3511
    %4048 = vmatprep.subr.mxu0 %v3508
    %4049 = vmatpush1.msra.mxu0 %v3507
    %4050 = vmatprep.subr.mxu0 %v3504
    %4051 = vmatpush1.msra.mxu0 %v3503
    %4052 = vmatprep.subr.mxu0 0.0
    %4053 = vmatpush2.msra.mxu0 0.0
    %4054 = vmatprep.subr.mxu0 0.0
    %4055 = vmatpush2.msra.mxu0 0.0
    %4056 = vmatprep.subr.mxu0 0.0
    %4057 = vmatpush2.msra.mxu0 0.0
    %4058 = vmatprep.subr.mxu0 0.0
    %4059 = vmatpush2.msra.mxu0 0.0
    %4060 = vmatprep.subr.mxu0 0.0
    %4061 = vmatpush2.msra.mxu0 0.0
    %4062 = vmatprep.subr.mxu0 0.0
    %4063 = vmatpush2.msra.mxu0 0.0
    %4064 = vmatprep.subr.mxu0 0.0
    %4065 = vmatpush2.msra.mxu0 0.0
    %4066 = vmatprep.subr.mxu0 0.0
    %4067 = vmatpush2.msra.mxu0 0.0
    %4068 = vmatprep.subr.mxu0 0.0
    %4069 = vmatpush2.msra.mxu0 0.0
    %4070 = vmatprep.subr.mxu0 0.0
    %4071 = vmatpush2.msra.mxu0 0.0
    %4072 = vmatprep.subr.mxu0 0.0
    %4073 = vmatpush2.msra.mxu0 0.0
    %4074 = vmatprep.subr.mxu0 0.0
    %4075 = vmatpush2.msra.mxu0 0.0
    %4076 = vmatprep.subr.mxu0 0.0
    %4077 = vmatpush2.msra.mxu0 0.0
    %4078 = vmatprep.subr.mxu0 0.0
    %4079 = vmatpush2.msra.mxu0 0.0
    %4080 = vmatprep.subr.mxu0 0.0
    %4081 = vmatpush2.msra.mxu0 0.0
    %4082 = vmatprep.subr.mxu0 0.0
    %4083 = vmatpush2.msra.mxu0 0.0
    %4084 = vmatprep.mubr.f32.mxu0 0.0
    %4085 = vmatmul.mubr.f32.gmra.mxu0 %v4018
    %v4086 = vpop.f32.mrf.mxu0
    %v4087 = vadd.f32 0.0, %v4086
    %v4088 = vpop.f32.mrf.mxu0
    %v4089 = vadd.f32 0.0, %v4088
    %4090 = vdwg.mxu0
    %4091 = vmatprep.subr.mxu0 0.0
    %4092 = vmatpush1.msra.mxu0 0.0
    %4093 = vmatprep.subr.mxu0 0.0
    %4094 = vmatpush1.msra.mxu0 0.0
    %4095 = vmatprep.subr.mxu0 0.0
    %4096 = vmatpush1.msra.mxu0 0.0
    %4097 = vmatprep.subr.mxu0 0.0
    %4098 = vmatpush1.msra.mxu0 0.0
    %4099 = vmatprep.subr.mxu0 0.0
    %4100 = vmatpush1.msra.mxu0 0.0
    %4101 = vmatprep.subr.mxu0 0.0
    %4102 = vmatpush1.msra.mxu0 0.0
    %4103 = vmatprep.subr.mxu0 0.0
    %4104 = vmatpush1.msra.mxu0 0.0
    %4105 = vmatprep.subr.mxu0 0.0
    %4106 = vmatpush1.msra.mxu0 0.0
    %4107 = vmatprep.subr.mxu0 0.0
    %4108 = vmatpush1.msra.mxu0 0.0
    %4109 = vmatprep.subr.mxu0 0.0
    %4110 = vmatpush1.msra.mxu0 0.0
    %4111 = vmatprep.subr.mxu0 0.0
    %4112 = vmatpush1.msra.mxu0 0.0
    %4113 = vmatprep.subr.mxu0 0.0
    %4114 = vmatpush1.msra.mxu0 0.0
    %4115 = vmatprep.subr.mxu0 %v3518
    %4116 = vmatpush1.msra.mxu0 %v3517
    %4117 = vmatprep.subr.mxu0 %v3514
    %4118 = vmatpush1.msra.mxu0 %v3513
    %4119 = vmatprep.subr.mxu0 %v3510
    %4120 = vmatpush1.msra.mxu0 %v3509
    %4121 = vmatprep.subr.mxu0 %v3506
    %4122 = vmatpush1.msra.mxu0 %v3505
    %4123 = vmatprep.subr.mxu0 0.0
    %4124 = vmatpush2.msra.mxu0 0.0
    %4125 = vmatprep.subr.mxu0 0.0
    %4126 = vmatpush2.msra.mxu0 0.0
    %4127 = vmatprep.subr.mxu0 0.0
    %4128 = vmatpush2.msra.mxu0 0.0
    %4129 = vmatprep.subr.mxu0 0.0
    %4130 = vmatpush2.msra.mxu0 0.0
    %4131 = vmatprep.subr.mxu0 0.0
    %4132 = vmatpush2.msra.mxu0 0.0
    %4133 = vmatprep.subr.mxu0 0.0
    %4134 = vmatpush2.msra.mxu0 0.0
    %4135 = vmatprep.subr.mxu0 0.0
    %4136 = vmatpush2.msra.mxu0 0.0
    %4137 = vmatprep.subr.mxu0 0.0
    %4138 = vmatpush2.msra.mxu0 0.0
    %4139 = vmatprep.subr.mxu0 0.0
    %4140 = vmatpush2.msra.mxu0 0.0
    %4141 = vmatprep.subr.mxu0 0.0
    %4142 = vmatpush2.msra.mxu0 0.0
    %4143 = vmatprep.subr.mxu0 0.0
    %4144 = vmatpush2.msra.mxu0 0.0
    %4145 = vmatprep.subr.mxu0 0.0
    %4146 = vmatpush2.msra.mxu0 0.0
    %4147 = vmatprep.subr.mxu0 0.0
    %4148 = vmatpush2.msra.mxu0 0.0
    %4149 = vmatprep.subr.mxu0 0.0
    %4150 = vmatpush2.msra.mxu0 0.0
    %4151 = vmatprep.subr.mxu0 0.0
    %4152 = vmatpush2.msra.mxu0 0.0
    %4153 = vmatprep.subr.mxu0 0.0
    %4154 = vmatpush2.msra.mxu0 0.0
    %4155 = vmatprep.mubr.f32.mxu0 0.0
    %4156 = vmatmul.mubr.f32.gmra.mxu0 %v4018
    %v4157 = vpop.f32.mrf.mxu0
    %v4158 = vadd.f32 0.0, %v4157
    %v4159 = vpop.f32.mrf.mxu0
    %v4160 = vadd.f32 0.0, %v4159
    %4161 = vdwg.mxu0
    %4162 = vrot.lane.b32.xlu0 %v4087, 1
    %v4163 = vpop.permute.xlu0 %4162
    %4164 = vrot.lane.b32.xlu0 %v4089, 1
    %v4165 = vpop.permute.xlu0 %4164
    %4166 = vrot.lane.b32.xlu0 %v4158, 1
    %v4167 = vpop.permute.xlu0 %4166
    %4168 = vrot.lane.b32.xlu0 %v4160, 1
    %v4169 = vpop.permute.xlu0 %4168
    %v4170 = vsel %vm1370, %v4167, %v4169
    %v4171 = vsel %vm1370, %v4165, %v4167
    %v4172 = vsel %vm1370, %v4163, %v4165
    %v4173 = vsel %vm1370, %v4169, %v4163
    %v4174 = vmul.f32 %v4173, %v1410
    %v4175 = vmul.f32 %v4172, %v1414
    %v4176 = vmul.f32 %v4171, %v1418
    %v4177 = vmul.f32 %v4170, %v1422
    %v4178 = vadd.f32 %v4011, %v4174
    %v4179 = vadd.f32 %v4012, %v4175
    %v4180 = vadd.f32 %v4013, %v4176
    %v4181 = vadd.f32 %v4014, %v4177
    %s4182 = scalar_lea.vmem %s12, 16
    %v4183 = vld [vmem:[%s4182] sm:$0xf]
    %v4185 = vsel %vm3128, %v4183, 0
    %4187 = vmatprep.subr.mxu0 0.0
    %4188 = vmatpush1.msra.mxu0 0.0
    %4189 = vmatprep.subr.mxu0 0.0
    %4190 = vmatpush1.msra.mxu0 0.0
    %4191 = vmatprep.subr.mxu0 0.0
    %4192 = vmatpush1.msra.mxu0 0.0
    %4193 = vmatprep.subr.mxu0 0.0
    %4194 = vmatpush1.msra.mxu0 0.0
    %4195 = vmatprep.subr.mxu0 0.0
    %4196 = vmatpush1.msra.mxu0 0.0
    %4197 = vmatprep.subr.mxu0 0.0
    %4198 = vmatpush1.msra.mxu0 0.0
    %4199 = vmatprep.subr.mxu0 0.0
    %4200 = vmatpush1.msra.mxu0 0.0
    %4201 = vmatprep.subr.mxu0 0.0
    %4202 = vmatpush1.msra.mxu0 0.0
    %4203 = vmatprep.subr.mxu0 0.0
    %4204 = vmatpush1.msra.mxu0 0.0
    %4205 = vmatprep.subr.mxu0 0.0
    %4206 = vmatpush1.msra.mxu0 0.0
    %4207 = vmatprep.subr.mxu0 0.0
    %4208 = vmatpush1.msra.mxu0 0.0
    %4209 = vmatprep.subr.mxu0 0.0
    %4210 = vmatpush1.msra.mxu0 0.0
    %4211 = vmatprep.subr.mxu0 %v3516
    %4212 = vmatpush1.msra.mxu0 %v3515
    %4213 = vmatprep.subr.mxu0 %v3512
    %4214 = vmatpush1.msra.mxu0 %v3511
    %4215 = vmatprep.subr.mxu0 %v3508
    %4216 = vmatpush1.msra.mxu0 %v3507
    %4217 = vmatprep.subr.mxu0 %v3504
    %4218 = vmatpush1.msra.mxu0 %v3503
    %4219 = vmatprep.subr.mxu0 0.0
    %4220 = vmatpush2.msra.mxu0 0.0
    %4221 = vmatprep.subr.mxu0 0.0
    %4222 = vmatpush2.msra.mxu0 0.0
    %4223 = vmatprep.subr.mxu0 0.0
    %4224 = vmatpush2.msra.mxu0 0.0
    %4225 = vmatprep.subr.mxu0 0.0
    %4226 = vmatpush2.msra.mxu0 0.0
    %4227 = vmatprep.subr.mxu0 0.0
    %4228 = vmatpush2.msra.mxu0 0.0
    %4229 = vmatprep.subr.mxu0 0.0
    %4230 = vmatpush2.msra.mxu0 0.0
    %4231 = vmatprep.subr.mxu0 0.0
    %4232 = vmatpush2.msra.mxu0 0.0
    %4233 = vmatprep.subr.mxu0 0.0
    %4234 = vmatpush2.msra.mxu0 0.0
    %4235 = vmatprep.subr.mxu0 0.0
    %4236 = vmatpush2.msra.mxu0 0.0
    %4237 = vmatprep.subr.mxu0 0.0
    %4238 = vmatpush2.msra.mxu0 0.0
    %4239 = vmatprep.subr.mxu0 0.0
    %4240 = vmatpush2.msra.mxu0 0.0
    %4241 = vmatprep.subr.mxu0 0.0
    %4242 = vmatpush2.msra.mxu0 0.0
    %4243 = vmatprep.subr.mxu0 0.0
    %4244 = vmatpush2.msra.mxu0 0.0
    %4245 = vmatprep.subr.mxu0 0.0
    %4246 = vmatpush2.msra.mxu0 0.0
    %4247 = vmatprep.subr.mxu0 0.0
    %4248 = vmatpush2.msra.mxu0 0.0
    %4249 = vmatprep.subr.mxu0 0.0
    %4250 = vmatpush2.msra.mxu0 0.0
    %4251 = vmatprep.mubr.f32.mxu0 0.0
    %4252 = vmatmul.mubr.f32.gmra.mxu0 %v4185
    %v4253 = vpop.f32.mrf.mxu0
    %v4254 = vadd.f32 0.0, %v4253
    %v4255 = vpop.f32.mrf.mxu0
    %v4256 = vadd.f32 0.0, %v4255
    %4257 = vdwg.mxu0
    %4258 = vmatprep.subr.mxu0 0.0
    %4259 = vmatpush1.msra.mxu0 0.0
    %4260 = vmatprep.subr.mxu0 0.0
    %4261 = vmatpush1.msra.mxu0 0.0
    %4262 = vmatprep.subr.mxu0 0.0
    %4263 = vmatpush1.msra.mxu0 0.0
    %4264 = vmatprep.subr.mxu0 0.0
    %4265 = vmatpush1.msra.mxu0 0.0
    %4266 = vmatprep.subr.mxu0 0.0
    %4267 = vmatpush1.msra.mxu0 0.0
    %4268 = vmatprep.subr.mxu0 0.0
    %4269 = vmatpush1.msra.mxu0 0.0
    %4270 = vmatprep.subr.mxu0 0.0
    %4271 = vmatpush1.msra.mxu0 0.0
    %4272 = vmatprep.subr.mxu0 0.0
    %4273 = vmatpush1.msra.mxu0 0.0
    %4274 = vmatprep.subr.mxu0 0.0
    %4275 = vmatpush1.msra.mxu0 0.0
    %4276 = vmatprep.subr.mxu0 0.0
    %4277 = vmatpush1.msra.mxu0 0.0
    %4278 = vmatprep.subr.mxu0 0.0
    %4279 = vmatpush1.msra.mxu0 0.0
    %4280 = vmatprep.subr.mxu0 0.0
    %4281 = vmatpush1.msra.mxu0 0.0
    %4282 = vmatprep.subr.mxu0 %v3518
    %4283 = vmatpush1.msra.mxu0 %v3517
    %4284 = vmatprep.subr.mxu0 %v3514
    %4285 = vmatpush1.msra.mxu0 %v3513
    %4286 = vmatprep.subr.mxu0 %v3510
    %4287 = vmatpush1.msra.mxu0 %v3509
    %4288 = vmatprep.subr.mxu0 %v3506
    %4289 = vmatpush1.msra.mxu0 %v3505
    %4290 = vmatprep.subr.mxu0 0.0
    %4291 = vmatpush2.msra.mxu0 0.0
    %4292 = vmatprep.subr.mxu0 0.0
    %4293 = vmatpush2.msra.mxu0 0.0
    %4294 = vmatprep.subr.mxu0 0.0
    %4295 = vmatpush2.msra.mxu0 0.0
    %4296 = vmatprep.subr.mxu0 0.0
    %4297 = vmatpush2.msra.mxu0 0.0
    %4298 = vmatprep.subr.mxu0 0.0
    %4299 = vmatpush2.msra.mxu0 0.0
    %4300 = vmatprep.subr.mxu0 0.0
    %4301 = vmatpush2.msra.mxu0 0.0
    %4302 = vmatprep.subr.mxu0 0.0
    %4303 = vmatpush2.msra.mxu0 0.0
    %4304 = vmatprep.subr.mxu0 0.0
    %4305 = vmatpush2.msra.mxu0 0.0
    %4306 = vmatprep.subr.mxu0 0.0
    %4307 = vmatpush2.msra.mxu0 0.0
    %4308 = vmatprep.subr.mxu0 0.0
    %4309 = vmatpush2.msra.mxu0 0.0
    %4310 = vmatprep.subr.mxu0 0.0
    %4311 = vmatpush2.msra.mxu0 0.0
    %4312 = vmatprep.subr.mxu0 0.0
    %4313 = vmatpush2.msra.mxu0 0.0
    %4314 = vmatprep.subr.mxu0 0.0
    %4315 = vmatpush2.msra.mxu0 0.0
    %4316 = vmatprep.subr.mxu0 0.0
    %4317 = vmatpush2.msra.mxu0 0.0
    %4318 = vmatprep.subr.mxu0 0.0
    %4319 = vmatpush2.msra.mxu0 0.0
    %4320 = vmatprep.subr.mxu0 0.0
    %4321 = vmatpush2.msra.mxu0 0.0
    %4322 = vmatprep.mubr.f32.mxu0 0.0
    %4323 = vmatmul.mubr.f32.gmra.mxu0 %v4185
    %v4324 = vpop.f32.mrf.mxu0
    %v4325 = vadd.f32 0.0, %v4324
    %v4326 = vpop.f32.mrf.mxu0
    %v4327 = vadd.f32 0.0, %v4326
    %4328 = vdwg.mxu0
    %v4329 = vadd.f32 %v4178, %v4254
    %v4330 = vadd.f32 %v4179, %v4256
    %v4331 = vadd.f32 %v4180, %v4325
    %v4332 = vadd.f32 %v4181, %v4327
    %s4333 = scalar_lea.vmem %s12, 20
    %v4334 = vld [vmem:[%s4333] sm:$0xf]
    %v4336 = vsel %vm3128, %v4334, 0
    %4338 = vmatprep.subr.mxu0 0.0
    %4339 = vmatpush1.msra.mxu0 0.0
    %4340 = vmatprep.subr.mxu0 0.0
    %4341 = vmatpush1.msra.mxu0 0.0
    %4342 = vmatprep.subr.mxu0 0.0
    %4343 = vmatpush1.msra.mxu0 0.0
    %4344 = vmatprep.subr.mxu0 0.0
    %4345 = vmatpush1.msra.mxu0 0.0
    %4346 = vmatprep.subr.mxu0 0.0
    %4347 = vmatpush1.msra.mxu0 0.0
    %4348 = vmatprep.subr.mxu0 0.0
    %4349 = vmatpush1.msra.mxu0 0.0
    %4350 = vmatprep.subr.mxu0 0.0
    %4351 = vmatpush1.msra.mxu0 0.0
    %4352 = vmatprep.subr.mxu0 0.0
    %4353 = vmatpush1.msra.mxu0 0.0
    %4354 = vmatprep.subr.mxu0 0.0
    %4355 = vmatpush1.msra.mxu0 0.0
    %4356 = vmatprep.subr.mxu0 0.0
    %4357 = vmatpush1.msra.mxu0 0.0
    %4358 = vmatprep.subr.mxu0 0.0
    %4359 = vmatpush1.msra.mxu0 0.0
    %4360 = vmatprep.subr.mxu0 0.0
    %4361 = vmatpush1.msra.mxu0 0.0
    %4362 = vmatprep.subr.mxu0 %v3516
    %4363 = vmatpush1.msra.mxu0 %v3515
    %4364 = vmatprep.subr.mxu0 %v3512
    %4365 = vmatpush1.msra.mxu0 %v3511
    %4366 = vmatprep.subr.mxu0 %v3508
    %4367 = vmatpush1.msra.mxu0 %v3507
    %4368 = vmatprep.subr.mxu0 %v3504
    %4369 = vmatpush1.msra.mxu0 %v3503
    %4370 = vmatprep.subr.mxu0 0.0
    %4371 = vmatpush2.msra.mxu0 0.0
    %4372 = vmatprep.subr.mxu0 0.0
    %4373 = vmatpush2.msra.mxu0 0.0
    %4374 = vmatprep.subr.mxu0 0.0
    %4375 = vmatpush2.msra.mxu0 0.0
    %4376 = vmatprep.subr.mxu0 0.0
    %4377 = vmatpush2.msra.mxu0 0.0
    %4378 = vmatprep.subr.mxu0 0.0
    %4379 = vmatpush2.msra.mxu0 0.0
    %4380 = vmatprep.subr.mxu0 0.0
    %4381 = vmatpush2.msra.mxu0 0.0
    %4382 = vmatprep.subr.mxu0 0.0
    %4383 = vmatpush2.msra.mxu0 0.0
    %4384 = vmatprep.subr.mxu0 0.0
    %4385 = vmatpush2.msra.mxu0 0.0
    %4386 = vmatprep.subr.mxu0 0.0
    %4387 = vmatpush2.msra.mxu0 0.0
    %4388 = vmatprep.subr.mxu0 0.0
    %4389 = vmatpush2.msra.mxu0 0.0
    %4390 = vmatprep.subr.mxu0 0.0
    %4391 = vmatpush2.msra.mxu0 0.0
    %4392 = vmatprep.subr.mxu0 0.0
    %4393 = vmatpush2.msra.mxu0 0.0
    %4394 = vmatprep.subr.mxu0 0.0
    %4395 = vmatpush2.msra.mxu0 0.0
    %4396 = vmatprep.subr.mxu0 0.0
    %4397 = vmatpush2.msra.mxu0 0.0
    %4398 = vmatprep.subr.mxu0 0.0
    %4399 = vmatpush2.msra.mxu0 0.0
    %4400 = vmatprep.subr.mxu0 0.0
    %4401 = vmatpush2.msra.mxu0 0.0
    %4402 = vmatprep.mubr.f32.mxu0 0.0
    %4403 = vmatmul.mubr.f32.gmra.mxu0 %v4336
    %v4404 = vpop.f32.mrf.mxu0
    %v4405 = vadd.f32 0.0, %v4404
    %v4406 = vpop.f32.mrf.mxu0
    %v4407 = vadd.f32 0.0, %v4406
    %4408 = vdwg.mxu0
    %4409 = vmatprep.subr.mxu0 0.0
    %4410 = vmatpush1.msra.mxu0 0.0
    %4411 = vmatprep.subr.mxu0 0.0
    %4412 = vmatpush1.msra.mxu0 0.0
    %4413 = vmatprep.subr.mxu0 0.0
    %4414 = vmatpush1.msra.mxu0 0.0
    %4415 = vmatprep.subr.mxu0 0.0
    %4416 = vmatpush1.msra.mxu0 0.0
    %4417 = vmatprep.subr.mxu0 0.0
    %4418 = vmatpush1.msra.mxu0 0.0
    %4419 = vmatprep.subr.mxu0 0.0
    %4420 = vmatpush1.msra.mxu0 0.0
    %4421 = vmatprep.subr.mxu0 0.0
    %4422 = vmatpush1.msra.mxu0 0.0
    %4423 = vmatprep.subr.mxu0 0.0
    %4424 = vmatpush1.msra.mxu0 0.0
    %4425 = vmatprep.subr.mxu0 0.0
    %4426 = vmatpush1.msra.mxu0 0.0
    %4427 = vmatprep.subr.mxu0 0.0
    %4428 = vmatpush1.msra.mxu0 0.0
    %4429 = vmatprep.subr.mxu0 0.0
    %4430 = vmatpush1.msra.mxu0 0.0
    %4431 = vmatprep.subr.mxu0 0.0
    %4432 = vmatpush1.msra.mxu0 0.0
    %4433 = vmatprep.subr.mxu0 %v3518
    %4434 = vmatpush1.msra.mxu0 %v3517
    %4435 = vmatprep.subr.mxu0 %v3514
    %4436 = vmatpush1.msra.mxu0 %v3513
    %4437 = vmatprep.subr.mxu0 %v3510
    %4438 = vmatpush1.msra.mxu0 %v3509
    %4439 = vmatprep.subr.mxu0 %v3506
    %4440 = vmatpush1.msra.mxu0 %v3505
    %4441 = vmatprep.subr.mxu0 0.0
    %4442 = vmatpush2.msra.mxu0 0.0
    %4443 = vmatprep.subr.mxu0 0.0
    %4444 = vmatpush2.msra.mxu0 0.0
    %4445 = vmatprep.subr.mxu0 0.0
    %4446 = vmatpush2.msra.mxu0 0.0
    %4447 = vmatprep.subr.mxu0 0.0
    %4448 = vmatpush2.msra.mxu0 0.0
    %4449 = vmatprep.subr.mxu0 0.0
    %4450 = vmatpush2.msra.mxu0 0.0
    %4451 = vmatprep.subr.mxu0 0.0
    %4452 = vmatpush2.msra.mxu0 0.0
    %4453 = vmatprep.subr.mxu0 0.0
    %4454 = vmatpush2.msra.mxu0 0.0
    %4455 = vmatprep.subr.mxu0 0.0
    %4456 = vmatpush2.msra.mxu0 0.0
    %4457 = vmatprep.subr.mxu0 0.0
    %4458 = vmatpush2.msra.mxu0 0.0
    %4459 = vmatprep.subr.mxu0 0.0
    %4460 = vmatpush2.msra.mxu0 0.0
    %4461 = vmatprep.subr.mxu0 0.0
    %4462 = vmatpush2.msra.mxu0 0.0
    %4463 = vmatprep.subr.mxu0 0.0
    %4464 = vmatpush2.msra.mxu0 0.0
    %4465 = vmatprep.subr.mxu0 0.0
    %4466 = vmatpush2.msra.mxu0 0.0
    %4467 = vmatprep.subr.mxu0 0.0
    %4468 = vmatpush2.msra.mxu0 0.0
    %4469 = vmatprep.subr.mxu0 0.0
    %4470 = vmatpush2.msra.mxu0 0.0
    %4471 = vmatprep.subr.mxu0 0.0
    %4472 = vmatpush2.msra.mxu0 0.0
    %4473 = vmatprep.mubr.f32.mxu0 0.0
    %4474 = vmatmul.mubr.f32.gmra.mxu0 %v4336
    %v4475 = vpop.f32.mrf.mxu0
    %v4476 = vadd.f32 0.0, %v4475
    %v4477 = vpop.f32.mrf.mxu0
    %v4478 = vadd.f32 0.0, %v4477
    %4479 = vdwg.mxu0
    %4480 = vrot.lane.b32.xlu0 %v4405, 127
    %v4481 = vpop.permute.xlu0 %4480
    %4482 = vrot.lane.b32.xlu0 %v4407, 127
    %v4483 = vpop.permute.xlu0 %4482
    %4484 = vrot.lane.b32.xlu0 %v4476, 127
    %v4485 = vpop.permute.xlu0 %4484
    %4486 = vrot.lane.b32.xlu0 %v4478, 127
    %v4487 = vpop.permute.xlu0 %4486
    %v4488 = vsel %vm1893, %v4485, %v4487
    %v4489 = vsel %vm1893, %v4483, %v4485
    %v4490 = vsel %vm1893, %v4481, %v4483
    %v4491 = vsel %vm1893, %v4487, %v4481
    %v4492 = vmul.f32 %v4490, %v1933
    %v4493 = vmul.f32 %v4489, %v1937
    %v4494 = vmul.f32 %v4488, %v1941
    %v4495 = vmul.f32 %v4491, %v1945
    %v4496 = vadd.f32 %v4329, %v4492
    %v4497 = vadd.f32 %v4330, %v4493
    %v4498 = vadd.f32 %v4331, %v4494
    %v4499 = vadd.f32 %v4332, %v4495
    %s4500 = scalar_lea.vmem %s12, 24
    %v4501 = vld [vmem:[%s4500] sm:$0xf]
    %v4503 = vsel %vm3128, %v4501, 0
    %4505 = vmatprep.subr.mxu0 0.0
    %4506 = vmatpush1.msra.mxu0 0.0
    %4507 = vmatprep.subr.mxu0 0.0
    %4508 = vmatpush1.msra.mxu0 0.0
    %4509 = vmatprep.subr.mxu0 0.0
    %4510 = vmatpush1.msra.mxu0 0.0
    %4511 = vmatprep.subr.mxu0 0.0
    %4512 = vmatpush1.msra.mxu0 0.0
    %4513 = vmatprep.subr.mxu0 0.0
    %4514 = vmatpush1.msra.mxu0 0.0
    %4515 = vmatprep.subr.mxu0 0.0
    %4516 = vmatpush1.msra.mxu0 0.0
    %4517 = vmatprep.subr.mxu0 0.0
    %4518 = vmatpush1.msra.mxu0 0.0
    %4519 = vmatprep.subr.mxu0 0.0
    %4520 = vmatpush1.msra.mxu0 0.0
    %4521 = vmatprep.subr.mxu0 0.0
    %4522 = vmatpush1.msra.mxu0 0.0
    %4523 = vmatprep.subr.mxu0 0.0
    %4524 = vmatpush1.msra.mxu0 0.0
    %4525 = vmatprep.subr.mxu0 0.0
    %4526 = vmatpush1.msra.mxu0 0.0
    %4527 = vmatprep.subr.mxu0 0.0
    %4528 = vmatpush1.msra.mxu0 0.0
    %4529 = vmatprep.subr.mxu0 %v3516
    %4530 = vmatpush1.msra.mxu0 %v3515
    %4531 = vmatprep.subr.mxu0 %v3512
    %4532 = vmatpush1.msra.mxu0 %v3511
    %4533 = vmatprep.subr.mxu0 %v3508
    %4534 = vmatpush1.msra.mxu0 %v3507
    %4535 = vmatprep.subr.mxu0 %v3504
    %4536 = vmatpush1.msra.mxu0 %v3503
    %4537 = vmatprep.subr.mxu0 0.0
    %4538 = vmatpush2.msra.mxu0 0.0
    %4539 = vmatprep.subr.mxu0 0.0
    %4540 = vmatpush2.msra.mxu0 0.0
    %4541 = vmatprep.subr.mxu0 0.0
    %4542 = vmatpush2.msra.mxu0 0.0
    %4543 = vmatprep.subr.mxu0 0.0
    %4544 = vmatpush2.msra.mxu0 0.0
    %4545 = vmatprep.subr.mxu0 0.0
    %4546 = vmatpush2.msra.mxu0 0.0
    %4547 = vmatprep.subr.mxu0 0.0
    %4548 = vmatpush2.msra.mxu0 0.0
    %4549 = vmatprep.subr.mxu0 0.0
    %4550 = vmatpush2.msra.mxu0 0.0
    %4551 = vmatprep.subr.mxu0 0.0
    %4552 = vmatpush2.msra.mxu0 0.0
    %4553 = vmatprep.subr.mxu0 0.0
    %4554 = vmatpush2.msra.mxu0 0.0
    %4555 = vmatprep.subr.mxu0 0.0
    %4556 = vmatpush2.msra.mxu0 0.0
    %4557 = vmatprep.subr.mxu0 0.0
    %4558 = vmatpush2.msra.mxu0 0.0
    %4559 = vmatprep.subr.mxu0 0.0
    %4560 = vmatpush2.msra.mxu0 0.0
    %4561 = vmatprep.subr.mxu0 0.0
    %4562 = vmatpush2.msra.mxu0 0.0
    %4563 = vmatprep.subr.mxu0 0.0
    %4564 = vmatpush2.msra.mxu0 0.0
    %4565 = vmatprep.subr.mxu0 0.0
    %4566 = vmatpush2.msra.mxu0 0.0
    %4567 = vmatprep.subr.mxu0 0.0
    %4568 = vmatpush2.msra.mxu0 0.0
    %4569 = vmatprep.mubr.f32.mxu0 0.0
    %4570 = vmatmul.mubr.f32.gmra.mxu0 %v4503
    %v4571 = vpop.f32.mrf.mxu0
    %v4572 = vadd.f32 0.0, %v4571
    %v4573 = vpop.f32.mrf.mxu0
    %v4574 = vadd.f32 0.0, %v4573
    %4575 = vdwg.mxu0
    %4576 = vmatprep.subr.mxu0 0.0
    %4577 = vmatpush1.msra.mxu0 0.0
    %4578 = vmatprep.subr.mxu0 0.0
    %4579 = vmatpush1.msra.mxu0 0.0
    %4580 = vmatprep.subr.mxu0 0.0
    %4581 = vmatpush1.msra.mxu0 0.0
    %4582 = vmatprep.subr.mxu0 0.0
    %4583 = vmatpush1.msra.mxu0 0.0
    %4584 = vmatprep.subr.mxu0 0.0
    %4585 = vmatpush1.msra.mxu0 0.0
    %4586 = vmatprep.subr.mxu0 0.0
    %4587 = vmatpush1.msra.mxu0 0.0
    %4588 = vmatprep.subr.mxu0 0.0
    %4589 = vmatpush1.msra.mxu0 0.0
    %4590 = vmatprep.subr.mxu0 0.0
    %4591 = vmatpush1.msra.mxu0 0.0
    %4592 = vmatprep.subr.mxu0 0.0
    %4593 = vmatpush1.msra.mxu0 0.0
    %4594 = vmatprep.subr.mxu0 0.0
    %4595 = vmatpush1.msra.mxu0 0.0
    %4596 = vmatprep.subr.mxu0 0.0
    %4597 = vmatpush1.msra.mxu0 0.0
    %4598 = vmatprep.subr.mxu0 0.0
    %4599 = vmatpush1.msra.mxu0 0.0
    %4600 = vmatprep.subr.mxu0 %v3518
    %4601 = vmatpush1.msra.mxu0 %v3517
    %4602 = vmatprep.subr.mxu0 %v3514
    %4603 = vmatpush1.msra.mxu0 %v3513
    %4604 = vmatprep.subr.mxu0 %v3510
    %4605 = vmatpush1.msra.mxu0 %v3509
    %4606 = vmatprep.subr.mxu0 %v3506
    %4607 = vmatpush1.msra.mxu0 %v3505
    %4608 = vmatprep.subr.mxu0 0.0
    %4609 = vmatpush2.msra.mxu0 0.0
    %4610 = vmatprep.subr.mxu0 0.0
    %4611 = vmatpush2.msra.mxu0 0.0
    %4612 = vmatprep.subr.mxu0 0.0
    %4613 = vmatpush2.msra.mxu0 0.0
    %4614 = vmatprep.subr.mxu0 0.0
    %4615 = vmatpush2.msra.mxu0 0.0
    %4616 = vmatprep.subr.mxu0 0.0
    %4617 = vmatpush2.msra.mxu0 0.0
    %4618 = vmatprep.subr.mxu0 0.0
    %4619 = vmatpush2.msra.mxu0 0.0
    %4620 = vmatprep.subr.mxu0 0.0
    %4621 = vmatpush2.msra.mxu0 0.0
    %4622 = vmatprep.subr.mxu0 0.0
    %4623 = vmatpush2.msra.mxu0 0.0
    %4624 = vmatprep.subr.mxu0 0.0
    %4625 = vmatpush2.msra.mxu0 0.0
    %4626 = vmatprep.subr.mxu0 0.0
    %4627 = vmatpush2.msra.mxu0 0.0
    %4628 = vmatprep.subr.mxu0 0.0
    %4629 = vmatpush2.msra.mxu0 0.0
    %4630 = vmatprep.subr.mxu0 0.0
    %4631 = vmatpush2.msra.mxu0 0.0
    %4632 = vmatprep.subr.mxu0 0.0
    %4633 = vmatpush2.msra.mxu0 0.0
    %4634 = vmatprep.subr.mxu0 0.0
    %4635 = vmatpush2.msra.mxu0 0.0
    %4636 = vmatprep.subr.mxu0 0.0
    %4637 = vmatpush2.msra.mxu0 0.0
    %4638 = vmatprep.subr.mxu0 0.0
    %4639 = vmatpush2.msra.mxu0 0.0
    %4640 = vmatprep.mubr.f32.mxu0 0.0
    %4641 = vmatmul.mubr.f32.gmra.mxu0 %v4503
    %v4642 = vpop.f32.mrf.mxu0
    %v4643 = vadd.f32 0.0, %v4642
    %v4644 = vpop.f32.mrf.mxu0
    %v4645 = vadd.f32 0.0, %v4644
    %4646 = vdwg.mxu0
    %4647 = vrot.lane.b32.xlu0 %v4572, 113
    %v4648 = vpop.permute.xlu0 %4647
    %4649 = vrot.lane.b32.xlu0 %v4574, 113
    %v4650 = vpop.permute.xlu0 %4649
    %4651 = vrot.lane.b32.xlu0 %v4643, 113
    %v4652 = vpop.permute.xlu0 %4651
    %4653 = vrot.lane.b32.xlu0 %v4645, 113
    %v4654 = vpop.permute.xlu0 %4653
    %v4655 = vsel %vm2205, %v4652, %v4654
    %v4656 = vsel %vm2205, %v4650, %v4652
    %v4657 = vsel %vm2205, %v4648, %v4650
    %v4658 = vsel %vm2205, %v4654, %v4648
    %v4659 = vmul.f32 %v4657, %v2255
    %v4660 = vmul.f32 %v4656, %v2259
    %v4661 = vmul.f32 %v4655, %v2263
    %v4662 = vmul.f32 %v4658, %v2267
    %v4663 = vadd.f32 %v4496, %v4659
    %v4664 = vadd.f32 %v4497, %v4660
    %v4665 = vadd.f32 %v4498, %v4661
    %v4666 = vadd.f32 %v4499, %v4662
    %s4667 = scalar_lea.vmem %s12, 28
    %v4668 = vld [vmem:[%s4667] sm:$0xf]
    %v4670 = vsel %vm3128, %v4668, 0
    %4672 = vmatprep.subr.mxu0 0.0
    %4673 = vmatpush1.msra.mxu0 0.0
    %4674 = vmatprep.subr.mxu0 0.0
    %4675 = vmatpush1.msra.mxu0 0.0
    %4676 = vmatprep.subr.mxu0 0.0
    %4677 = vmatpush1.msra.mxu0 0.0
    %4678 = vmatprep.subr.mxu0 0.0
    %4679 = vmatpush1.msra.mxu0 0.0
    %4680 = vmatprep.subr.mxu0 0.0
    %4681 = vmatpush1.msra.mxu0 0.0
    %4682 = vmatprep.subr.mxu0 0.0
    %4683 = vmatpush1.msra.mxu0 0.0
    %4684 = vmatprep.subr.mxu0 0.0
    %4685 = vmatpush1.msra.mxu0 0.0
    %4686 = vmatprep.subr.mxu0 0.0
    %4687 = vmatpush1.msra.mxu0 0.0
    %4688 = vmatprep.subr.mxu0 0.0
    %4689 = vmatpush1.msra.mxu0 0.0
    %4690 = vmatprep.subr.mxu0 0.0
    %4691 = vmatpush1.msra.mxu0 0.0
    %4692 = vmatprep.subr.mxu0 0.0
    %4693 = vmatpush1.msra.mxu0 0.0
    %4694 = vmatprep.subr.mxu0 0.0
    %4695 = vmatpush1.msra.mxu0 0.0
    %4696 = vmatprep.subr.mxu0 %v3516
    %4697 = vmatpush1.msra.mxu0 %v3515
    %4698 = vmatprep.subr.mxu0 %v3512
    %4699 = vmatpush1.msra.mxu0 %v3511
    %4700 = vmatprep.subr.mxu0 %v3508
    %4701 = vmatpush1.msra.mxu0 %v3507
    %4702 = vmatprep.subr.mxu0 %v3504
    %4703 = vmatpush1.msra.mxu0 %v3503
    %4704 = vmatprep.subr.mxu0 0.0
    %4705 = vmatpush2.msra.mxu0 0.0
    %4706 = vmatprep.subr.mxu0 0.0
    %4707 = vmatpush2.msra.mxu0 0.0
    %4708 = vmatprep.subr.mxu0 0.0
    %4709 = vmatpush2.msra.mxu0 0.0
    %4710 = vmatprep.subr.mxu0 0.0
    %4711 = vmatpush2.msra.mxu0 0.0
    %4712 = vmatprep.subr.mxu0 0.0
    %4713 = vmatpush2.msra.mxu0 0.0
    %4714 = vmatprep.subr.mxu0 0.0
    %4715 = vmatpush2.msra.mxu0 0.0
    %4716 = vmatprep.subr.mxu0 0.0
    %4717 = vmatpush2.msra.mxu0 0.0
    %4718 = vmatprep.subr.mxu0 0.0
    %4719 = vmatpush2.msra.mxu0 0.0
    %4720 = vmatprep.subr.mxu0 0.0
    %4721 = vmatpush2.msra.mxu0 0.0
    %4722 = vmatprep.subr.mxu0 0.0
    %4723 = vmatpush2.msra.mxu0 0.0
    %4724 = vmatprep.subr.mxu0 0.0
    %4725 = vmatpush2.msra.mxu0 0.0
    %4726 = vmatprep.subr.mxu0 0.0
    %4727 = vmatpush2.msra.mxu0 0.0
    %4728 = vmatprep.subr.mxu0 0.0
    %4729 = vmatpush2.msra.mxu0 0.0
    %4730 = vmatprep.subr.mxu0 0.0
    %4731 = vmatpush2.msra.mxu0 0.0
    %4732 = vmatprep.subr.mxu0 0.0
    %4733 = vmatpush2.msra.mxu0 0.0
    %4734 = vmatprep.subr.mxu0 0.0
    %4735 = vmatpush2.msra.mxu0 0.0
    %4736 = vmatprep.mubr.f32.mxu0 0.0
    %4737 = vmatmul.mubr.f32.gmra.mxu0 %v4670
    %v4738 = vpop.f32.mrf.mxu0
    %v4739 = vadd.f32 0.0, %v4738
    %v4740 = vpop.f32.mrf.mxu0
    %v4741 = vadd.f32 0.0, %v4740
    %4742 = vdwg.mxu0
    %4743 = vmatprep.subr.mxu0 0.0
    %4744 = vmatpush1.msra.mxu0 0.0
    %4745 = vmatprep.subr.mxu0 0.0
    %4746 = vmatpush1.msra.mxu0 0.0
    %4747 = vmatprep.subr.mxu0 0.0
    %4748 = vmatpush1.msra.mxu0 0.0
    %4749 = vmatprep.subr.mxu0 0.0
    %4750 = vmatpush1.msra.mxu0 0.0
    %4751 = vmatprep.subr.mxu0 0.0
    %4752 = vmatpush1.msra.mxu0 0.0
    %4753 = vmatprep.subr.mxu0 0.0
    %4754 = vmatpush1.msra.mxu0 0.0
    %4755 = vmatprep.subr.mxu0 0.0
    %4756 = vmatpush1.msra.mxu0 0.0
    %4757 = vmatprep.subr.mxu0 0.0
    %4758 = vmatpush1.msra.mxu0 0.0
    %4759 = vmatprep.subr.mxu0 0.0
    %4760 = vmatpush1.msra.mxu0 0.0
    %4761 = vmatprep.subr.mxu0 0.0
    %4762 = vmatpush1.msra.mxu0 0.0
    %4763 = vmatprep.subr.mxu0 0.0
    %4764 = vmatpush1.msra.mxu0 0.0
    %4765 = vmatprep.subr.mxu0 0.0
    %4766 = vmatpush1.msra.mxu0 0.0
    %4767 = vmatprep.subr.mxu0 %v3518
    %4768 = vmatpush1.msra.mxu0 %v3517
    %4769 = vmatprep.subr.mxu0 %v3514
    %4770 = vmatpush1.msra.mxu0 %v3513
    %4771 = vmatprep.subr.mxu0 %v3510
    %4772 = vmatpush1.msra.mxu0 %v3509
    %4773 = vmatprep.subr.mxu0 %v3506
    %4774 = vmatpush1.msra.mxu0 %v3505
    %4775 = vmatprep.subr.mxu0 0.0
    %4776 = vmatpush2.msra.mxu0 0.0
    %4777 = vmatprep.subr.mxu0 0.0
    %4778 = vmatpush2.msra.mxu0 0.0
    %4779 = vmatprep.subr.mxu0 0.0
    %4780 = vmatpush2.msra.mxu0 0.0
    %4781 = vmatprep.subr.mxu0 0.0
    %4782 = vmatpush2.msra.mxu0 0.0
    %4783 = vmatprep.subr.mxu0 0.0
    %4784 = vmatpush2.msra.mxu0 0.0
    %4785 = vmatprep.subr.mxu0 0.0
    %4786 = vmatpush2.msra.mxu0 0.0
    %4787 = vmatprep.subr.mxu0 0.0
    %4788 = vmatpush2.msra.mxu0 0.0
    %4789 = vmatprep.subr.mxu0 0.0
    %4790 = vmatpush2.msra.mxu0 0.0
    %4791 = vmatprep.subr.mxu0 0.0
    %4792 = vmatpush2.msra.mxu0 0.0
    %4793 = vmatprep.subr.mxu0 0.0
    %4794 = vmatpush2.msra.mxu0 0.0
    %4795 = vmatprep.subr.mxu0 0.0
    %4796 = vmatpush2.msra.mxu0 0.0
    %4797 = vmatprep.subr.mxu0 0.0
    %4798 = vmatpush2.msra.mxu0 0.0
    %4799 = vmatprep.subr.mxu0 0.0
    %4800 = vmatpush2.msra.mxu0 0.0
    %4801 = vmatprep.subr.mxu0 0.0
    %4802 = vmatpush2.msra.mxu0 0.0
    %4803 = vmatprep.subr.mxu0 0.0
    %4804 = vmatpush2.msra.mxu0 0.0
    %4805 = vmatprep.subr.mxu0 0.0
    %4806 = vmatpush2.msra.mxu0 0.0
    %4807 = vmatprep.mubr.f32.mxu0 0.0
    %4808 = vmatmul.mubr.f32.gmra.mxu0 %v4670
    %v4809 = vpop.f32.mrf.mxu0
    %v4810 = vadd.f32 0.0, %v4809
    %v4811 = vpop.f32.mrf.mxu0
    %v4812 = vadd.f32 0.0, %v4811
    %4813 = vdwg.mxu0
    %4814 = vrot.lane.b32.xlu0 %v4739, 112
    %v4815 = vpop.permute.xlu0 %4814
    %4816 = vrot.lane.b32.xlu0 %v4741, 112
    %v4817 = vpop.permute.xlu0 %4816
    %4818 = vrot.lane.b32.xlu0 %v4810, 112
    %v4819 = vpop.permute.xlu0 %4818
    %4820 = vrot.lane.b32.xlu0 %v4812, 112
    %v4821 = vpop.permute.xlu0 %4820
    %v4822 = vsel %vm2527, %v4819, %v4821
    %v4823 = vsel %vm2527, %v4817, %v4819
    %v4824 = vsel %vm2527, %v4815, %v4817
    %v4825 = vsel %vm2527, %v4821, %v4815
    %v4826 = vmul.f32 %v4824, %v2567
    %v4827 = vmul.f32 %v4823, %v2571
    %v4828 = vmul.f32 %v4822, %v2575
    %v4829 = vmul.f32 %v4825, %v2579
    %v4830 = vadd.f32 %v4663, %v4826
    %v4831 = vadd.f32 %v4664, %v4827
    %v4832 = vadd.f32 %v4665, %v4828
    %v4833 = vadd.f32 %v4666, %v4829
    %s4834 = scalar_lea.vmem %s12, 32
    %v4835 = vld [vmem:[%s4834] sm:$0xf]
    %v4837 = vsel %vm3128, %v4835, 0
    %4839 = vmatprep.subr.mxu0 0.0
    %4840 = vmatpush1.msra.mxu0 0.0
    %4841 = vmatprep.subr.mxu0 0.0
    %4842 = vmatpush1.msra.mxu0 0.0
    %4843 = vmatprep.subr.mxu0 0.0
    %4844 = vmatpush1.msra.mxu0 0.0
    %4845 = vmatprep.subr.mxu0 0.0
    %4846 = vmatpush1.msra.mxu0 0.0
    %4847 = vmatprep.subr.mxu0 0.0
    %4848 = vmatpush1.msra.mxu0 0.0
    %4849 = vmatprep.subr.mxu0 0.0
    %4850 = vmatpush1.msra.mxu0 0.0
    %4851 = vmatprep.subr.mxu0 0.0
    %4852 = vmatpush1.msra.mxu0 0.0
    %4853 = vmatprep.subr.mxu0 0.0
    %4854 = vmatpush1.msra.mxu0 0.0
    %4855 = vmatprep.subr.mxu0 0.0
    %4856 = vmatpush1.msra.mxu0 0.0
    %4857 = vmatprep.subr.mxu0 0.0
    %4858 = vmatpush1.msra.mxu0 0.0
    %4859 = vmatprep.subr.mxu0 0.0
    %4860 = vmatpush1.msra.mxu0 0.0
    %4861 = vmatprep.subr.mxu0 0.0
    %4862 = vmatpush1.msra.mxu0 0.0
    %4863 = vmatprep.subr.mxu0 %v3516
    %4864 = vmatpush1.msra.mxu0 %v3515
    %4865 = vmatprep.subr.mxu0 %v3512
    %4866 = vmatpush1.msra.mxu0 %v3511
    %4867 = vmatprep.subr.mxu0 %v3508
    %4868 = vmatpush1.msra.mxu0 %v3507
    %4869 = vmatprep.subr.mxu0 %v3504
    %4870 = vmatpush1.msra.mxu0 %v3503
    %4871 = vmatprep.subr.mxu0 0.0
    %4872 = vmatpush2.msra.mxu0 0.0
    %4873 = vmatprep.subr.mxu0 0.0
    %4874 = vmatpush2.msra.mxu0 0.0
    %4875 = vmatprep.subr.mxu0 0.0
    %4876 = vmatpush2.msra.mxu0 0.0
    %4877 = vmatprep.subr.mxu0 0.0
    %4878 = vmatpush2.msra.mxu0 0.0
    %4879 = vmatprep.subr.mxu0 0.0
    %4880 = vmatpush2.msra.mxu0 0.0
    %4881 = vmatprep.subr.mxu0 0.0
    %4882 = vmatpush2.msra.mxu0 0.0
    %4883 = vmatprep.subr.mxu0 0.0
    %4884 = vmatpush2.msra.mxu0 0.0
    %4885 = vmatprep.subr.mxu0 0.0
    %4886 = vmatpush2.msra.mxu0 0.0
    %4887 = vmatprep.subr.mxu0 0.0
    %4888 = vmatpush2.msra.mxu0 0.0
    %4889 = vmatprep.subr.mxu0 0.0
    %4890 = vmatpush2.msra.mxu0 0.0
    %4891 = vmatprep.subr.mxu0 0.0
    %4892 = vmatpush2.msra.mxu0 0.0
    %4893 = vmatprep.subr.mxu0 0.0
    %4894 = vmatpush2.msra.mxu0 0.0
    %4895 = vmatprep.subr.mxu0 0.0
    %4896 = vmatpush2.msra.mxu0 0.0
    %4897 = vmatprep.subr.mxu0 0.0
    %4898 = vmatpush2.msra.mxu0 0.0
    %4899 = vmatprep.subr.mxu0 0.0
    %4900 = vmatpush2.msra.mxu0 0.0
    %4901 = vmatprep.subr.mxu0 0.0
    %4902 = vmatpush2.msra.mxu0 0.0
    %4903 = vmatprep.mubr.f32.mxu0 0.0
    %4904 = vmatmul.mubr.f32.gmra.mxu0 %v4837
    %v4905 = vpop.f32.mrf.mxu0
    %v4906 = vadd.f32 0.0, %v4905
    %v4907 = vpop.f32.mrf.mxu0
    %v4908 = vadd.f32 0.0, %v4907
    %4909 = vdwg.mxu0
    %4910 = vmatprep.subr.mxu0 0.0
    %4911 = vmatpush1.msra.mxu0 0.0
    %4912 = vmatprep.subr.mxu0 0.0
    %4913 = vmatpush1.msra.mxu0 0.0
    %4914 = vmatprep.subr.mxu0 0.0
    %4915 = vmatpush1.msra.mxu0 0.0
    %4916 = vmatprep.subr.mxu0 0.0
    %4917 = vmatpush1.msra.mxu0 0.0
    %4918 = vmatprep.subr.mxu0 0.0
    %4919 = vmatpush1.msra.mxu0 0.0
    %4920 = vmatprep.subr.mxu0 0.0
    %4921 = vmatpush1.msra.mxu0 0.0
    %4922 = vmatprep.subr.mxu0 0.0
    %4923 = vmatpush1.msra.mxu0 0.0
    %4924 = vmatprep.subr.mxu0 0.0
    %4925 = vmatpush1.msra.mxu0 0.0
    %4926 = vmatprep.subr.mxu0 0.0
    %4927 = vmatpush1.msra.mxu0 0.0
    %4928 = vmatprep.subr.mxu0 0.0
    %4929 = vmatpush1.msra.mxu0 0.0
    %4930 = vmatprep.subr.mxu0 0.0
    %4931 = vmatpush1.msra.mxu0 0.0
    %4932 = vmatprep.subr.mxu0 0.0
    %4933 = vmatpush1.msra.mxu0 0.0
    %4934 = vmatprep.subr.mxu0 %v3518
    %4935 = vmatpush1.msra.mxu0 %v3517
    %4936 = vmatprep.subr.mxu0 %v3514
    %4937 = vmatpush1.msra.mxu0 %v3513
    %4938 = vmatprep.subr.mxu0 %v3510
    %4939 = vmatpush1.msra.mxu0 %v3509
    %4940 = vmatprep.subr.mxu0 %v3506
    %4941 = vmatpush1.msra.mxu0 %v3505
    %4942 = vmatprep.subr.mxu0 0.0
    %4943 = vmatpush2.msra.mxu0 0.0
    %4944 = vmatprep.subr.mxu0 0.0
    %4945 = vmatpush2.msra.mxu0 0.0
    %4946 = vmatprep.subr.mxu0 0.0
    %4947 = vmatpush2.msra.mxu0 0.0
    %4948 = vmatprep.subr.mxu0 0.0
    %4949 = vmatpush2.msra.mxu0 0.0
    %4950 = vmatprep.subr.mxu0 0.0
    %4951 = vmatpush2.msra.mxu0 0.0
    %4952 = vmatprep.subr.mxu0 0.0
    %4953 = vmatpush2.msra.mxu0 0.0
    %4954 = vmatprep.subr.mxu0 0.0
    %4955 = vmatpush2.msra.mxu0 0.0
    %4956 = vmatprep.subr.mxu0 0.0
    %4957 = vmatpush2.msra.mxu0 0.0
    %4958 = vmatprep.subr.mxu0 0.0
    %4959 = vmatpush2.msra.mxu0 0.0
    %4960 = vmatprep.subr.mxu0 0.0
    %4961 = vmatpush2.msra.mxu0 0.0
    %4962 = vmatprep.subr.mxu0 0.0
    %4963 = vmatpush2.msra.mxu0 0.0
    %4964 = vmatprep.subr.mxu0 0.0
    %4965 = vmatpush2.msra.mxu0 0.0
    %4966 = vmatprep.subr.mxu0 0.0
    %4967 = vmatpush2.msra.mxu0 0.0
    %4968 = vmatprep.subr.mxu0 0.0
    %4969 = vmatpush2.msra.mxu0 0.0
    %4970 = vmatprep.subr.mxu0 0.0
    %4971 = vmatpush2.msra.mxu0 0.0
    %4972 = vmatprep.subr.mxu0 0.0
    %4973 = vmatpush2.msra.mxu0 0.0
    %4974 = vmatprep.mubr.f32.mxu0 0.0
    %4975 = vmatmul.mubr.f32.gmra.mxu0 %v4837
    %v4976 = vpop.f32.mrf.mxu0
    %v4977 = vadd.f32 0.0, %v4976
    %v4978 = vpop.f32.mrf.mxu0
    %v4979 = vadd.f32 0.0, %v4978
    %4980 = vdwg.mxu0
    %4981 = vrot.lane.b32.xlu0 %v4906, 111
    %v4982 = vpop.permute.xlu0 %4981
    %4983 = vrot.lane.b32.xlu0 %v4908, 111
    %v4984 = vpop.permute.xlu0 %4983
    %4985 = vrot.lane.b32.xlu0 %v4977, 111
    %v4986 = vpop.permute.xlu0 %4985
    %4987 = vrot.lane.b32.xlu0 %v4979, 111
    %v4988 = vpop.permute.xlu0 %4987
    %v4989 = vsel %vm2839, %v4986, %v4988
    %v4990 = vsel %vm2839, %v4984, %v4986
    %v4991 = vsel %vm2839, %v4982, %v4984
    %v4992 = vsel %vm2839, %v4988, %v4982
    %v4993 = vmul.f32 %v4991, %v2879
    %v4994 = vmul.f32 %v4990, %v2883
    %v4995 = vmul.f32 %v4989, %v2887
    %v4996 = vmul.f32 %v4992, %v2891
    %v4997 = vadd.f32 %v4830, %v4993
    %v4998 = vadd.f32 %v4831, %v4994
    %v4999 = vadd.f32 %v4832, %v4995
    %v5000 = vadd.f32 %v4833, %v4996
    %v5001 = vld [vmem:[%s13] sm:$0xf]
    %5003 = vset.pattern.permute.xlu0 0
    %5004 = vperm.xlu0 %5003, %v5001
    %v5005 = vpop.permute.xlu0 %5004
    %v5007 = vadd.f32 %v4997, %v5005
    %v5008 = vadd.f32 %v4998, %v5005
    %v5009 = vadd.f32 %v4999, %v5005
    %v5010 = vadd.f32 %v5000, %v5005
    %v5011 = vld [vmem:[%s14] sm:$0x3]
    %v5012 = vtanh.pop %v5007
    %v5013 = vtanh.pop %v5008
    %v5014 = vtanh.pop %v5009
    %v5015 = vtanh.pop %v5010
    %5017 = vset.pattern.permute.xlu0 0
    %5018 = vperm.xlu0 %5017, %v5011
    %v5019 = vpop.permute.xlu0 %5018
    %v5021 = vmul.f32 %v5019, %v5012
    %v5022 = vmul.f32 %v5019, %v5013
    %v5023 = vmul.f32 %v5019, %v5014
    %v5024 = vmul.f32 %v5019, %v5015
    %v5025 = vld [vmem:[%s0] sm:$0xff]
    %v5030 = vcombine.low %v5007, %v5008
    %v5031 = vcombine.low %v5009, %v5010
    %v5033 = vunpack.c.l.s4 1983009808
    %v5034 = vunpack.c.0.s8 %v5033
    %v5035 = vlaneseq
    %v5036 = vshrl.u32 %v5035, 7
    %v5037 = vsub.s32 %v5034, %v5036
    %v5038 = vrot.slane %v5030, %v5037
    %v5040 = vunpack.c.l.s4 1983009808
    %v5041 = vunpack.c.0.s8 %v5040
    %v5042 = vlaneseq
    %v5043 = vshrl.u32 %v5042, 7
    %v5044 = vsub.s32 %v5041, %v5043
    %v5045 = vrot.slane %v5031, %v5044
    %v5046 = vcombine.high %v5038, %v5045
    %v5048 = vadd.f32 %v5025, %v5046
    %v5049 = vmul.f32 %v5021, 1.442695
    %v5050 = vpow.pop %v5049
    %v5051 = vmul.f32 %v5022, 1.442695
    %v5052 = vpow.pop %v5051
    %v5053 = vmul.f32 %v5023, 1.442695
    %v5054 = vpow.pop %v5053
    %v5055 = vmul.f32 %v5024, 1.442695
    %v5056 = vpow.pop %v5055
    %v5061 = vcombine.low %v5050, %v5052
    %v5062 = vcombine.low %v5054, %v5056
    %v5064 = vunpack.c.l.s4 1983009808
    %v5065 = vunpack.c.0.s8 %v5064
    %v5066 = vlaneseq
    %v5067 = vshrl.u32 %v5066, 7
    %v5068 = vsub.s32 %v5065, %v5067
    %v5069 = vrot.slane %v5061, %v5068
    %v5071 = vunpack.c.l.s4 1983009808
    %v5072 = vunpack.c.0.s8 %v5071
    %v5073 = vlaneseq
    %v5074 = vshrl.u32 %v5073, 7
    %v5075 = vsub.s32 %v5072, %v5074
    %v5076 = vrot.slane %v5062, %v5075
    %v5077 = vcombine.low %v5069, %v5076
    %v5079 = vmul.f32 %v5048, %v5077
    %5080 = vst [vmem:[%s15] sm:$0xff] %v5079
    %v5081 = vsel %vm80, %v5021, 0.0
    %v5082 = vsel %vm80, %v5022, 0.0
    %v5083 = vadd.f32 %v5081, %v5082
    %5084 = vadd.xlane.f32.xlu0 %v5083
    %v5085 = vpop.xlane.xlu0 %5084
    %v5086 = vsel %vm80, %v5023, 0.0
    %v5087 = vsel %vm80, %v5024, 0.0
    %v5088 = vadd.f32 %v5086, %v5087
    %5089 = vadd.xlane.f32.xlu0 %v5088
    %v5090 = vpop.xlane.xlu0 %5089
    %vm5091 = vcmask 7168
    %v5092 = vsel %vm5091, %v5085, %v5090
    %vm5093 = vcmask 9216
    %v5094 = vsel %vm5093, %v5092, 0.0
    %v5095 = vrot.slane %v5094, 4
    %v5096 = vadd.f32 %v5094, %v5095
    %v5097 = vrot.slane %v5096, 2
    %v5098 = vadd.f32 %v5096, %v5097
    %v5099 = vrot.slane %v5098, 1
    %v5100 = vadd.f32 %v5098, %v5099
    %v5101 = vld [vmem:[%s2] sm:$0x1]
    %v5102 = vadd.f32 %v5101, %v5100
    %vm5103 = vcmask 8192
    %5104 = vst.msk [vmem:[#allocation2] sm:$0x1] %vm5103, %v5102
    // Predicated region
    $region62: #{coupling_forward.1} parent=1 // pred_check
      _
    $region63: #{coupling_forward.1} parent=1 // pred_check_branch
      %5106 = sbr.rel (0) target = $region65
    $region64: #{coupling_forward.1} parent=1 // pred_region
      _
    $region65: #{coupling_forward.1} parent=1 // pred_fallthru
      _
    // Predicated region
    $region66: #{coupling_forward.1} parent=1 // pred_check
      _
    $region67: #{coupling_forward.1} parent=1 // pred_check_branch
      %5108 = sbr.rel (0) target = $region69
    $region68: #{coupling_forward.1} parent=1 // pred_region
      %s5110 = ssub.s32 16, 16
      %5111 = vsyncadd [#allocation3], %s5110
      %s5113 = sshll.u32 [#allocation2], 4
      %s5114 = int_to_ptr.vmem [resolvable:$true] %s5113
      %5116 = dma.vmem_to_hbm [thread:$0]  %s5114, 16, %s16, [#allocation3]
    $region69: #{coupling_forward.1} parent=1 // pred_fallthru
      _
    // Predicated region
    $region70: #{coupling_forward.1} parent=1 // pred_check
      _
    $region71: #{coupling_forward.1} parent=1 // pred_check_branch
      %5118 = sbr.rel (0) target = $region73
    $region72: #{coupling_forward.1} parent=1 // pred_region
      _
    $region73: #{coupling_forward.1} parent=1 // pred_fallthru
      _
    // Predicated region
    $region74: #{coupling_forward.1} parent=1 // pred_check
      _
    $region75: #{coupling_forward.1} parent=1 // pred_check_branch
      %5120 = sbr.rel (0) target = $region77
    $region76: #{coupling_forward.1} parent=1 // pred_region
      %5121 = dma.done [#allocation3], 16
    $region77: #{coupling_forward.1} parent=1 // pred_fallthru
      _
    %5122 = vsyncpa [#allocation3], 1

</llo_original>
